<compile_context>
chip_gen: v6e
topology: v6e:2x2x1
jax: 0.10.0
libtpu: 0.0.40
codegen_flags: <defaults>
</compile_context>

<pallas_src>
import functools

import numpy as np
import jax
import jax.numpy as jnp
from jax import lax
from jax.experimental import pallas as pl
from jax.experimental.pallas import tpu as pltpu

# ----------------- constants (defaults of DictionaryMatchingTv.__init__) -----------------
T2_RANGE = (0.0001, 1.0)      # t2_range_s
R2P_RANGE = (0.01, 200.0)     # r2p_range_Hz
B1_RANGE = (0.2, 1.6)         # b1_range
LAMBDA_B1_TV = 0.001
LAMBDA_T2_DIST = 10.0
LAMBDA_T2_L2 = 100.0
LAMBDA_B1_DIST = 1.0
LAMBDA_B1_L2 = 100.0
LAMBDA_T2_INIT = 1000.0

_BIG = 3.0e38  # finite "+inf" for masked minima


def _round_up(x, m):
    return ((x + m - 1) // m) * m


def hardsigmoid(x):
    # torch.nn.Hardsigmoid: clip(x/6 + 1/2, 0, 1)
    return jnp.clip(x / 6.0 + 0.5, 0.0, 1.0)


def scale_to_range(v, rng):
    return rng[0] + (rng[1] - rng[0]) * v


# ----------------- Pallas kernel 1: fused dictionary matching ----------------------------
def _match_kernel(dt_ref, r2p_ref, sig_ref, b1sel_ref, t2sel_ref,
                  dbt_ref, db2t_ref, bofk_ref, tofk_ref,
                  t2idx_ref, b1idx_ref, rowmean_ref, colsum_ref, *, inv_nb):
    # dt: (1,E)   r2p/b1sel/t2sel: (TN,1)   sig: (TN,E)
    # dbt/db2t: (E,Kp)   bofk/tofk: (1,Kp)  -> b1 / t2 index of every atom lane (-1 = pad)
    etha = jnp.exp(-dt_ref[...] * r2p_ref[...])                        # (TN, E), EUP exp
    sig = sig_ref[...]
    a = jnp.dot(etha * etha, db2t_ref[...],
                preferred_element_type=jnp.float32)                    # (TN, Kp) MXU
    b = jnp.dot(etha * sig, dbt_ref[...],
                preferred_element_type=jnp.float32)                    # (TN, Kp) MXU
    s2 = jnp.sum(sig * sig, axis=-1, keepdims=True)                    # (TN, 1)
    pos = a > 0.0                                                      # zero-norm atom guard
    inv = lax.rsqrt(jnp.where(pos, a, 1.0))                            # EUP rsqrt
    d2 = jnp.where(pos, 1.0 - 2.0 * b * inv, 0.0) + s2
    dist = jnp.sqrt(jnp.maximum(d2, 0.0))                              # (TN, Kp)

    bofk = bofk_ref[...]                                               # (1, Kp)
    tofk = tofk_ref[...]                                               # (1, Kp)

    # ---- b1-fixed path: restrict each pixel to atoms whose b1 == selected b1 ----
    mask_b1 = bofk == b1sel_ref[...]                                   # (TN, Kp)
    d_b1 = jnp.where(mask_b1, dist, _BIG)
    min_b1 = jnp.min(d_b1, axis=-1, keepdims=True)                     # (TN, 1)
    # first-match argmin over t2 (lowest t2 index among tied minima, like torch.argmin)
    t2idx_ref[...] = jnp.min(jnp.where(d_b1 == min_b1, tofk, _BIG),
                             axis=-1, keepdims=True)
    # per-atom partial sums of the restricted distances (padded pixels have b1sel = -1)
    colsum = jnp.sum(jnp.where(mask_b1, dist, 0.0), axis=0, keepdims=True)   # (1, Kp)
    colsum_ref[...] = jnp.broadcast_to(colsum, colsum_ref.shape)

    # ---- t2-fixed path: restrict each pixel to atoms whose t2 == selected t2 ----
    mask_t2 = tofk == t2sel_ref[...]
    d_t2 = jnp.where(mask_t2, dist, _BIG)
    min_t2 = jnp.min(d_t2, axis=-1, keepdims=True)
    b1idx_ref[...] = jnp.min(jnp.where(d_t2 == min_t2, bofk, _BIG),
                             axis=-1, keepdims=True)
    rowmean_ref[...] = jnp.sum(jnp.where(mask_t2, dist, 0.0),
                               axis=-1, keepdims=True) * inv_nb


def _pick_tile(n, kp, e):
    # keep ~6 live (tile, kp) f32 intermediates + (tile, e) inputs within ~4 MiB
    per_row_bytes = (6 * kp + 4 * e + 16) * 4
    cap = 4 * 1024 * 1024
    t = max(8, min(512, (cap // per_row_bytes) // 8 * 8))
    return min(t, _round_up(n, 8))


def _pad_rows(x, n_pad, fill=0.0):
    n = x.shape[0]
    if n_pad == n:
        return x
    return jnp.pad(x, ((0, n_pad - n), (0, 0)), constant_values=fill)


def dict_match(r2p, signal, b1_sel, t2_sel, dt, dbt_pad, db2t_pad, num_t2s, num_b1s):
    """Fused dictionary matching.

    Returns:
      t2_idx   (N,) int32   argmin over t2 of the b1-restricted distances
      b1_idx   (N,) int32   argmin over b1 of the t2-restricted distances
      row_mean (N,) f32     per-pixel mean of the t2-restricted distances (l2_t2 row means)
      atom_mean(num_t2s,)f32 per-t2-atom mean over pixels of the b1-restricted distances
    """
    n, e = signal.shape
    kp = dbt_pad.shape[1]
    k_total = num_t2s * num_b1s

    tile = _pick_tile(n, kp, e)
    n_pad = _round_up(n, tile)
    n_tiles = n_pad // tile

    r2p2d = _pad_rows(r2p.astype(jnp.float32).reshape(n, 1), n_pad)
    sig = _pad_rows(signal.astype(jnp.float32), n_pad)
    b1sel2d = _pad_rows(b1_sel.astype(jnp.float32).reshape(n, 1), n_pad, fill=-1.0)
    t2sel2d = _pad_rows(t2_sel.astype(jnp.float32).reshape(n, 1), n_pad, fill=-1.0)
    dt2d = dt.astype(jnp.float32).reshape(1, e)

    # lane-resident atom index maps (compile-time constants; -1 marks padded lanes)
    k_ids = np.arange(kp)
    bofk = np.where(k_ids < k_total, k_ids % num_b1s, -1).astype(np.float32).reshape(1, kp)
    tofk = np.where(k_ids < k_total, k_ids // num_b1s, -1).astype(np.float32).reshape(1, kp)

    kern = functools.partial(_match_kernel, inv_nb=float(1.0 / num_b1s))

    outs = pl.pallas_call(
        kern,
        out_shape=(
            jax.ShapeDtypeStruct((n_pad, 1), jnp.float32),       # t2_idx (as f32)
            jax.ShapeDtypeStruct((n_pad, 1), jnp.float32),       # b1_idx (as f32)
            jax.ShapeDtypeStruct((n_pad, 1), jnp.float32),       # l2_t2 row means
            jax.ShapeDtypeStruct((n_tiles * 8, kp), jnp.float32),  # per-tile column sums
        ),
        grid_spec=pltpu.PrefetchScalarGridSpec(
            num_scalar_prefetch=0,
            grid=(n_tiles,),
            in_specs=[
                pl.BlockSpec((1, e), lambda i: (0, 0)),          # dt       (resident)
                pl.BlockSpec((tile, 1), lambda i: (i, 0)),       # r2p      per-pixel
                pl.BlockSpec((tile, e), lambda i: (i, 0)),       # signal   per-pixel
                pl.BlockSpec((tile, 1), lambda i: (i, 0)),       # b1_sel   per-pixel
                pl.BlockSpec((tile, 1), lambda i: (i, 0)),       # t2_sel   per-pixel
                pl.BlockSpec((e, kp), lambda i: (0, 0)),         # db^T     (resident)
                pl.BlockSpec((e, kp), lambda i: (0, 0)),         # (db^2)^T (resident)
                pl.BlockSpec((1, kp), lambda i: (0, 0)),         # b1-of-atom (resident)
                pl.BlockSpec((1, kp), lambda i: (0, 0)),         # t2-of-atom (resident)
            ],
            out_specs=[
                pl.BlockSpec((tile, 1), lambda i: (i, 0)),
                pl.BlockSpec((tile, 1), lambda i: (i, 0)),
                pl.BlockSpec((tile, 1), lambda i: (i, 0)),
                pl.BlockSpec((8, kp), lambda i: (i, 0)),
            ],
        ),
        compiler_params=pltpu.CompilerParams(dimension_semantics=("parallel",)),
    )(dt2d, r2p2d, sig, b1sel2d, t2sel2d, dbt_pad, db2t_pad,
      jnp.asarray(bofk), jnp.asarray(tofk))

    t2_idx = outs[0][:n, 0].astype(jnp.int32)
    b1_idx = outs[1][:n, 0].astype(jnp.int32)
    row_mean = outs[2][:n, 0]
    colsum = outs[3].reshape(n_tiles, 8, kp)[:, 0, :].sum(axis=0)           # (Kp,)
    atom_mean = colsum[:k_total].reshape(num_t2s, num_b1s).sum(axis=1) / n  # (num_t2s,)
    return t2_idx, b1_idx, row_mean, atom_mean


# ----------------- Pallas kernel 2: weighted TV of the b1 map (matmul-free) --------------
# torch.gradient (central diff interior, one-sided edges, spacing 1) along axis 0 built
# from static sublane slices; the axis-1 term reuses the same code on the transposed map.
def _tv_kernel(x_ref, xt_ref, w_ref, wt_ref, out_ref):
    def tv_axis0(xr, wr):
        r = xr.shape[0]
        e_lo = jnp.sum(jnp.abs(xr[1:2, :] - xr[0:1, :]) * wr[0:1, :])
        e_hi = jnp.sum(jnp.abs(xr[r - 1:r, :] - xr[r - 2:r - 1, :]) * wr[r - 1:r, :])
        inner = jnp.sum(jnp.abs(0.5 * (xr[2:r, :] - xr[0:r - 2, :])) * wr[1:r - 1, :])
        return e_lo + e_hi + inner

    out_ref[0, 0] = tv_axis0(x_ref, w_ref) + tv_axis0(xt_ref, wt_ref)


def tv_loss(b1_map, weights):
    out = pl.pallas_call(
        _tv_kernel,
        out_shape=jax.ShapeDtypeStruct((1, 1), jnp.float32),
        in_specs=[pl.BlockSpec(memory_space=pltpu.MemorySpace.VMEM)] * 4,
        out_specs=pl.BlockSpec(memory_space=pltpu.MemorySpace.SMEM),
    )(b1_map.astype(jnp.float32), b1_map.T.astype(jnp.float32),
      weights.astype(jnp.float32), weights.T.astype(jnp.float32))
    return out[0, 0]


# ----------------- pure-JAX helpers for the reference path -------------------------------
def _torch_gradient_ref(x, axis):
    xm = jnp.moveaxis(x, axis, 0)
    g = jnp.concatenate(
        [xm[1:2] - xm[0:1], (xm[2:] - xm[:-2]) / 2.0, xm[-1:] - xm[-2:-1]], axis=0)
    return jnp.moveaxis(g, 0, axis)


def _l2_dist_ref(db_nke, etha, signal):
    d = db_nke * etha[:, None, :]
    nrm = jnp.linalg.norm(d, axis=-1, keepdims=True)
    dn = jnp.nan_to_num(d / nrm, nan=0.0, posinf=0.0)
    return jnp.linalg.norm(dn - signal[:, None, :], axis=-1)


# ----------------- forward pass (mirrors DictionaryMatchingTv.forward) -------------------
def forward_loss(est_t2, est_r2p, est_b1_2d, state, use_pallas=True):
    signal = state["signal"]            # (N, E) masked, per-pixel-normalized signal
    mask_idx = state["mask_idx"]        # (N,) flat indices of masked pixels (row-major)
    weights = state["weights"]          # (nx, ny)
    db = state["db"]                    # (num_t2s, num_b1s, E)
    db_t2s_u = state["db_t2s_unique"]   # (num_t2s,)
    db_b1s_u = state["db_b1s_unique"]   # (num_b1s,)
    dt = state["delta_t_r2p_s"]         # (E,)
    t2_init = state["t2_init"]          # (N,)
    num_t2s, num_b1s, _ = db.shape

    # f_1: weighted TV on the full b1 map
    b1_map = scale_to_range(hardsigmoid(est_b1_2d), B1_RANGE)
    if use_pallas:
        tv = tv_loss(b1_map, weights)
    else:
        g0 = _torch_gradient_ref(b1_map, 0)
        g1 = _torch_gradient_ref(b1_map, 1)
        tv = jnp.sum(jnp.abs(g0) * weights + jnp.abs(g1) * weights)
    f_1 = LAMBDA_B1_TV * tv

    # candidate values on masked pixels
    cand_b1 = scale_to_range(hardsigmoid(est_b1_2d.reshape(-1)[mask_idx]), B1_RANGE)
    cand_r2p = scale_to_range(hardsigmoid(est_r2p), R2P_RANGE)
    cand_t2 = scale_to_range(hardsigmoid(est_t2), T2_RANGE)

    b1_sel = jnp.argmin((cand_b1[:, None] - db_b1s_u[None, :]) ** 2, axis=-1)   # (N,)
    t2_sel = jnp.argmin((cand_t2[:, None] - db_t2s_u[None, :]) ** 2, axis=-1)   # (N,)

    if use_pallas:
        # single fused kernel: distances + restricted argmins + reductions, no (N,K) HBM
        t2_idx, b1_idx, row_mean, atom_mean = dict_match(
            cand_r2p, signal, b1_sel, t2_sel, dt,
            state["dbt_pad"], state["db2t_pad"], num_t2s, num_b1s)

        # ---- b1-fixed dictionary path ----
        t2_fit_vals = db_t2s_u[t2_idx]
        # torch's mean(l2_b1[t2_idx]) over the (N, N) fancy index equals the mean of the
        # per-atom pixel-means indexed at t2_idx (no O(N^2) intermediate needed).
        l2_min_f2 = LAMBDA_T2_L2 * jnp.mean(atom_mean[t2_idx])

        # ---- t2-fixed dictionary path ----
        b1_fit_vals = db_b1s_u[b1_idx]
        # torch's mean(l2_t2[b1_idx]) (fancy index over the PIXEL axis, reproduced as-is)
        l2_min_f3 = LAMBDA_B1_L2 * jnp.mean(row_mean[b1_idx])
    else:
        # literal torch semantics (gathered dictionaries, fancy-index means)
        etha = jnp.exp(-dt[None, :] * cand_r2p[:, None])            # (N, E)
        db_b1_nke = jnp.transpose(db[:, b1_sel, :], (1, 0, 2))      # (N, num_t2s, E)
        l2_b1_nt = _l2_dist_ref(db_b1_nke, etha, signal)
        l2_b1 = l2_b1_nt.T                                          # (num_t2s, N)
        t2_idx = jnp.argmin(l2_b1, axis=0)
        t2_fit_vals = db_t2s_u[t2_idx]
        l2_min_f2 = LAMBDA_T2_L2 * jnp.mean(l2_b1[t2_idx])          # (N, N) fancy index

        db_t2_nke = db[t2_sel, :, :]                                # (N, num_b1s, E)
        l2_t2_nb = _l2_dist_ref(db_t2_nke, etha, signal)
        b1_idx = jnp.argmin(l2_t2_nb, axis=1)
        b1_fit_vals = db_b1s_u[b1_idx]
        l2_min_f3 = LAMBDA_B1_L2 * jnp.mean(l2_t2_nb[b1_idx])

    f_2 = LAMBDA_T2_DIST * jnp.mean(jnp.sqrt((cand_t2 - t2_fit_vals) ** 2))
    f_2_init = LAMBDA_T2_INIT * jnp.mean(jnp.sqrt((cand_t2 - t2_init) ** 2))
    f_3 = LAMBDA_B1_DIST * jnp.mean(jnp.sqrt((cand_b1 - b1_fit_vals) ** 2))

    return f_1 + f_2 + f_2_init + l2_min_f2 + f_3 + l2_min_f3


if __name__ == "__main__":
    key = jax.random.PRNGKey(0)
    nx, ny, etl = 16, 16, 8
    num_t2s, num_b1s = 8, 4

    k1, k2, k3, k4, k5, k6 = jax.random.split(key, 6)

    # raw slice signal (nx, ny, etl); zero out first pixel row -> background (mask False)
    slice_signal = jax.random.uniform(k1, (nx, ny, etl), jnp.float32, 0.5, 1.5)
    slice_signal = slice_signal.at[0].set(0.0)

    # dictionary (t2 slow axis, b1 fast axis) and echo timing
    db_t2s_unique = jnp.linspace(0.01, 0.2, num_t2s).astype(jnp.float32)
    db_b1s_unique = jnp.linspace(0.5, 1.4, num_b1s).astype(jnp.float32)
    db_mag = jax.random.uniform(k2, (num_t2s * num_b1s, etl), jnp.float32, 0.1, 1.0)
    delta_t_r2p_ms = jnp.array([0.0, 2.0, 4.0, 0.0, 3.0, 6.0, 0.0, 5.0], jnp.float32)
    delta_t_r2p_s = delta_t_r2p_ms * 0.001

    # __init__-style preprocessing (plain JAX glue)
    nrm = jnp.linalg.norm(slice_signal, axis=-1, keepdims=True)
    signal_full = jnp.nan_to_num(slice_signal / nrm, nan=0.0, posinf=0.0)
    mask2d = signal_full[:, :, 0] > 1e-6
    weights = jnp.where(mask2d, 1.0, 0.001).astype(jnp.float32)
    mask_idx = jnp.asarray(np.nonzero(np.asarray(mask2d).reshape(-1))[0], jnp.int32)
    signal = signal_full.reshape(-1, etl)[mask_idx]               # (N, etl)
    n_masked = int(signal.shape[0])

    # deterministic synthetic parameter init (shapes as in the torch module)
    # TODO(synk): estimate_t2_b1_from_se brute-force initialisation is replaced by
    # deterministic random starting values; it only sets init points, not forward semantics.
    est_b1_2d = jax.random.uniform(k3, (nx, ny), jnp.float32, 0.1, 0.9)       # estimates_b1
    est_r2p = jax.random.uniform(k4, (n_masked,), jnp.float32, 0.0, 1.0)      # estimates_r2p
    est_t2 = jax.random.uniform(k5, (n_masked,), jnp.float32, 0.0, 1.0)       # estimates_t2
    t2_init = jax.random.uniform(k6, (n_masked,), jnp.float32, 0.01, 0.2)     # t2_init

    db = db_mag.reshape(num_t2s, num_b1s, etl)

    # dictionary transposes with the atom axis on lanes, padded to a multiple of 128;
    # built ONCE outside the optimisation loop (they never change between steps).
    k_total = num_t2s * num_b1s
    kp = _round_up(k_total, 128)
    db_flat = db.reshape(k_total, etl).astype(jnp.float32)
    dbt_pad = jnp.zeros((etl, kp), jnp.float32).at[:, :k_total].set(db_flat.T)
    db2t_pad = jnp.zeros((etl, kp), jnp.float32).at[:, :k_total].set((db_flat * db_flat).T)

    state = dict(signal=signal, mask_idx=mask_idx, weights=weights, db=db,
                 db_t2s_unique=db_t2s_unique, db_b1s_unique=db_b1s_unique,
                 delta_t_r2p_s=delta_t_r2p_s, t2_init=t2_init,
                 dbt_pad=dbt_pad, db2t_pad=db2t_pad)

    fwd_pallas = jax.jit(functools.partial(forward_loss, use_pallas=True))
    fwd_ref = jax.jit(functools.partial(forward_loss, use_pallas=False))

    loss = jax.block_until_ready(fwd_pallas(est_t2, est_r2p, est_b1_2d, state))
    loss_ref = jax.block_until_ready(fwd_ref(est_t2, est_r2p, est_b1_2d, state))

    np.testing.assert_allclose(float(loss), float(loss_ref), rtol=1e-3, atol=1e-3)
    print("KERNEL_OK")
</pallas_src>

<mosaic_0001>
module attributes {stable_mosaic.version = 11 : i64} {
  func.func @_match_kernel(%arg0: i32, %arg1: memref<1x8xf32, #tpu.memory_space<vmem>>, %arg2: memref<240x1xf32, #tpu.memory_space<vmem>>, %arg3: memref<240x8xf32, #tpu.memory_space<vmem>>, %arg4: memref<240x1xf32, #tpu.memory_space<vmem>>, %arg5: memref<240x1xf32, #tpu.memory_space<vmem>>, %arg6: memref<8x128xf32, #tpu.memory_space<vmem>>, %arg7: memref<8x128xf32, #tpu.memory_space<vmem>>, %arg8: memref<1x128xf32, #tpu.memory_space<vmem>>, %arg9: memref<1x128xf32, #tpu.memory_space<vmem>>, %arg10: memref<240x1xf32, #tpu.memory_space<vmem>>, %arg11: memref<240x1xf32, #tpu.memory_space<vmem>>, %arg12: memref<240x1xf32, #tpu.memory_space<vmem>>, %arg13: memref<8x128xf32, #tpu.memory_space<vmem>>) attributes {dimension_semantics = [#tpu.dimension_semantics<parallel>], iteration_bounds = array<i64: 1>, scalar_prefetch = 0 : i64, scratch_operands = 0 : i64, tpu.core_type = #tpu.core_type<tc>, window_params = [{pipeline_mode = #tpu.pipeline_mode<synchronous>, transform_indices = @transform_0, window_bounds = array<i64: 1, 8>}, {transform_indices = @transform_1, window_bounds = array<i64: 240, 1>}, {transform_indices = @transform_2, window_bounds = array<i64: 240, 8>}, {transform_indices = @transform_3, window_bounds = array<i64: 240, 1>}, {transform_indices = @transform_4, window_bounds = array<i64: 240, 1>}, {pipeline_mode = #tpu.pipeline_mode<synchronous>, transform_indices = @transform_5, window_bounds = array<i64: 8, 128>}, {pipeline_mode = #tpu.pipeline_mode<synchronous>, transform_indices = @transform_6, window_bounds = array<i64: 8, 128>}, {pipeline_mode = #tpu.pipeline_mode<synchronous>, transform_indices = @transform_7, window_bounds = array<i64: 1, 128>}, {pipeline_mode = #tpu.pipeline_mode<synchronous>, transform_indices = @transform_8, window_bounds = array<i64: 1, 128>}, {transform_indices = @transform_9, window_bounds = array<i64: 240, 1>}, {transform_indices = @transform_10, window_bounds = array<i64: 240, 1>}, {transform_indices = @transform_11, window_bounds = array<i64: 240, 1>}, {transform_indices = @transform_12, window_bounds = array<i64: 8, 128>}]} {
    %c0 = arith.constant 0 : index
    %c0_0 = arith.constant 0 : index
    %0 = vector.load %arg1[%c0, %c0_0] : memref<1x8xf32, #tpu.memory_space<vmem>>, vector<1x8xf32>
    %cst = arith.constant 0.000000e+00 : f32
    %1 = vector.broadcast %cst : f32 to vector<1x8xf32>
    %2 = arith.subf %1, %0 : vector<1x8xf32>
    %c0_1 = arith.constant 0 : index
    %c0_2 = arith.constant 0 : index
    %3 = vector.load %arg2[%c0_1, %c0_2] : memref<240x1xf32, #tpu.memory_space<vmem>>, vector<240x1xf32>
    %4 = vector.broadcast %2 : vector<1x8xf32> to vector<240x8xf32>
    %5 = vector.broadcast %3 : vector<240x1xf32> to vector<240x8xf32>
    %6 = arith.mulf %4, %5 : vector<240x8xf32>
    %7 = math.exp %6 : vector<240x8xf32>
    %c0_3 = arith.constant 0 : index
    %c0_4 = arith.constant 0 : index
    %8 = vector.load %arg3[%c0_3, %c0_4] : memref<240x8xf32, #tpu.memory_space<vmem>>, vector<240x8xf32>
    %9 = arith.mulf %7, %7 : vector<240x8xf32>
    %c0_5 = arith.constant 0 : index
    %c0_6 = arith.constant 0 : index
    %10 = vector.load %arg7[%c0_5, %c0_6] : memref<8x128xf32, #tpu.memory_space<vmem>>, vector<8x128xf32>
    %cst_7 = arith.constant dense<0.000000e+00> : vector<240x128xf32>
    %11 = tpu.matmul %9, %10, %cst_7 {dimension_numbers = #tpu.dot_dimension_numbers<[1], [0], [0], [1], [0, 0, 1, 1], [], []>} : vector<240x8xf32>, vector<8x128xf32>, vector<240x128xf32> -> vector<240x128xf32>
    %12 = arith.mulf %7, %8 : vector<240x8xf32>
    %c0_8 = arith.constant 0 : index
    %c0_9 = arith.constant 0 : index
    %13 = vector.load %arg6[%c0_8, %c0_9] : memref<8x128xf32, #tpu.memory_space<vmem>>, vector<8x128xf32>
    %cst_10 = arith.constant dense<0.000000e+00> : vector<240x128xf32>
    %14 = tpu.matmul %12, %13, %cst_10 {dimension_numbers = #tpu.dot_dimension_numbers<[1], [0], [0], [1], [0, 0, 1, 1], [], []>} : vector<240x8xf32>, vector<8x128xf32>, vector<240x128xf32> -> vector<240x128xf32>
    %15 = arith.mulf %8, %8 : vector<240x8xf32>
    %cst_11 = arith.constant dense<0.000000e+00> : vector<240xf32>
    %16 = vector.multi_reduction <add>, %15, %cst_11 [1] : vector<240x8xf32> to vector<240xf32>
    %17 = vector.shape_cast %16 : vector<240xf32> to vector<240x1xf32>
    %cst_12 = arith.constant 0.000000e+00 : f32
    %18 = vector.broadcast %cst_12 : f32 to vector<240x128xf32>
    %19 = arith.cmpf ogt, %11, %18 : vector<240x128xf32>
    %cst_13 = arith.constant 1.000000e+00 : f32
    %20 = vector.broadcast %cst_13 : f32 to vector<240x128xf32>
    %21 = arith.select %19, %11, %20 : vector<240x128xi1>, vector<240x128xf32>
    %22 = math.rsqrt %21 : vector<240x128xf32>
    %cst_14 = arith.constant 2.000000e+00 : f32
    %23 = vector.broadcast %cst_14 : f32 to vector<240x128xf32>
    %24 = arith.mulf %23, %14 : vector<240x128xf32>
    %25 = arith.mulf %24, %22 : vector<240x128xf32>
    %cst_15 = arith.constant 1.000000e+00 : f32
    %26 = vector.broadcast %cst_15 : f32 to vector<240x128xf32>
    %27 = arith.subf %26, %25 : vector<240x128xf32>
    %cst_16 = arith.constant 0.000000e+00 : f32
    %28 = vector.broadcast %cst_16 : f32 to vector<240x128xf32>
    %29 = arith.select %19, %27, %28 : vector<240x128xi1>, vector<240x128xf32>
    %30 = vector.broadcast %17 : vector<240x1xf32> to vector<240x128xf32>
    %31 = arith.addf %29, %30 : vector<240x128xf32>
    %cst_17 = arith.constant 0.000000e+00 : f32
    %32 = vector.broadcast %cst_17 : f32 to vector<240x128xf32>
    %33 = arith.maximumf %31, %32 : vector<240x128xf32>
    %34 = math.sqrt %33 : vector<240x128xf32>
    %c0_18 = arith.constant 0 : index
    %c0_19 = arith.constant 0 : index
    %35 = vector.load %arg8[%c0_18, %c0_19] : memref<1x128xf32, #tpu.memory_space<vmem>>, vector<1x128xf32>
    %c0_20 = arith.constant 0 : index
    %c0_21 = arith.constant 0 : index
    %36 = vector.load %arg9[%c0_20, %c0_21] : memref<1x128xf32, #tpu.memory_space<vmem>>, vector<1x128xf32>
    %c0_22 = arith.constant 0 : index
    %c0_23 = arith.constant 0 : index
    %37 = vector.load %arg4[%c0_22, %c0_23] : memref<240x1xf32, #tpu.memory_space<vmem>>, vector<240x1xf32>
    %38 = vector.broadcast %35 : vector<1x128xf32> to vector<240x128xf32>
    %39 = vector.broadcast %37 : vector<240x1xf32> to vector<240x128xf32>
    %40 = arith.cmpf oeq, %38, %39 : vector<240x128xf32>
    %cst_24 = arith.constant 3.000000e+38 : f32
    %41 = vector.broadcast %cst_24 : f32 to vector<240x128xf32>
    %42 = arith.select %40, %34, %41 : vector<240x128xi1>, vector<240x128xf32>
    %cst_25 = arith.constant dense<0x7F800000> : vector<240xf32>
    %43 = vector.multi_reduction <minimumf>, %42, %cst_25 [1] : vector<240x128xf32> to vector<240xf32>
    %44 = vector.shape_cast %43 : vector<240xf32> to vector<240x1xf32>
    %45 = vector.broadcast %44 : vector<240x1xf32> to vector<240x128xf32>
    %46 = arith.cmpf oeq, %42, %45 : vector<240x128xf32>
    %cst_26 = arith.constant 3.000000e+38 : f32
    %47 = vector.shape_cast %36 : vector<1x128xf32> to vector<1x128xf32>
    %48 = vector.broadcast %47 : vector<1x128xf32> to vector<240x128xf32>
    %49 = vector.broadcast %cst_26 : f32 to vector<240x128xf32>
    %50 = arith.select %46, %48, %49 : vector<240x128xi1>, vector<240x128xf32>
    %cst_27 = arith.constant dense<0x7F800000> : vector<240xf32>
    %51 = vector.multi_reduction <minimumf>, %50, %cst_27 [1] : vector<240x128xf32> to vector<240xf32>
    %52 = vector.shape_cast %51 : vector<240xf32> to vector<240x1xf32>
    %c0_28 = arith.constant 0 : index
    %c0_29 = arith.constant 0 : index
    %53 = vector.load %arg10[%c0_28, %c0_29] : memref<240x1xf32, #tpu.memory_space<vmem>>, vector<240x1xf32>
    tpu.vector_store %arg10[%c0_28, %c0_29], %52 {strides = array<i32>} : memref<240x1xf32, #tpu.memory_space<vmem>>, vector<240x1xf32>,
    %cst_30 = arith.constant 0.000000e+00 : f32
    %54 = vector.broadcast %cst_30 : f32 to vector<240x128xf32>
    %55 = arith.select %40, %34, %54 : vector<240x128xi1>, vector<240x128xf32>
    %cst_31 = arith.constant dense<0.000000e+00> : vector<128xf32>
    %56 = vector.multi_reduction <add>, %55, %cst_31 [0] : vector<240x128xf32> to vector<128xf32>
    %57 = vector.shape_cast %56 : vector<128xf32> to vector<1x128xf32>
    %58 = vector.shape_cast %57 : vector<1x128xf32> to vector<1x128xf32>
    %59 = vector.broadcast %58 : vector<1x128xf32> to vector<8x128xf32>
    %c0_32 = arith.constant 0 : index
    %c0_33 = arith.constant 0 : index
    %60 = vector.load %arg13[%c0_32, %c0_33] : memref<8x128xf32, #tpu.memory_space<vmem>>, vector<8x128xf32>
    tpu.vector_store %arg13[%c0_32, %c0_33], %59 {strides = array<i32>} : memref<8x128xf32, #tpu.memory_space<vmem>>, vector<8x128xf32>,
    %c0_34 = arith.constant 0 : index
    %c0_35 = arith.constant 0 : index
    %61 = vector.load %arg5[%c0_34, %c0_35] : memref<240x1xf32, #tpu.memory_space<vmem>>, vector<240x1xf32>
    %62 = vector.broadcast %36 : vector<1x128xf32> to vector<240x128xf32>
    %63 = vector.broadcast %61 : vector<240x1xf32> to vector<240x128xf32>
    %64 = arith.cmpf oeq, %62, %63 : vector<240x128xf32>
    %cst_36 = arith.constant 3.000000e+38 : f32
    %65 = vector.broadcast %cst_36 : f32 to vector<240x128xf32>
    %66 = arith.select %64, %34, %65 : vector<240x128xi1>, vector<240x128xf32>
    %cst_37 = arith.constant dense<0x7F800000> : vector<240xf32>
    %67 = vector.multi_reduction <minimumf>, %66, %cst_37 [1] : vector<240x128xf32> to vector<240xf32>
    %68 = vector.shape_cast %67 : vector<240xf32> to vector<240x1xf32>
    %69 = vector.broadcast %68 : vector<240x1xf32> to vector<240x128xf32>
    %70 = arith.cmpf oeq, %66, %69 : vector<240x128xf32>
    %cst_38 = arith.constant 3.000000e+38 : f32
    %71 = vector.shape_cast %35 : vector<1x128xf32> to vector<1x128xf32>
    %72 = vector.broadcast %71 : vector<1x128xf32> to vector<240x128xf32>
    %73 = vector.broadcast %cst_38 : f32 to vector<240x128xf32>
    %74 = arith.select %70, %72, %73 : vector<240x128xi1>, vector<240x128xf32>
    %cst_39 = arith.constant dense<0x7F800000> : vector<240xf32>
    %75 = vector.multi_reduction <minimumf>, %74, %cst_39 [1] : vector<240x128xf32> to vector<240xf32>
    %76 = vector.shape_cast %75 : vector<240xf32> to vector<240x1xf32>
    %c0_40 = arith.constant 0 : index
    %c0_41 = arith.constant 0 : index
    %77 = vector.load %arg11[%c0_40, %c0_41] : memref<240x1xf32, #tpu.memory_space<vmem>>, vector<240x1xf32>
    tpu.vector_store %arg11[%c0_40, %c0_41], %76 {strides = array<i32>} : memref<240x1xf32, #tpu.memory_space<vmem>>, vector<240x1xf32>,
    %cst_42 = arith.constant 0.000000e+00 : f32
    %78 = vector.broadcast %cst_42 : f32 to vector<240x128xf32>
    %79 = arith.select %64, %34, %78 : vector<240x128xi1>, vector<240x128xf32>
    %cst_43 = arith.constant dense<0.000000e+00> : vector<240xf32>
    %80 = vector.multi_reduction <add>, %79, %cst_43 [1] : vector<240x128xf32> to vector<240xf32>
    %81 = vector.shape_cast %80 : vector<240xf32> to vector<240x1xf32>
    %cst_44 = arith.constant 2.500000e-01 : f32
    %82 = vector.broadcast %cst_44 : f32 to vector<240x1xf32>
    %83 = arith.mulf %81, %82 : vector<240x1xf32>
    %c0_45 = arith.constant 0 : index
    %c0_46 = arith.constant 0 : index
    %84 = vector.load %arg12[%c0_45, %c0_46] : memref<240x1xf32, #tpu.memory_space<vmem>>, vector<240x1xf32>
    tpu.vector_store %arg12[%c0_45, %c0_46], %83 {strides = array<i32>} : memref<240x1xf32, #tpu.memory_space<vmem>>, vector<240x1xf32>,
    return
  }
  func.func @transform_0(%arg0: i32) -> (i32, i32) {
    %c0_i32 = arith.constant 0 : i32
    %c0_i32_0 = arith.constant 0 : i32
    %c0_i32_1 = arith.constant 0 : i32
    return %c0_i32, %c0_i32_0 : i32, i32
  }
  func.func @transform_1(%arg0: i32) -> (i32, i32) {
    %c0_i32 = arith.constant 0 : i32
    %c0_i32_0 = arith.constant 0 : i32
    return %arg0, %c0_i32 : i32, i32
  }
  func.func @transform_2(%arg0: i32) -> (i32, i32) {
    %c0_i32 = arith.constant 0 : i32
    %c0_i32_0 = arith.constant 0 : i32
    return %arg0, %c0_i32 : i32, i32
  }
  func.func @transform_3(%arg0: i32) -> (i32, i32) {
    %c0_i32 = arith.constant 0 : i32
    %c0_i32_0 = arith.constant 0 : i32
    return %arg0, %c0_i32 : i32, i32
  }
  func.func @transform_4(%arg0: i32) -> (i32, i32) {
    %c0_i32 = arith.constant 0 : i32
    %c0_i32_0 = arith.constant 0 : i32
    return %arg0, %c0_i32 : i32, i32
  }
  func.func @transform_5(%arg0: i32) -> (i32, i32) {
    %c0_i32 = arith.constant 0 : i32
    %c0_i32_0 = arith.constant 0 : i32
    %c0_i32_1 = arith.constant 0 : i32
    return %c0_i32, %c0_i32_0 : i32, i32
  }
  func.func @transform_6(%arg0: i32) -> (i32, i32) {
    %c0_i32 = arith.constant 0 : i32
    %c0_i32_0 = arith.constant 0 : i32
    %c0_i32_1 = arith.constant 0 : i32
    return %c0_i32, %c0_i32_0 : i32, i32
  }
  func.func @transform_7(%arg0: i32) -> (i32, i32) {
    %c0_i32 = arith.constant 0 : i32
    %c0_i32_0 = arith.constant 0 : i32
    %c0_i32_1 = arith.constant 0 : i32
    return %c0_i32, %c0_i32_0 : i32, i32
  }
  func.func @transform_8(%arg0: i32) -> (i32, i32) {
    %c0_i32 = arith.constant 0 : i32
    %c0_i32_0 = arith.constant 0 : i32
    %c0_i32_1 = arith.constant 0 : i32
    return %c0_i32, %c0_i32_0 : i32, i32
  }
  func.func @transform_9(%arg0: i32) -> (i32, i32) {
    %c0_i32 = arith.constant 0 : i32
    %c0_i32_0 = arith.constant 0 : i32
    return %arg0, %c0_i32 : i32, i32
  }
  func.func @transform_10(%arg0: i32) -> (i32, i32) {
    %c0_i32 = arith.constant 0 : i32
    %c0_i32_0 = arith.constant 0 : i32
    return %arg0, %c0_i32 : i32, i32
  }
  func.func @transform_11(%arg0: i32) -> (i32, i32) {
    %c0_i32 = arith.constant 0 : i32
    %c0_i32_0 = arith.constant 0 : i32
    return %arg0, %c0_i32 : i32, i32
  }
  func.func @transform_12(%arg0: i32) -> (i32, i32) {
    %c0_i32 = arith.constant 0 : i32
    %c0_i32_0 = arith.constant 0 : i32
    return %arg0, %c0_i32 : i32, i32
  }
}

module attributes {stable_mosaic.version = 11 : i64} {
  func.func @_tv_kernel(%arg0: memref<16x16xf32, #tpu.memory_space<vmem>>, %arg1: memref<16x16xf32, #tpu.memory_space<vmem>>, %arg2: memref<16x16xf32, #tpu.memory_space<vmem>>, %arg3: memref<16x16xf32, #tpu.memory_space<vmem>>, %arg4: memref<1x1xf32, #tpu.memory_space<smem>>) attributes {dimension_semantics = [], scalar_prefetch = 0 : i64, scratch_operands = 0 : i64, tpu.core_type = #tpu.core_type<tc>} {
    %c1 = arith.constant 1 : index
    %c0 = arith.constant 0 : index
    %0 = vector.load %arg0[%c1, %c0] : memref<16x16xf32, #tpu.memory_space<vmem>>, vector<1x16xf32>
    %c0_0 = arith.constant 0 : index
    %c0_1 = arith.constant 0 : index
    %1 = vector.load %arg0[%c0_0, %c0_1] : memref<16x16xf32, #tpu.memory_space<vmem>>, vector<1x16xf32>
    %2 = arith.subf %0, %1 : vector<1x16xf32>
    %3 = math.absf %2 : vector<1x16xf32>
    %c0_2 = arith.constant 0 : index
    %c0_3 = arith.constant 0 : index
    %4 = vector.load %arg2[%c0_2, %c0_3] : memref<16x16xf32, #tpu.memory_space<vmem>>, vector<1x16xf32>
    %5 = arith.mulf %3, %4 : vector<1x16xf32>
    %6 = vector.shape_cast %5 : vector<1x16xf32> to vector<1x1x16xf32>
    %cst = arith.constant dense<0.000000e+00> : vector<1xf32>
    %7 = vector.multi_reduction <add>, %6, %cst [1, 2] : vector<1x1x16xf32> to vector<1xf32>
    %8 = vector.shape_cast %7 : vector<1xf32> to vector<1x1x1xf32>
    %9 = vector.extract %8[0, 0, 0] : f32 from vector<1x1x1xf32>
    %c15 = arith.constant 15 : index
    %c0_4 = arith.constant 0 : index
    %10 = vector.load %arg0[%c15, %c0_4] : memref<16x16xf32, #tpu.memory_space<vmem>>, vector<1x16xf32>
    %c14 = arith.constant 14 : index
    %c0_5 = arith.constant 0 : index
    %11 = vector.load %arg0[%c14, %c0_5] : memref<16x16xf32, #tpu.memory_space<vmem>>, vector<1x16xf32>
    %12 = arith.subf %10, %11 : vector<1x16xf32>
    %13 = math.absf %12 : vector<1x16xf32>
    %c15_6 = arith.constant 15 : index
    %c0_7 = arith.constant 0 : index
    %14 = vector.load %arg2[%c15_6, %c0_7] : memref<16x16xf32, #tpu.memory_space<vmem>>, vector<1x16xf32>
    %15 = arith.mulf %13, %14 : vector<1x16xf32>
    %16 = vector.shape_cast %15 : vector<1x16xf32> to vector<1x1x16xf32>
    %cst_8 = arith.constant dense<0.000000e+00> : vector<1xf32>
    %17 = vector.multi_reduction <add>, %16, %cst_8 [1, 2] : vector<1x1x16xf32> to vector<1xf32>
    %18 = vector.shape_cast %17 : vector<1xf32> to vector<1x1x1xf32>
    %19 = vector.extract %18[0, 0, 0] : f32 from vector<1x1x1xf32>
    %c2 = arith.constant 2 : index
    %c0_9 = arith.constant 0 : index
    %20 = vector.load %arg0[%c2, %c0_9] : memref<16x16xf32, #tpu.memory_space<vmem>>, vector<14x16xf32>
    %c0_10 = arith.constant 0 : index
    %c0_11 = arith.constant 0 : index
    %21 = vector.load %arg0[%c0_10, %c0_11] : memref<16x16xf32, #tpu.memory_space<vmem>>, vector<14x16xf32>
    %22 = arith.subf %20, %21 : vector<14x16xf32>
    %cst_12 = arith.constant 5.000000e-01 : f32
    %23 = vector.broadcast %cst_12 : f32 to vector<14x16xf32>
    %24 = arith.mulf %23, %22 : vector<14x16xf32>
    %25 = math.absf %24 : vector<14x16xf32>
    %c1_13 = arith.constant 1 : index
    %c0_14 = arith.constant 0 : index
    %26 = vector.load %arg2[%c1_13, %c0_14] : memref<16x16xf32, #tpu.memory_space<vmem>>, vector<14x16xf32>
    %27 = arith.mulf %25, %26 : vector<14x16xf32>
    %28 = vector.shape_cast %27 : vector<14x16xf32> to vector<1x14x16xf32>
    %cst_15 = arith.constant dense<0.000000e+00> : vector<1xf32>
    %29 = vector.multi_reduction <add>, %28, %cst_15 [1, 2] : vector<1x14x16xf32> to vector<1xf32>
    %30 = vector.shape_cast %29 : vector<1xf32> to vector<1x1x1xf32>
    %31 = vector.extract %30[0, 0, 0] : f32 from vector<1x1x1xf32>
    %32 = arith.addf %9, %19 : f32
    %33 = arith.addf %32, %31 : f32
    %c1_16 = arith.constant 1 : index
    %c0_17 = arith.constant 0 : index
    %34 = vector.load %arg1[%c1_16, %c0_17] : memref<16x16xf32, #tpu.memory_space<vmem>>, vector<1x16xf32>
    %c0_18 = arith.constant 0 : index
    %c0_19 = arith.constant 0 : index
    %35 = vector.load %arg1[%c0_18, %c0_19] : memref<16x16xf32, #tpu.memory_space<vmem>>, vector<1x16xf32>
    %36 = arith.subf %34, %35 : vector<1x16xf32>
    %37 = math.absf %36 : vector<1x16xf32>
    %c0_20 = arith.constant 0 : index
    %c0_21 = arith.constant 0 : index
    %38 = vector.load %arg3[%c0_20, %c0_21] : memref<16x16xf32, #tpu.memory_space<vmem>>, vector<1x16xf32>
    %39 = arith.mulf %37, %38 : vector<1x16xf32>
    %40 = vector.shape_cast %39 : vector<1x16xf32> to vector<1x1x16xf32>
    %cst_22 = arith.constant dense<0.000000e+00> : vector<1xf32>
    %41 = vector.multi_reduction <add>, %40, %cst_22 [1, 2] : vector<1x1x16xf32> to vector<1xf32>
    %42 = vector.shape_cast %41 : vector<1xf32> to vector<1x1x1xf32>
    %43 = vector.extract %42[0, 0, 0] : f32 from vector<1x1x1xf32>
    %c15_23 = arith.constant 15 : index
    %c0_24 = arith.constant 0 : index
    %44 = vector.load %arg1[%c15_23, %c0_24] : memref<16x16xf32, #tpu.memory_space<vmem>>, vector<1x16xf32>
    %c14_25 = arith.constant 14 : index
    %c0_26 = arith.constant 0 : index
    %45 = vector.load %arg1[%c14_25, %c0_26] : memref<16x16xf32, #tpu.memory_space<vmem>>, vector<1x16xf32>
    %46 = arith.subf %44, %45 : vector<1x16xf32>
    %47 = math.absf %46 : vector<1x16xf32>
    %c15_27 = arith.constant 15 : index
    %c0_28 = arith.constant 0 : index
    %48 = vector.load %arg3[%c15_27, %c0_28] : memref<16x16xf32, #tpu.memory_space<vmem>>, vector<1x16xf32>
    %49 = arith.mulf %47, %48 : vector<1x16xf32>
    %50 = vector.shape_cast %49 : vector<1x16xf32> to vector<1x1x16xf32>
    %cst_29 = arith.constant dense<0.000000e+00> : vector<1xf32>
    %51 = vector.multi_reduction <add>, %50, %cst_29 [1, 2] : vector<1x1x16xf32> to vector<1xf32>
    %52 = vector.shape_cast %51 : vector<1xf32> to vector<1x1x1xf32>
    %53 = vector.extract %52[0, 0, 0] : f32 from vector<1x1x1xf32>
    %c2_30 = arith.constant 2 : index
    %c0_31 = arith.constant 0 : index
    %54 = vector.load %arg1[%c2_30, %c0_31] : memref<16x16xf32, #tpu.memory_space<vmem>>, vector<14x16xf32>
    %c0_32 = arith.constant 0 : index
    %c0_33 = arith.constant 0 : index
    %55 = vector.load %arg1[%c0_32, %c0_33] : memref<16x16xf32, #tpu.memory_space<vmem>>, vector<14x16xf32>
    %56 = arith.subf %54, %55 : vector<14x16xf32>
    %cst_34 = arith.constant 5.000000e-01 : f32
    %57 = vector.broadcast %cst_34 : f32 to vector<14x16xf32>
    %58 = arith.mulf %57, %56 : vector<14x16xf32>
    %59 = math.absf %58 : vector<14x16xf32>
    %c1_35 = arith.constant 1 : index
    %c0_36 = arith.constant 0 : index
    %60 = vector.load %arg3[%c1_35, %c0_36] : memref<16x16xf32, #tpu.memory_space<vmem>>, vector<14x16xf32>
    %61 = arith.mulf %59, %60 : vector<14x16xf32>
    %62 = vector.shape_cast %61 : vector<14x16xf32> to vector<1x14x16xf32>
    %cst_37 = arith.constant dense<0.000000e+00> : vector<1xf32>
    %63 = vector.multi_reduction <add>, %62, %cst_37 [1, 2] : vector<1x14x16xf32> to vector<1xf32>
    %64 = vector.shape_cast %63 : vector<1xf32> to vector<1x1x1xf32>
    %65 = vector.extract %64[0, 0, 0] : f32 from vector<1x1x1xf32>
    %66 = arith.addf %43, %53 : f32
    %67 = arith.addf %66, %65 : f32
    %68 = arith.addf %33, %67 : f32
    %c0_38 = arith.constant 0 : index
    %c0_39 = arith.constant 0 : index
    %69 = memref.load %arg4[%c0_38, %c0_39] : memref<1x1xf32, #tpu.memory_space<smem>>
    memref.store %68, %arg4[%c0_38, %c0_39] : memref<1x1xf32, #tpu.memory_space<smem>>
    return
  }
}

</mosaic_0001>

<llo_original>
// kernel: forward_loss.2
$region0: #{forward_loss.2}
  #allocation0 [shape = 'u32[]', space=smem, size = 0x4, offset = 0x4, fixed_abs, tag = 'smem constant byte address 0x4 - core index']
  #allocation1 [shape = 'u32[144,128]{1,0:T(1,128)}', space=vmem, size = 0x12000, scoped, tag = 'internal scratch']
  %s0 = inlined_call_operand.vmem [shape: f32[16,16], index: 0, kind: input, shape index: {}]
  %s1 = inlined_call_operand.vmem [shape: f32[16,16], index: 1, kind: input, shape index: {}]
  %s2 = inlined_call_operand.vmem [shape: f32[16,16], index: 2, kind: input, shape index: {}]
  %s3 = inlined_call_operand.vmem [shape: f32[16,16], index: 3, kind: input, shape index: {}]
  %s4 = inlined_call_operand.hbm [shape: f32[1,1], index: 4, kind: output, shape index: {}]
  %s5 = sld [smem:[#allocation0]]
  $region26: #{forward_loss.2} parent=0
    _
  %s7 = ssub.s32 1, %s5
  %s8 = scalar_select 0, %s7, %s5
  $region1: #{forward_loss.2} parent=0
    #allocation2 [shape = 'u8[512]{0}', space=smem, size = 0x200, scoped, tag = 'output window, operand 0, single buffered']
    #allocation3 [shape = 's32[1]{0}', space=sflag, size = 0x4, scoped, tag = 'scoped memory for forward_loss.2']
    %9 = vsyncpa [#allocation3], 0
    // Predicated region
    $region2: #{forward_loss.2} parent=1 // pred_check
      _
    $region3: #{forward_loss.2} parent=1 // pred_check_branch
      %11 = sbr.rel (0) target = $region5
    $region4: #{forward_loss.2} parent=1 // pred_region
      _
    $region5: #{forward_loss.2} parent=1 // pred_fallthru
      _
    // Predicated region
    $region6: #{forward_loss.2} parent=1 // pred_check
      _
    $region7: #{forward_loss.2} parent=1 // pred_check_branch
      %13 = sbr.rel (0) target = $region9
    $region8: #{forward_loss.2} parent=1 // pred_region
      _
    $region9: #{forward_loss.2} parent=1 // pred_fallthru
      _
    // Predicated region
    $region10: #{forward_loss.2} parent=1 // pred_check
      _
    $region11: #{forward_loss.2} parent=1 // pred_check_branch
      %15 = sbr.rel (0) target = $region13
    $region12: #{forward_loss.2} parent=1 // pred_region
      _
    $region13: #{forward_loss.2} parent=1 // pred_fallthru
      _
    // Predicated region
    $region14: #{forward_loss.2} parent=1 // pred_check
      _
    $region15: #{forward_loss.2} parent=1 // pred_check_branch
      %17 = sbr.rel (0) target = $region17
    $region16: #{forward_loss.2} parent=1 // pred_region
      _
    $region17: #{forward_loss.2} parent=1 // pred_fallthru
      _
    %v18 = vld [vmem:[%s0 + $0x1] sm:$0x1]
    %v19 = vld [vmem:[%s0] sm:$0x1]
    %v20 = vsub.f32 %v18, %v19
    %v21 = vand.u32 2147483647, %v20
    %v22 = vld [vmem:[%s2] sm:$0x1]
    %v23 = vmul.f32 %v21, %v22
    %vm24 = vcmask 122880
    %v25 = vsel %vm24, %v23, 0.0
    %26 = vadd.xlane.f32.xlu0 %v25
    %v27 = vpop.xlane.xlu0 %26
    %v28 = vrot.slane %v27, 4
    %v29 = vadd.f32 %v27, %v28
    %v30 = vrot.slane %v29, 2
    %v31 = vadd.f32 %v29, %v30
    %v32 = vrot.slane %v31, 1
    %v33 = vadd.f32 %v31, %v32
    %s34 = vtos %v33
    %v35 = vld [vmem:[%s0 + $0xf] sm:$0x1]
    %v36 = vld [vmem:[%s0 + $0xe] sm:$0x1]
    %v37 = vsub.f32 %v35, %v36
    %v38 = vand.u32 2147483647, %v37
    %v39 = vld [vmem:[%s2 + $0xf] sm:$0x1]
    %v40 = vmul.f32 %v38, %v39
    %v41 = vsel %vm24, %v40, 0.0
    %42 = vadd.xlane.f32.xlu0 %v41
    %v43 = vpop.xlane.xlu0 %42
    %v44 = vrot.slane %v43, 4
    %v45 = vadd.f32 %v43, %v44
    %v46 = vrot.slane %v45, 2
    %v47 = vadd.f32 %v45, %v46
    %v48 = vrot.slane %v47, 1
    %v49 = vadd.f32 %v47, %v48
    %s50 = vtos %v49
    %v51 = vld [vmem:[%s0 + $0x2] sm:$0xff]
    %v52 = vld [vmem:[%s0 + $0xa] sm:$0x3f]
    %v53 = vld [vmem:[%s0] sm:$0xff]
    %v54 = vld [vmem:[%s0 + $0x8] sm:$0x3f]
    %v55 = vsub.f32 %v51, %v53
    %v56 = vsub.f32 %v52, %v54
    %v57 = vmul.f32 %v55, 0.5
    %v58 = vmul.f32 %v56, 0.5
    %v59 = vand.u32 2147483647, %v57
    %v60 = vand.u32 2147483647, %v58
    %v61 = vld [vmem:[%s2 + $0x1] sm:$0xff]
    %v62 = vld [vmem:[%s2 + $0x9] sm:$0x3f]
    %v63 = vmul.f32 %v59, %v61
    %v64 = vmul.f32 %v60, %v62
    %vm65 = vcmask 130048
    %v66 = vsel %vm65, %v63, 0.0
    %vm67 = vcmask 128000
    %v68 = vsel %vm67, %v64, 0.0
    %v69 = vadd.f32 %v66, %v68
    %70 = vadd.xlane.f32.xlu0 %v69
    %v71 = vpop.xlane.xlu0 %70
    %v72 = vrot.slane %v71, 4
    %v73 = vadd.f32 %v71, %v72
    %v74 = vrot.slane %v73, 2
    %v75 = vadd.f32 %v73, %v74
    %v76 = vrot.slane %v75, 1
    %v77 = vadd.f32 %v75, %v76
    %s78 = vtos %v77
    %s79 = sadd.f32 %s34, %s50
    %s80 = sadd.f32 %s79, %s78
    %v81 = vld [vmem:[%s1 + $0x1] sm:$0x1]
    %v82 = vld [vmem:[%s1] sm:$0x1]
    %v83 = vsub.f32 %v81, %v82
    %v84 = vand.u32 2147483647, %v83
    %v85 = vld [vmem:[%s3] sm:$0x1]
    %v86 = vmul.f32 %v84, %v85
    %v87 = vsel %vm24, %v86, 0.0
    %88 = vadd.xlane.f32.xlu0 %v87
    %v89 = vpop.xlane.xlu0 %88
    %v90 = vrot.slane %v89, 4
    %v91 = vadd.f32 %v89, %v90
    %v92 = vrot.slane %v91, 2
    %v93 = vadd.f32 %v91, %v92
    %v94 = vrot.slane %v93, 1
    %v95 = vadd.f32 %v93, %v94
    %s96 = vtos %v95
    %v97 = vld [vmem:[%s1 + $0xf] sm:$0x1]
    %v98 = vld [vmem:[%s1 + $0xe] sm:$0x1]
    %v99 = vsub.f32 %v97, %v98
    %v100 = vand.u32 2147483647, %v99
    %v101 = vld [vmem:[%s3 + $0xf] sm:$0x1]
    %v102 = vmul.f32 %v100, %v101
    %v103 = vsel %vm24, %v102, 0.0
    %104 = vadd.xlane.f32.xlu0 %v103
    %v105 = vpop.xlane.xlu0 %104
    %v106 = vrot.slane %v105, 4
    %v107 = vadd.f32 %v105, %v106
    %v108 = vrot.slane %v107, 2
    %v109 = vadd.f32 %v107, %v108
    %v110 = vrot.slane %v109, 1
    %v111 = vadd.f32 %v109, %v110
    %s112 = vtos %v111
    %v113 = vld [vmem:[%s1 + $0x2] sm:$0xff]
    %v114 = vld [vmem:[%s1 + $0xa] sm:$0x3f]
    %v115 = vld [vmem:[%s1] sm:$0xff]
    %v116 = vld [vmem:[%s1 + $0x8] sm:$0x3f]
    %v117 = vsub.f32 %v113, %v115
    %v118 = vsub.f32 %v114, %v116
    %v119 = vmul.f32 %v117, 0.5
    %v120 = vmul.f32 %v118, 0.5
    %v121 = vand.u32 2147483647, %v119
    %v122 = vand.u32 2147483647, %v120
    %v123 = vld [vmem:[%s3 + $0x1] sm:$0xff]
    %v124 = vld [vmem:[%s3 + $0x9] sm:$0x3f]
    %v125 = vmul.f32 %v121, %v123
    %v126 = vmul.f32 %v122, %v124
    %v127 = vsel %vm65, %v125, 0.0
    %v128 = vsel %vm67, %v126, 0.0
    %v129 = vadd.f32 %v127, %v128
    %130 = vadd.xlane.f32.xlu0 %v129
    %v131 = vpop.xlane.xlu0 %130
    %v132 = vrot.slane %v131, 4
    %v133 = vadd.f32 %v131, %v132
    %v134 = vrot.slane %v133, 2
    %v135 = vadd.f32 %v133, %v134
    %v136 = vrot.slane %v135, 1
    %v137 = vadd.f32 %v135, %v136
    %s138 = vtos %v137
    %s139 = sadd.f32 %s96, %s112
    %s140 = sadd.f32 %s139, %s138
    %s141 = sadd.f32 %s80, %s140
    %s142 = scalar_lea.smem [#allocation2], 0
    %143 = sst [smem:[%s142]] %s141
    // Predicated region
    $region18: #{forward_loss.2} parent=1 // pred_check
      _
    $region19: #{forward_loss.2} parent=1 // pred_check_branch
      %145 = sbr.rel (0) target = $region21
    $region20: #{forward_loss.2} parent=1 // pred_region
      %s147 = ssub.s32 16, 16
      %148 = vsyncadd [#allocation3], %s147
      %151 = dma.smem_to_hbm [#allocation2], 16, %s4, [#allocation3]
    $region21: #{forward_loss.2} parent=1 // pred_fallthru
      _
    // Predicated region
    $region22: #{forward_loss.2} parent=1 // pred_check
      _
    $region23: #{forward_loss.2} parent=1 // pred_check_branch
      %153 = sbr.rel (0) target = $region25
    $region24: #{forward_loss.2} parent=1 // pred_region
      %154 = dma.done [#allocation3], 16
    $region25: #{forward_loss.2} parent=1 // pred_fallthru
      _
    %155 = sfence
    %156 = vsyncpa [#allocation3], 1

// kernel: forward_loss.3
$region0: #{forward_loss.3}
  #allocation0 [shape = 'u32[]', space=smem, size = 0x4, offset = 0x4, fixed_abs, tag = 'smem constant byte address 0x4 - core index']
  #allocation1 [shape = 'u32[144,128]{1,0:T(1,128)}', space=vmem, size = 0x12000, scoped, tag = 'internal scratch']
  %s0 = inlined_call_operand.vmem [shape: f32[1,8], index: 0, kind: input, shape index: {}]
  %s1 = inlined_call_operand.vmem [shape: f32[240,1], index: 1, kind: input, shape index: {}]
  %s2 = inlined_call_operand.vmem [shape: f32[240,8], index: 2, kind: input, shape index: {}]
  %s3 = inlined_call_operand.vmem [shape: f32[240,1], index: 3, kind: input, shape index: {}]
  %s4 = inlined_call_operand.vmem [shape: f32[240,1], index: 4, kind: input, shape index: {}]
  %s5 = inlined_call_operand.vmem [shape: f32[8,128], index: 5, kind: input, shape index: {}]
  %s6 = inlined_call_operand.vmem [shape: f32[8,128], index: 6, kind: input, shape index: {}]
  %s7 = inlined_call_operand.vmem [shape: f32[1,128], index: 7, kind: input, shape index: {}]
  %s8 = inlined_call_operand.vmem [shape: f32[1,128], index: 8, kind: input, shape index: {}]
  %s9 = inlined_call_operand.vmem [shape: f32[240,1], index: 9, kind: output, shape index: {0}]
  %s10 = inlined_call_operand.vmem [shape: f32[240,1], index: 10, kind: output, shape index: {1}]
  %s11 = inlined_call_operand.vmem [shape: f32[240,1], index: 11, kind: output, shape index: {2}]
  %s12 = inlined_call_operand.vmem [shape: f32[8,128], index: 12, kind: output, shape index: {3}]
  %13 = xla_tuple %s9, %s10, %s11, %s12
  %s14 = sld [smem:[#allocation0]]
  $region70: #{forward_loss.3} parent=0
    _
  %s16 = ssub.s32 1, %s14
  %s17 = scalar_select 0, %s16, %s14
  // Predicated region
  $region2: #{forward_loss.3} parent=0 // pred_check
    _
  $region3: #{forward_loss.3} parent=0 // pred_check_branch
    %19 = sbr.rel (0) target = $region5
  $region4: #{forward_loss.3} parent=0 // pred_region
    _
  $region5: #{forward_loss.3} parent=0 // pred_fallthru
    _
  // Predicated region
  $region6: #{forward_loss.3} parent=0 // pred_check
    _
  $region7: #{forward_loss.3} parent=0 // pred_check_branch
    %21 = sbr.rel (0) target = $region9
  $region8: #{forward_loss.3} parent=0 // pred_region
    _
  $region9: #{forward_loss.3} parent=0 // pred_fallthru
    _
  // Predicated region
  $region10: #{forward_loss.3} parent=0 // pred_check
    _
  $region11: #{forward_loss.3} parent=0 // pred_check_branch
    %23 = sbr.rel (0) target = $region13
  $region12: #{forward_loss.3} parent=0 // pred_region
    _
  $region13: #{forward_loss.3} parent=0 // pred_fallthru
    _
  // Predicated region
  $region14: #{forward_loss.3} parent=0 // pred_check
    _
  $region15: #{forward_loss.3} parent=0 // pred_check_branch
    %25 = sbr.rel (0) target = $region17
  $region16: #{forward_loss.3} parent=0 // pred_region
    _
  $region17: #{forward_loss.3} parent=0 // pred_fallthru
    _
  // Predicated region
  $region18: #{forward_loss.3} parent=0 // pred_check
    _
  $region19: #{forward_loss.3} parent=0 // pred_check_branch
    %27 = sbr.rel (0) target = $region21
  $region20: #{forward_loss.3} parent=0 // pred_region
    _
  $region21: #{forward_loss.3} parent=0 // pred_fallthru
    _
  // Predicated region
  $region22: #{forward_loss.3} parent=0 // pred_check
    _
  $region23: #{forward_loss.3} parent=0 // pred_check_branch
    %29 = sbr.rel (0) target = $region25
  $region24: #{forward_loss.3} parent=0 // pred_region
    _
  $region25: #{forward_loss.3} parent=0 // pred_fallthru
    _
  // Predicated region
  $region26: #{forward_loss.3} parent=0 // pred_check
    _
  $region27: #{forward_loss.3} parent=0 // pred_check_branch
    %31 = sbr.rel (0) target = $region29
  $region28: #{forward_loss.3} parent=0 // pred_region
    _
  $region29: #{forward_loss.3} parent=0 // pred_fallthru
    _
  // Predicated region
  $region30: #{forward_loss.3} parent=0 // pred_check
    _
  $region31: #{forward_loss.3} parent=0 // pred_check_branch
    %33 = sbr.rel (0) target = $region33
  $region32: #{forward_loss.3} parent=0 // pred_region
    _
  $region33: #{forward_loss.3} parent=0 // pred_fallthru
    _
  // Predicated region
  $region34: #{forward_loss.3} parent=0 // pred_check
    _
  $region35: #{forward_loss.3} parent=0 // pred_check_branch
    %35 = sbr.rel (0) target = $region37
  $region36: #{forward_loss.3} parent=0 // pred_region
    _
  $region37: #{forward_loss.3} parent=0 // pred_fallthru
    _
  %v36 = vld [vmem:[%s0] sm:$0x1]
  %v37 = vsub.f32 0.0, %v36
  %v38 = vld [vmem:[%s1] sm:$0xff]
  %v39 = vld [vmem:[%s1 + $0x8] sm:$0xff]
  %v40 = vld [vmem:[%s1 + $0x10] sm:$0xff]
  %v41 = vld [vmem:[%s1 + $0x18] sm:$0xff]
  %v42 = vld [vmem:[%s1 + $0x20] sm:$0xff]
  %v43 = vld [vmem:[%s1 + $0x28] sm:$0xff]
  %v44 = vld [vmem:[%s1 + $0x30] sm:$0xff]
  %v45 = vld [vmem:[%s1 + $0x38] sm:$0xff]
  %v46 = vld [vmem:[%s1 + $0x40] sm:$0xff]
  %v47 = vld [vmem:[%s1 + $0x48] sm:$0xff]
  %v48 = vld [vmem:[%s1 + $0x50] sm:$0xff]
  %v49 = vld [vmem:[%s1 + $0x58] sm:$0xff]
  %v50 = vld [vmem:[%s1 + $0x60] sm:$0xff]
  %v51 = vld [vmem:[%s1 + $0x68] sm:$0xff]
  %v52 = vld [vmem:[%s1 + $0x70] sm:$0xff]
  %v53 = vld [vmem:[%s1 + $0x78] sm:$0xff]
  %v54 = vld [vmem:[%s1 + $0x80] sm:$0xff]
  %v55 = vld [vmem:[%s1 + $0x88] sm:$0xff]
  %v56 = vld [vmem:[%s1 + $0x90] sm:$0xff]
  %v57 = vld [vmem:[%s1 + $0x98] sm:$0xff]
  %v58 = vld [vmem:[%s1 + $0xa0] sm:$0xff]
  %v59 = vld [vmem:[%s1 + $0xa8] sm:$0xff]
  %v60 = vld [vmem:[%s1 + $0xb0] sm:$0xff]
  %v61 = vld [vmem:[%s1 + $0xb8] sm:$0xff]
  %v62 = vld [vmem:[%s1 + $0xc0] sm:$0xff]
  %v63 = vld [vmem:[%s1 + $0xc8] sm:$0xff]
  %v64 = vld [vmem:[%s1 + $0xd0] sm:$0xff]
  %v65 = vld [vmem:[%s1 + $0xd8] sm:$0xff]
  %v66 = vld [vmem:[%s1 + $0xe0] sm:$0xff]
  %v67 = vld [vmem:[%s1 + $0xe8] sm:$0xff]
  %v69 = vlaneseq
  %v70 = vshrl.u32 %v69, 7
  %v71 = vsub.s32 0, %v70
  %v72 = vrot.slane %v37, %v71
  %75 = vset.pattern.permute.xlu0 0
  %76 = vperm.xlu0 %75, %v38
  %v77 = vpop.permute.xlu0 %76
  %80 = vset.pattern.permute.xlu0 0
  %81 = vperm.xlu0 %80, %v39
  %v82 = vpop.permute.xlu0 %81
  %85 = vset.pattern.permute.xlu0 0
  %86 = vperm.xlu0 %85, %v40
  %v87 = vpop.permute.xlu0 %86
  %90 = vset.pattern.permute.xlu0 0
  %91 = vperm.xlu0 %90, %v41
  %v92 = vpop.permute.xlu0 %91
  %95 = vset.pattern.permute.xlu0 0
  %96 = vperm.xlu0 %95, %v42
  %v97 = vpop.permute.xlu0 %96
  %100 = vset.pattern.permute.xlu0 0
  %101 = vperm.xlu0 %100, %v43
  %v102 = vpop.permute.xlu0 %101
  %105 = vset.pattern.permute.xlu0 0
  %106 = vperm.xlu0 %105, %v44
  %v107 = vpop.permute.xlu0 %106
  %110 = vset.pattern.permute.xlu0 0
  %111 = vperm.xlu0 %110, %v45
  %v112 = vpop.permute.xlu0 %111
  %115 = vset.pattern.permute.xlu0 0
  %116 = vperm.xlu0 %115, %v46
  %v117 = vpop.permute.xlu0 %116
  %120 = vset.pattern.permute.xlu0 0
  %121 = vperm.xlu0 %120, %v47
  %v122 = vpop.permute.xlu0 %121
  %125 = vset.pattern.permute.xlu0 0
  %126 = vperm.xlu0 %125, %v48
  %v127 = vpop.permute.xlu0 %126
  %130 = vset.pattern.permute.xlu0 0
  %131 = vperm.xlu0 %130, %v49
  %v132 = vpop.permute.xlu0 %131
  %135 = vset.pattern.permute.xlu0 0
  %136 = vperm.xlu0 %135, %v50
  %v137 = vpop.permute.xlu0 %136
  %140 = vset.pattern.permute.xlu0 0
  %141 = vperm.xlu0 %140, %v51
  %v142 = vpop.permute.xlu0 %141
  %145 = vset.pattern.permute.xlu0 0
  %146 = vperm.xlu0 %145, %v52
  %v147 = vpop.permute.xlu0 %146
  %150 = vset.pattern.permute.xlu0 0
  %151 = vperm.xlu0 %150, %v53
  %v152 = vpop.permute.xlu0 %151
  %155 = vset.pattern.permute.xlu0 0
  %156 = vperm.xlu0 %155, %v54
  %v157 = vpop.permute.xlu0 %156
  %160 = vset.pattern.permute.xlu0 0
  %161 = vperm.xlu0 %160, %v55
  %v162 = vpop.permute.xlu0 %161
  %165 = vset.pattern.permute.xlu0 0
  %166 = vperm.xlu0 %165, %v56
  %v167 = vpop.permute.xlu0 %166
  %170 = vset.pattern.permute.xlu0 0
  %171 = vperm.xlu0 %170, %v57
  %v172 = vpop.permute.xlu0 %171
  %175 = vset.pattern.permute.xlu0 0
  %176 = vperm.xlu0 %175, %v58
  %v177 = vpop.permute.xlu0 %176
  %180 = vset.pattern.permute.xlu0 0
  %181 = vperm.xlu0 %180, %v59
  %v182 = vpop.permute.xlu0 %181
  %185 = vset.pattern.permute.xlu0 0
  %186 = vperm.xlu0 %185, %v60
  %v187 = vpop.permute.xlu0 %186
  %190 = vset.pattern.permute.xlu0 0
  %191 = vperm.xlu0 %190, %v61
  %v192 = vpop.permute.xlu0 %191
  %195 = vset.pattern.permute.xlu0 0
  %196 = vperm.xlu0 %195, %v62
  %v197 = vpop.permute.xlu0 %196
  %200 = vset.pattern.permute.xlu0 0
  %201 = vperm.xlu0 %200, %v63
  %v202 = vpop.permute.xlu0 %201
  %205 = vset.pattern.permute.xlu0 0
  %206 = vperm.xlu0 %205, %v64
  %v207 = vpop.permute.xlu0 %206
  %210 = vset.pattern.permute.xlu0 0
  %211 = vperm.xlu0 %210, %v65
  %v212 = vpop.permute.xlu0 %211
  %215 = vset.pattern.permute.xlu0 0
  %216 = vperm.xlu0 %215, %v66
  %v217 = vpop.permute.xlu0 %216
  %220 = vset.pattern.permute.xlu0 0
  %221 = vperm.xlu0 %220, %v67
  %v222 = vpop.permute.xlu0 %221
  %v224 = vmul.f32 %v72, %v77
  %v225 = vmul.f32 %v72, %v82
  %v226 = vmul.f32 %v72, %v87
  %v227 = vmul.f32 %v72, %v92
  %v228 = vmul.f32 %v72, %v97
  %v229 = vmul.f32 %v72, %v102
  %v230 = vmul.f32 %v72, %v107
  %v231 = vmul.f32 %v72, %v112
  %v232 = vmul.f32 %v72, %v117
  %v233 = vmul.f32 %v72, %v122
  %v234 = vmul.f32 %v72, %v127
  %v235 = vmul.f32 %v72, %v132
  %v236 = vmul.f32 %v72, %v137
  %v237 = vmul.f32 %v72, %v142
  %v238 = vmul.f32 %v72, %v147
  %v239 = vmul.f32 %v72, %v152
  %v240 = vmul.f32 %v72, %v157
  %v241 = vmul.f32 %v72, %v162
  %v242 = vmul.f32 %v72, %v167
  %v243 = vmul.f32 %v72, %v172
  %v244 = vmul.f32 %v72, %v177
  %v245 = vmul.f32 %v72, %v182
  %v246 = vmul.f32 %v72, %v187
  %v247 = vmul.f32 %v72, %v192
  %v248 = vmul.f32 %v72, %v197
  %v249 = vmul.f32 %v72, %v202
  %v250 = vmul.f32 %v72, %v207
  %v251 = vmul.f32 %v72, %v212
  %v252 = vmul.f32 %v72, %v217
  %v253 = vmul.f32 %v72, %v222
  %v254 = vmul.f32 %v224, 1.442695
  %v255 = vpow.pop %v254
  %v256 = vmul.f32 %v225, 1.442695
  %v257 = vpow.pop %v256
  %v258 = vmul.f32 %v226, 1.442695
  %v259 = vpow.pop %v258
  %v260 = vmul.f32 %v227, 1.442695
  %v261 = vpow.pop %v260
  %v262 = vmul.f32 %v228, 1.442695
  %v263 = vpow.pop %v262
  %v264 = vmul.f32 %v229, 1.442695
  %v265 = vpow.pop %v264
  %v266 = vmul.f32 %v230, 1.442695
  %v267 = vpow.pop %v266
  %v268 = vmul.f32 %v231, 1.442695
  %v269 = vpow.pop %v268
  %v270 = vmul.f32 %v232, 1.442695
  %v271 = vpow.pop %v270
  %v272 = vmul.f32 %v233, 1.442695
  %v273 = vpow.pop %v272
  %v274 = vmul.f32 %v234, 1.442695
  %v275 = vpow.pop %v274
  %v276 = vmul.f32 %v235, 1.442695
  %v277 = vpow.pop %v276
  %v278 = vmul.f32 %v236, 1.442695
  %v279 = vpow.pop %v278
  %v280 = vmul.f32 %v237, 1.442695
  %v281 = vpow.pop %v280
  %v282 = vmul.f32 %v238, 1.442695
  %v283 = vpow.pop %v282
  %v284 = vmul.f32 %v239, 1.442695
  %v285 = vpow.pop %v284
  %v286 = vmul.f32 %v240, 1.442695
  %v287 = vpow.pop %v286
  %v288 = vmul.f32 %v241, 1.442695
  %v289 = vpow.pop %v288
  %v290 = vmul.f32 %v242, 1.442695
  %v291 = vpow.pop %v290
  %v292 = vmul.f32 %v243, 1.442695
  %v293 = vpow.pop %v292
  %v294 = vmul.f32 %v244, 1.442695
  %v295 = vpow.pop %v294
  %v296 = vmul.f32 %v245, 1.442695
  %v297 = vpow.pop %v296
  %v298 = vmul.f32 %v246, 1.442695
  %v299 = vpow.pop %v298
  %v300 = vmul.f32 %v247, 1.442695
  %v301 = vpow.pop %v300
  %v302 = vmul.f32 %v248, 1.442695
  %v303 = vpow.pop %v302
  %v304 = vmul.f32 %v249, 1.442695
  %v305 = vpow.pop %v304
  %v306 = vmul.f32 %v250, 1.442695
  %v307 = vpow.pop %v306
  %v308 = vmul.f32 %v251, 1.442695
  %v309 = vpow.pop %v308
  %v310 = vmul.f32 %v252, 1.442695
  %v311 = vpow.pop %v310
  %v312 = vmul.f32 %v253, 1.442695
  %v313 = vpow.pop %v312
  %v314 = vld [vmem:[%s2] sm:$0xff]
  %v315 = vld [vmem:[%s2 + $0x8] sm:$0xff]
  %v316 = vld [vmem:[%s2 + $0x10] sm:$0xff]
  %v317 = vld [vmem:[%s2 + $0x18] sm:$0xff]
  %v318 = vld [vmem:[%s2 + $0x20] sm:$0xff]
  %v319 = vld [vmem:[%s2 + $0x28] sm:$0xff]
  %v320 = vld [vmem:[%s2 + $0x30] sm:$0xff]
  %v321 = vld [vmem:[%s2 + $0x38] sm:$0xff]
  %v322 = vld [vmem:[%s2 + $0x40] sm:$0xff]
  %v323 = vld [vmem:[%s2 + $0x48] sm:$0xff]
  %v324 = vld [vmem:[%s2 + $0x50] sm:$0xff]
  %v325 = vld [vmem:[%s2 + $0x58] sm:$0xff]
  %v326 = vld [vmem:[%s2 + $0x60] sm:$0xff]
  %v327 = vld [vmem:[%s2 + $0x68] sm:$0xff]
  %v328 = vld [vmem:[%s2 + $0x70] sm:$0xff]
  %v329 = vld [vmem:[%s2 + $0x78] sm:$0xff]
  %v330 = vld [vmem:[%s2 + $0x80] sm:$0xff]
  %v331 = vld [vmem:[%s2 + $0x88] sm:$0xff]
  %v332 = vld [vmem:[%s2 + $0x90] sm:$0xff]
  %v333 = vld [vmem:[%s2 + $0x98] sm:$0xff]
  %v334 = vld [vmem:[%s2 + $0xa0] sm:$0xff]
  %v335 = vld [vmem:[%s2 + $0xa8] sm:$0xff]
  %v336 = vld [vmem:[%s2 + $0xb0] sm:$0xff]
  %v337 = vld [vmem:[%s2 + $0xb8] sm:$0xff]
  %v338 = vld [vmem:[%s2 + $0xc0] sm:$0xff]
  %v339 = vld [vmem:[%s2 + $0xc8] sm:$0xff]
  %v340 = vld [vmem:[%s2 + $0xd0] sm:$0xff]
  %v341 = vld [vmem:[%s2 + $0xd8] sm:$0xff]
  %v342 = vld [vmem:[%s2 + $0xe0] sm:$0xff]
  %v343 = vld [vmem:[%s2 + $0xe8] sm:$0xff]
  %v344 = vmul.f32 %v255, %v255
  %v345 = vmul.f32 %v257, %v257
  %v346 = vmul.f32 %v259, %v259
  %v347 = vmul.f32 %v261, %v261
  %v348 = vmul.f32 %v263, %v263
  %v349 = vmul.f32 %v265, %v265
  %v350 = vmul.f32 %v267, %v267
  %v351 = vmul.f32 %v269, %v269
  %v352 = vmul.f32 %v271, %v271
  %v353 = vmul.f32 %v273, %v273
  %v354 = vmul.f32 %v275, %v275
  %v355 = vmul.f32 %v277, %v277
  %v356 = vmul.f32 %v279, %v279
  %v357 = vmul.f32 %v281, %v281
  %v358 = vmul.f32 %v283, %v283
  %v359 = vmul.f32 %v285, %v285
  %v360 = vmul.f32 %v287, %v287
  %v361 = vmul.f32 %v289, %v289
  %v362 = vmul.f32 %v291, %v291
  %v363 = vmul.f32 %v293, %v293
  %v364 = vmul.f32 %v295, %v295
  %v365 = vmul.f32 %v297, %v297
  %v366 = vmul.f32 %v299, %v299
  %v367 = vmul.f32 %v301, %v301
  %v368 = vmul.f32 %v303, %v303
  %v369 = vmul.f32 %v305, %v305
  %v370 = vmul.f32 %v307, %v307
  %v371 = vmul.f32 %v309, %v309
  %v372 = vmul.f32 %v311, %v311
  %v373 = vmul.f32 %v313, %v313
  %v374 = vld [vmem:[%s6] sm:$0xff]
  %vm375 = vcmask 64512
  %v377 = vsel %vm375, %v344, 0
  %v380 = vsel %vm375, %v345, 0
  %v383 = vsel %vm375, %v346, 0
  %v386 = vsel %vm375, %v347, 0
  %v389 = vsel %vm375, %v348, 0
  %v392 = vsel %vm375, %v349, 0
  %v395 = vsel %vm375, %v350, 0
  %v398 = vsel %vm375, %v351, 0
  %v401 = vsel %vm375, %v352, 0
  %v404 = vsel %vm375, %v353, 0
  %v407 = vsel %vm375, %v354, 0
  %v410 = vsel %vm375, %v355, 0
  %v413 = vsel %vm375, %v356, 0
  %v416 = vsel %vm375, %v357, 0
  %v419 = vsel %vm375, %v358, 0
  %v422 = vsel %vm375, %v359, 0
  %v425 = vsel %vm375, %v360, 0
  %v428 = vsel %vm375, %v361, 0
  %v431 = vsel %vm375, %v362, 0
  %v434 = vsel %vm375, %v363, 0
  %v437 = vsel %vm375, %v364, 0
  %v440 = vsel %vm375, %v365, 0
  %v443 = vsel %vm375, %v366, 0
  %v446 = vsel %vm375, %v367, 0
  %v449 = vsel %vm375, %v368, 0
  %v452 = vsel %vm375, %v369, 0
  %v455 = vsel %vm375, %v370, 0
  %v458 = vsel %vm375, %v371, 0
  %v461 = vsel %vm375, %v372, 0
  %v464 = vsel %vm375, %v373, 0
  %466 = vmatprep.subr.mxu0 0.0
  %467 = vmatpush1.msra.mxu0 0.0
  %468 = vmatprep.subr.mxu0 0.0
  %469 = vmatpush1.msra.mxu0 0.0
  %470 = vmatprep.subr.mxu0 0.0
  %471 = vmatpush1.msra.mxu0 0.0
  %472 = vmatprep.subr.mxu0 0.0
  %473 = vmatpush1.msra.mxu0 0.0
  %474 = vmatprep.subr.mxu0 0.0
  %475 = vmatpush1.msra.mxu0 0.0
  %476 = vmatprep.subr.mxu0 0.0
  %477 = vmatpush1.msra.mxu0 0.0
  %478 = vmatprep.subr.mxu0 0.0
  %479 = vmatpush1.msra.mxu0 0.0
  %480 = vmatprep.subr.mxu0 0.0
  %481 = vmatpush1.msra.mxu0 0.0
  %482 = vmatprep.subr.mxu0 0.0
  %483 = vmatpush1.msra.mxu0 0.0
  %484 = vmatprep.subr.mxu0 0.0
  %485 = vmatpush1.msra.mxu0 0.0
  %486 = vmatprep.subr.mxu0 0.0
  %487 = vmatpush1.msra.mxu0 0.0
  %488 = vmatprep.subr.mxu0 0.0
  %489 = vmatpush1.msra.mxu0 0.0
  %490 = vmatprep.subr.mxu0 0.0
  %491 = vmatpush1.msra.mxu0 0.0
  %492 = vmatprep.subr.mxu0 0.0
  %493 = vmatpush1.msra.mxu0 0.0
  %494 = vmatprep.subr.mxu0 0.0
  %495 = vmatpush1.msra.mxu0 0.0
  %496 = vmatprep.subr.mxu0 0.0
  %497 = vmatpush1.msra.mxu0 %v374
  %498 = vmatprep.subr.mxu0 0.0
  %499 = vmatpush2.msra.mxu0 0.0
  %500 = vmatprep.subr.mxu0 0.0
  %501 = vmatpush2.msra.mxu0 0.0
  %502 = vmatprep.subr.mxu0 0.0
  %503 = vmatpush2.msra.mxu0 0.0
  %504 = vmatprep.subr.mxu0 0.0
  %505 = vmatpush2.msra.mxu0 0.0
  %506 = vmatprep.subr.mxu0 0.0
  %507 = vmatpush2.msra.mxu0 0.0
  %508 = vmatprep.subr.mxu0 0.0
  %509 = vmatpush2.msra.mxu0 0.0
  %510 = vmatprep.subr.mxu0 0.0
  %511 = vmatpush2.msra.mxu0 0.0
  %512 = vmatprep.subr.mxu0 0.0
  %513 = vmatpush2.msra.mxu0 0.0
  %514 = vmatprep.subr.mxu0 0.0
  %515 = vmatpush2.msra.mxu0 0.0
  %516 = vmatprep.subr.mxu0 0.0
  %517 = vmatpush2.msra.mxu0 0.0
  %518 = vmatprep.subr.mxu0 0.0
  %519 = vmatpush2.msra.mxu0 0.0
  %520 = vmatprep.subr.mxu0 0.0
  %521 = vmatpush2.msra.mxu0 0.0
  %522 = vmatprep.subr.mxu0 0.0
  %523 = vmatpush2.msra.mxu0 0.0
  %524 = vmatprep.subr.mxu0 0.0
  %525 = vmatpush2.msra.mxu0 0.0
  %526 = vmatprep.subr.mxu0 0.0
  %527 = vmatpush2.msra.mxu0 0.0
  %528 = vmatprep.subr.mxu0 0.0
  %529 = vmatpush2.msra.mxu0 0.0
  %530 = vmatprep.mubr.f32.mxu0 0.0
  %531 = vmatmul.mubr.f32.gmra.mxu0 %v377
  %v532 = vpop.f32.mrf.mxu0
  %v533 = vadd.f32 0.0, %v532
  %v534 = vpop.f32.mrf.mxu0
  %535 = vmatprep.mubr.f32.mxu0 0.0
  %536 = vmatmul.mubr.f32.gmra.mxu0 %v380
  %v537 = vpop.f32.mrf.mxu0
  %v538 = vadd.f32 0.0, %v537
  %v539 = vpop.f32.mrf.mxu0
  %540 = vmatprep.mubr.f32.mxu0 0.0
  %541 = vmatmul.mubr.f32.gmra.mxu0 %v383
  %v542 = vpop.f32.mrf.mxu0
  %v543 = vadd.f32 0.0, %v542
  %v544 = vpop.f32.mrf.mxu0
  %545 = vmatprep.mubr.f32.mxu0 0.0
  %546 = vmatmul.mubr.f32.gmra.mxu0 %v386
  %v547 = vpop.f32.mrf.mxu0
  %v548 = vadd.f32 0.0, %v547
  %v549 = vpop.f32.mrf.mxu0
  %550 = vmatprep.mubr.f32.mxu0 0.0
  %551 = vmatmul.mubr.f32.gmra.mxu0 %v389
  %v552 = vpop.f32.mrf.mxu0
  %v553 = vadd.f32 0.0, %v552
  %v554 = vpop.f32.mrf.mxu0
  %555 = vmatprep.mubr.f32.mxu0 0.0
  %556 = vmatmul.mubr.f32.gmra.mxu0 %v392
  %v557 = vpop.f32.mrf.mxu0
  %v558 = vadd.f32 0.0, %v557
  %v559 = vpop.f32.mrf.mxu0
  %560 = vmatprep.mubr.f32.mxu0 0.0
  %561 = vmatmul.mubr.f32.gmra.mxu0 %v395
  %v562 = vpop.f32.mrf.mxu0
  %v563 = vadd.f32 0.0, %v562
  %v564 = vpop.f32.mrf.mxu0
  %565 = vmatprep.mubr.f32.mxu0 0.0
  %566 = vmatmul.mubr.f32.gmra.mxu0 %v398
  %v567 = vpop.f32.mrf.mxu0
  %v568 = vadd.f32 0.0, %v567
  %v569 = vpop.f32.mrf.mxu0
  %570 = vmatprep.mubr.f32.mxu0 0.0
  %571 = vmatmul.mubr.f32.gmra.mxu0 %v401
  %v572 = vpop.f32.mrf.mxu0
  %v573 = vadd.f32 0.0, %v572
  %v574 = vpop.f32.mrf.mxu0
  %575 = vmatprep.mubr.f32.mxu0 0.0
  %576 = vmatmul.mubr.f32.gmra.mxu0 %v404
  %v577 = vpop.f32.mrf.mxu0
  %v578 = vadd.f32 0.0, %v577
  %v579 = vpop.f32.mrf.mxu0
  %580 = vmatprep.mubr.f32.mxu0 0.0
  %581 = vmatmul.mubr.f32.gmra.mxu0 %v407
  %v582 = vpop.f32.mrf.mxu0
  %v583 = vadd.f32 0.0, %v582
  %v584 = vpop.f32.mrf.mxu0
  %585 = vmatprep.mubr.f32.mxu0 0.0
  %586 = vmatmul.mubr.f32.gmra.mxu0 %v410
  %v587 = vpop.f32.mrf.mxu0
  %v588 = vadd.f32 0.0, %v587
  %v589 = vpop.f32.mrf.mxu0
  %590 = vmatprep.mubr.f32.mxu0 0.0
  %591 = vmatmul.mubr.f32.gmra.mxu0 %v413
  %v592 = vpop.f32.mrf.mxu0
  %v593 = vadd.f32 0.0, %v592
  %v594 = vpop.f32.mrf.mxu0
  %595 = vmatprep.mubr.f32.mxu0 0.0
  %596 = vmatmul.mubr.f32.gmra.mxu0 %v416
  %v597 = vpop.f32.mrf.mxu0
  %v598 = vadd.f32 0.0, %v597
  %v599 = vpop.f32.mrf.mxu0
  %600 = vmatprep.mubr.f32.mxu0 0.0
  %601 = vmatmul.mubr.f32.gmra.mxu0 %v419
  %v602 = vpop.f32.mrf.mxu0
  %v603 = vadd.f32 0.0, %v602
  %v604 = vpop.f32.mrf.mxu0
  %605 = vmatprep.mubr.f32.mxu0 0.0
  %606 = vmatmul.mubr.f32.gmra.mxu0 %v422
  %v607 = vpop.f32.mrf.mxu0
  %v608 = vadd.f32 0.0, %v607
  %v609 = vpop.f32.mrf.mxu0
  %610 = vmatprep.mubr.f32.mxu0 0.0
  %611 = vmatmul.mubr.f32.gmra.mxu0 %v425
  %v612 = vpop.f32.mrf.mxu0
  %v613 = vadd.f32 0.0, %v612
  %v614 = vpop.f32.mrf.mxu0
  %615 = vmatprep.mubr.f32.mxu0 0.0
  %616 = vmatmul.mubr.f32.gmra.mxu0 %v428
  %v617 = vpop.f32.mrf.mxu0
  %v618 = vadd.f32 0.0, %v617
  %v619 = vpop.f32.mrf.mxu0
  %620 = vmatprep.mubr.f32.mxu0 0.0
  %621 = vmatmul.mubr.f32.gmra.mxu0 %v431
  %v622 = vpop.f32.mrf.mxu0
  %v623 = vadd.f32 0.0, %v622
  %v624 = vpop.f32.mrf.mxu0
  %625 = vmatprep.mubr.f32.mxu0 0.0
  %626 = vmatmul.mubr.f32.gmra.mxu0 %v434
  %v627 = vpop.f32.mrf.mxu0
  %v628 = vadd.f32 0.0, %v627
  %v629 = vpop.f32.mrf.mxu0
  %630 = vmatprep.mubr.f32.mxu0 0.0
  %631 = vmatmul.mubr.f32.gmra.mxu0 %v437
  %v632 = vpop.f32.mrf.mxu0
  %v633 = vadd.f32 0.0, %v632
  %v634 = vpop.f32.mrf.mxu0
  %635 = vmatprep.mubr.f32.mxu0 0.0
  %636 = vmatmul.mubr.f32.gmra.mxu0 %v440
  %v637 = vpop.f32.mrf.mxu0
  %v638 = vadd.f32 0.0, %v637
  %v639 = vpop.f32.mrf.mxu0
  %640 = vmatprep.mubr.f32.mxu0 0.0
  %641 = vmatmul.mubr.f32.gmra.mxu0 %v443
  %v642 = vpop.f32.mrf.mxu0
  %v643 = vadd.f32 0.0, %v642
  %v644 = vpop.f32.mrf.mxu0
  %645 = vmatprep.mubr.f32.mxu0 0.0
  %646 = vmatmul.mubr.f32.gmra.mxu0 %v446
  %v647 = vpop.f32.mrf.mxu0
  %v648 = vadd.f32 0.0, %v647
  %v649 = vpop.f32.mrf.mxu0
  %650 = vmatprep.mubr.f32.mxu0 0.0
  %651 = vmatmul.mubr.f32.gmra.mxu0 %v449
  %v652 = vpop.f32.mrf.mxu0
  %v653 = vadd.f32 0.0, %v652
  %v654 = vpop.f32.mrf.mxu0
  %655 = vmatprep.mubr.f32.mxu0 0.0
  %656 = vmatmul.mubr.f32.gmra.mxu0 %v452
  %v657 = vpop.f32.mrf.mxu0
  %v658 = vadd.f32 0.0, %v657
  %v659 = vpop.f32.mrf.mxu0
  %660 = vmatprep.mubr.f32.mxu0 0.0
  %661 = vmatmul.mubr.f32.gmra.mxu0 %v455
  %v662 = vpop.f32.mrf.mxu0
  %v663 = vadd.f32 0.0, %v662
  %v664 = vpop.f32.mrf.mxu0
  %665 = vmatprep.mubr.f32.mxu0 0.0
  %666 = vmatmul.mubr.f32.gmra.mxu0 %v458
  %v667 = vpop.f32.mrf.mxu0
  %v668 = vadd.f32 0.0, %v667
  %v669 = vpop.f32.mrf.mxu0
  %670 = vmatprep.mubr.f32.mxu0 0.0
  %671 = vmatmul.mubr.f32.gmra.mxu0 %v461
  %v672 = vpop.f32.mrf.mxu0
  %v673 = vadd.f32 0.0, %v672
  %v674 = vpop.f32.mrf.mxu0
  %675 = vmatprep.mubr.f32.mxu0 0.0
  %676 = vmatmul.mubr.f32.gmra.mxu0 %v464
  %v677 = vpop.f32.mrf.mxu0
  %v678 = vadd.f32 0.0, %v677
  %v679 = vpop.f32.mrf.mxu0
  %680 = vdwg.mxu0
  %v681 = vmul.f32 %v255, %v314
  %v682 = vmul.f32 %v257, %v315
  %v683 = vmul.f32 %v259, %v316
  %v684 = vmul.f32 %v261, %v317
  %v685 = vmul.f32 %v263, %v318
  %v686 = vmul.f32 %v265, %v319
  %v687 = vmul.f32 %v267, %v320
  %v688 = vmul.f32 %v269, %v321
  %v689 = vmul.f32 %v271, %v322
  %v690 = vmul.f32 %v273, %v323
  %v691 = vmul.f32 %v275, %v324
  %v692 = vmul.f32 %v277, %v325
  %v693 = vmul.f32 %v279, %v326
  %v694 = vmul.f32 %v281, %v327
  %v695 = vmul.f32 %v283, %v328
  %v696 = vmul.f32 %v285, %v329
  %v697 = vmul.f32 %v287, %v330
  %v698 = vmul.f32 %v289, %v331
  %v699 = vmul.f32 %v291, %v332
  %v700 = vmul.f32 %v293, %v333
  %v701 = vmul.f32 %v295, %v334
  %v702 = vmul.f32 %v297, %v335
  %v703 = vmul.f32 %v299, %v336
  %v704 = vmul.f32 %v301, %v337
  %v705 = vmul.f32 %v303, %v338
  %v706 = vmul.f32 %v305, %v339
  %v707 = vmul.f32 %v307, %v340
  %v708 = vmul.f32 %v309, %v341
  %v709 = vmul.f32 %v311, %v342
  %v710 = vmul.f32 %v313, %v343
  %v711 = vld [vmem:[%s5] sm:$0xff]
  %v713 = vsel %vm375, %v681, 0
  %v716 = vsel %vm375, %v682, 0
  %v719 = vsel %vm375, %v683, 0
  %v722 = vsel %vm375, %v684, 0
  %v725 = vsel %vm375, %v685, 0
  %v728 = vsel %vm375, %v686, 0
  %v731 = vsel %vm375, %v687, 0
  %v734 = vsel %vm375, %v688, 0
  %v737 = vsel %vm375, %v689, 0
  %v740 = vsel %vm375, %v690, 0
  %v743 = vsel %vm375, %v691, 0
  %v746 = vsel %vm375, %v692, 0
  %v749 = vsel %vm375, %v693, 0
  %v752 = vsel %vm375, %v694, 0
  %v755 = vsel %vm375, %v695, 0
  %v758 = vsel %vm375, %v696, 0
  %v761 = vsel %vm375, %v697, 0
  %v764 = vsel %vm375, %v698, 0
  %v767 = vsel %vm375, %v699, 0
  %v770 = vsel %vm375, %v700, 0
  %v773 = vsel %vm375, %v701, 0
  %v776 = vsel %vm375, %v702, 0
  %v779 = vsel %vm375, %v703, 0
  %v782 = vsel %vm375, %v704, 0
  %v785 = vsel %vm375, %v705, 0
  %v788 = vsel %vm375, %v706, 0
  %v791 = vsel %vm375, %v707, 0
  %v794 = vsel %vm375, %v708, 0
  %v797 = vsel %vm375, %v709, 0
  %v800 = vsel %vm375, %v710, 0
  %802 = vmatprep.subr.mxu0 0.0
  %803 = vmatpush1.msra.mxu0 0.0
  %804 = vmatprep.subr.mxu0 0.0
  %805 = vmatpush1.msra.mxu0 0.0
  %806 = vmatprep.subr.mxu0 0.0
  %807 = vmatpush1.msra.mxu0 0.0
  %808 = vmatprep.subr.mxu0 0.0
  %809 = vmatpush1.msra.mxu0 0.0
  %810 = vmatprep.subr.mxu0 0.0
  %811 = vmatpush1.msra.mxu0 0.0
  %812 = vmatprep.subr.mxu0 0.0
  %813 = vmatpush1.msra.mxu0 0.0
  %814 = vmatprep.subr.mxu0 0.0
  %815 = vmatpush1.msra.mxu0 0.0
  %816 = vmatprep.subr.mxu0 0.0
  %817 = vmatpush1.msra.mxu0 0.0
  %818 = vmatprep.subr.mxu0 0.0
  %819 = vmatpush1.msra.mxu0 0.0
  %820 = vmatprep.subr.mxu0 0.0
  %821 = vmatpush1.msra.mxu0 0.0
  %822 = vmatprep.subr.mxu0 0.0
  %823 = vmatpush1.msra.mxu0 0.0
  %824 = vmatprep.subr.mxu0 0.0
  %825 = vmatpush1.msra.mxu0 0.0
  %826 = vmatprep.subr.mxu0 0.0
  %827 = vmatpush1.msra.mxu0 0.0
  %828 = vmatprep.subr.mxu0 0.0
  %829 = vmatpush1.msra.mxu0 0.0
  %830 = vmatprep.subr.mxu0 0.0
  %831 = vmatpush1.msra.mxu0 0.0
  %832 = vmatprep.subr.mxu0 0.0
  %833 = vmatpush1.msra.mxu0 %v711
  %834 = vmatprep.subr.mxu0 0.0
  %835 = vmatpush2.msra.mxu0 0.0
  %836 = vmatprep.subr.mxu0 0.0
  %837 = vmatpush2.msra.mxu0 0.0
  %838 = vmatprep.subr.mxu0 0.0
  %839 = vmatpush2.msra.mxu0 0.0
  %840 = vmatprep.subr.mxu0 0.0
  %841 = vmatpush2.msra.mxu0 0.0
  %842 = vmatprep.subr.mxu0 0.0
  %843 = vmatpush2.msra.mxu0 0.0
  %844 = vmatprep.subr.mxu0 0.0
  %845 = vmatpush2.msra.mxu0 0.0
  %846 = vmatprep.subr.mxu0 0.0
  %847 = vmatpush2.msra.mxu0 0.0
  %848 = vmatprep.subr.mxu0 0.0
  %849 = vmatpush2.msra.mxu0 0.0
  %850 = vmatprep.subr.mxu0 0.0
  %851 = vmatpush2.msra.mxu0 0.0
  %852 = vmatprep.subr.mxu0 0.0
  %853 = vmatpush2.msra.mxu0 0.0
  %854 = vmatprep.subr.mxu0 0.0
  %855 = vmatpush2.msra.mxu0 0.0
  %856 = vmatprep.subr.mxu0 0.0
  %857 = vmatpush2.msra.mxu0 0.0
  %858 = vmatprep.subr.mxu0 0.0
  %859 = vmatpush2.msra.mxu0 0.0
  %860 = vmatprep.subr.mxu0 0.0
  %861 = vmatpush2.msra.mxu0 0.0
  %862 = vmatprep.subr.mxu0 0.0
  %863 = vmatpush2.msra.mxu0 0.0
  %864 = vmatprep.subr.mxu0 0.0
  %865 = vmatpush2.msra.mxu0 0.0
  %866 = vmatprep.mubr.f32.mxu0 0.0
  %867 = vmatmul.mubr.f32.gmra.mxu0 %v713
  %v868 = vpop.f32.mrf.mxu0
  %v869 = vadd.f32 0.0, %v868
  %v870 = vpop.f32.mrf.mxu0
  %871 = vmatprep.mubr.f32.mxu0 0.0
  %872 = vmatmul.mubr.f32.gmra.mxu0 %v716
  %v873 = vpop.f32.mrf.mxu0
  %v874 = vadd.f32 0.0, %v873
  %v875 = vpop.f32.mrf.mxu0
  %876 = vmatprep.mubr.f32.mxu0 0.0
  %877 = vmatmul.mubr.f32.gmra.mxu0 %v719
  %v878 = vpop.f32.mrf.mxu0
  %v879 = vadd.f32 0.0, %v878
  %v880 = vpop.f32.mrf.mxu0
  %881 = vmatprep.mubr.f32.mxu0 0.0
  %882 = vmatmul.mubr.f32.gmra.mxu0 %v722
  %v883 = vpop.f32.mrf.mxu0
  %v884 = vadd.f32 0.0, %v883
  %v885 = vpop.f32.mrf.mxu0
  %886 = vmatprep.mubr.f32.mxu0 0.0
  %887 = vmatmul.mubr.f32.gmra.mxu0 %v725
  %v888 = vpop.f32.mrf.mxu0
  %v889 = vadd.f32 0.0, %v888
  %v890 = vpop.f32.mrf.mxu0
  %891 = vmatprep.mubr.f32.mxu0 0.0
  %892 = vmatmul.mubr.f32.gmra.mxu0 %v728
  %v893 = vpop.f32.mrf.mxu0
  %v894 = vadd.f32 0.0, %v893
  %v895 = vpop.f32.mrf.mxu0
  %896 = vmatprep.mubr.f32.mxu0 0.0
  %897 = vmatmul.mubr.f32.gmra.mxu0 %v731
  %v898 = vpop.f32.mrf.mxu0
  %v899 = vadd.f32 0.0, %v898
  %v900 = vpop.f32.mrf.mxu0
  %901 = vmatprep.mubr.f32.mxu0 0.0
  %902 = vmatmul.mubr.f32.gmra.mxu0 %v734
  %v903 = vpop.f32.mrf.mxu0
  %v904 = vadd.f32 0.0, %v903
  %v905 = vpop.f32.mrf.mxu0
  %906 = vmatprep.mubr.f32.mxu0 0.0
  %907 = vmatmul.mubr.f32.gmra.mxu0 %v737
  %v908 = vpop.f32.mrf.mxu0
  %v909 = vadd.f32 0.0, %v908
  %v910 = vpop.f32.mrf.mxu0
  %911 = vmatprep.mubr.f32.mxu0 0.0
  %912 = vmatmul.mubr.f32.gmra.mxu0 %v740
  %v913 = vpop.f32.mrf.mxu0
  %v914 = vadd.f32 0.0, %v913
  %v915 = vpop.f32.mrf.mxu0
  %916 = vmatprep.mubr.f32.mxu0 0.0
  %917 = vmatmul.mubr.f32.gmra.mxu0 %v743
  %v918 = vpop.f32.mrf.mxu0
  %v919 = vadd.f32 0.0, %v918
  %v920 = vpop.f32.mrf.mxu0
  %921 = vmatprep.mubr.f32.mxu0 0.0
  %922 = vmatmul.mubr.f32.gmra.mxu0 %v746
  %v923 = vpop.f32.mrf.mxu0
  %v924 = vadd.f32 0.0, %v923
  %v925 = vpop.f32.mrf.mxu0
  %926 = vmatprep.mubr.f32.mxu0 0.0
  %927 = vmatmul.mubr.f32.gmra.mxu0 %v749
  %v928 = vpop.f32.mrf.mxu0
  %v929 = vadd.f32 0.0, %v928
  %v930 = vpop.f32.mrf.mxu0
  %931 = vmatprep.mubr.f32.mxu0 0.0
  %932 = vmatmul.mubr.f32.gmra.mxu0 %v752
  %v933 = vpop.f32.mrf.mxu0
  %v934 = vadd.f32 0.0, %v933
  %v935 = vpop.f32.mrf.mxu0
  %936 = vmatprep.mubr.f32.mxu0 0.0
  %937 = vmatmul.mubr.f32.gmra.mxu0 %v755
  %v938 = vpop.f32.mrf.mxu0
  %v939 = vadd.f32 0.0, %v938
  %v940 = vpop.f32.mrf.mxu0
  %941 = vmatprep.mubr.f32.mxu0 0.0
  %942 = vmatmul.mubr.f32.gmra.mxu0 %v758
  %v943 = vpop.f32.mrf.mxu0
  %v944 = vadd.f32 0.0, %v943
  %v945 = vpop.f32.mrf.mxu0
  %946 = vmatprep.mubr.f32.mxu0 0.0
  %947 = vmatmul.mubr.f32.gmra.mxu0 %v761
  %v948 = vpop.f32.mrf.mxu0
  %v949 = vadd.f32 0.0, %v948
  %v950 = vpop.f32.mrf.mxu0
  %951 = vmatprep.mubr.f32.mxu0 0.0
  %952 = vmatmul.mubr.f32.gmra.mxu0 %v764
  %v953 = vpop.f32.mrf.mxu0
  %v954 = vadd.f32 0.0, %v953
  %v955 = vpop.f32.mrf.mxu0
  %956 = vmatprep.mubr.f32.mxu0 0.0
  %957 = vmatmul.mubr.f32.gmra.mxu0 %v767
  %v958 = vpop.f32.mrf.mxu0
  %v959 = vadd.f32 0.0, %v958
  %v960 = vpop.f32.mrf.mxu0
  %961 = vmatprep.mubr.f32.mxu0 0.0
  %962 = vmatmul.mubr.f32.gmra.mxu0 %v770
  %v963 = vpop.f32.mrf.mxu0
  %v964 = vadd.f32 0.0, %v963
  %v965 = vpop.f32.mrf.mxu0
  %966 = vmatprep.mubr.f32.mxu0 0.0
  %967 = vmatmul.mubr.f32.gmra.mxu0 %v773
  %v968 = vpop.f32.mrf.mxu0
  %v969 = vadd.f32 0.0, %v968
  %v970 = vpop.f32.mrf.mxu0
  %971 = vmatprep.mubr.f32.mxu0 0.0
  %972 = vmatmul.mubr.f32.gmra.mxu0 %v776
  %v973 = vpop.f32.mrf.mxu0
  %v974 = vadd.f32 0.0, %v973
  %v975 = vpop.f32.mrf.mxu0
  %976 = vmatprep.mubr.f32.mxu0 0.0
  %977 = vmatmul.mubr.f32.gmra.mxu0 %v779
  %v978 = vpop.f32.mrf.mxu0
  %v979 = vadd.f32 0.0, %v978
  %v980 = vpop.f32.mrf.mxu0
  %981 = vmatprep.mubr.f32.mxu0 0.0
  %982 = vmatmul.mubr.f32.gmra.mxu0 %v782
  %v983 = vpop.f32.mrf.mxu0
  %v984 = vadd.f32 0.0, %v983
  %v985 = vpop.f32.mrf.mxu0
  %986 = vmatprep.mubr.f32.mxu0 0.0
  %987 = vmatmul.mubr.f32.gmra.mxu0 %v785
  %v988 = vpop.f32.mrf.mxu0
  %v989 = vadd.f32 0.0, %v988
  %v990 = vpop.f32.mrf.mxu0
  %991 = vmatprep.mubr.f32.mxu0 0.0
  %992 = vmatmul.mubr.f32.gmra.mxu0 %v788
  %v993 = vpop.f32.mrf.mxu0
  %v994 = vadd.f32 0.0, %v993
  %v995 = vpop.f32.mrf.mxu0
  %996 = vmatprep.mubr.f32.mxu0 0.0
  %997 = vmatmul.mubr.f32.gmra.mxu0 %v791
  %v998 = vpop.f32.mrf.mxu0
  %v999 = vadd.f32 0.0, %v998
  %v1000 = vpop.f32.mrf.mxu0
  %1001 = vmatprep.mubr.f32.mxu0 0.0
  %1002 = vmatmul.mubr.f32.gmra.mxu0 %v794
  %v1003 = vpop.f32.mrf.mxu0
  %v1004 = vadd.f32 0.0, %v1003
  %v1005 = vpop.f32.mrf.mxu0
  %1006 = vmatprep.mubr.f32.mxu0 0.0
  %1007 = vmatmul.mubr.f32.gmra.mxu0 %v797
  %v1008 = vpop.f32.mrf.mxu0
  %v1009 = vadd.f32 0.0, %v1008
  %v1010 = vpop.f32.mrf.mxu0
  %1011 = vmatprep.mubr.f32.mxu0 0.0
  %1012 = vmatmul.mubr.f32.gmra.mxu0 %v800
  %v1013 = vpop.f32.mrf.mxu0
  %v1014 = vadd.f32 0.0, %v1013
  %v1015 = vpop.f32.mrf.mxu0
  %1016 = vdwg.mxu0
  %v1017 = vmul.f32 %v314, %v314
  %v1018 = vmul.f32 %v315, %v315
  %v1019 = vmul.f32 %v316, %v316
  %v1020 = vmul.f32 %v317, %v317
  %v1021 = vmul.f32 %v318, %v318
  %v1022 = vmul.f32 %v319, %v319
  %v1023 = vmul.f32 %v320, %v320
  %v1024 = vmul.f32 %v321, %v321
  %v1025 = vmul.f32 %v322, %v322
  %v1026 = vmul.f32 %v323, %v323
  %v1027 = vmul.f32 %v324, %v324
  %v1028 = vmul.f32 %v325, %v325
  %v1029 = vmul.f32 %v326, %v326
  %v1030 = vmul.f32 %v327, %v327
  %v1031 = vmul.f32 %v328, %v328
  %v1032 = vmul.f32 %v329, %v329
  %v1033 = vmul.f32 %v330, %v330
  %v1034 = vmul.f32 %v331, %v331
  %v1035 = vmul.f32 %v332, %v332
  %v1036 = vmul.f32 %v333, %v333
  %v1037 = vmul.f32 %v334, %v334
  %v1038 = vmul.f32 %v335, %v335
  %v1039 = vmul.f32 %v336, %v336
  %v1040 = vmul.f32 %v337, %v337
  %v1041 = vmul.f32 %v338, %v338
  %v1042 = vmul.f32 %v339, %v339
  %v1043 = vmul.f32 %v340, %v340
  %v1044 = vmul.f32 %v341, %v341
  %v1045 = vmul.f32 %v342, %v342
  %v1046 = vmul.f32 %v343, %v343
  %v1047 = vsel %vm375, %v1017, 0.0
  %1048 = vadd.xlane.f32.xlu0 %v1047
  %v1049 = vpop.xlane.xlu0 %1048
  %v1050 = vsel %vm375, %v1018, 0.0
  %1051 = vadd.xlane.f32.xlu0 %v1050
  %v1052 = vpop.xlane.xlu0 %1051
  %v1053 = vsel %vm375, %v1019, 0.0
  %1054 = vadd.xlane.f32.xlu0 %v1053
  %v1055 = vpop.xlane.xlu0 %1054
  %v1056 = vsel %vm375, %v1020, 0.0
  %1057 = vadd.xlane.f32.xlu0 %v1056
  %v1058 = vpop.xlane.xlu0 %1057
  %v1059 = vsel %vm375, %v1021, 0.0
  %1060 = vadd.xlane.f32.xlu0 %v1059
  %v1061 = vpop.xlane.xlu0 %1060
  %v1062 = vsel %vm375, %v1022, 0.0
  %1063 = vadd.xlane.f32.xlu0 %v1062
  %v1064 = vpop.xlane.xlu0 %1063
  %v1065 = vsel %vm375, %v1023, 0.0
  %1066 = vadd.xlane.f32.xlu0 %v1065
  %v1067 = vpop.xlane.xlu0 %1066
  %v1068 = vsel %vm375, %v1024, 0.0
  %1069 = vadd.xlane.f32.xlu0 %v1068
  %v1070 = vpop.xlane.xlu0 %1069
  %v1071 = vsel %vm375, %v1025, 0.0
  %1072 = vadd.xlane.f32.xlu0 %v1071
  %v1073 = vpop.xlane.xlu0 %1072
  %v1074 = vsel %vm375, %v1026, 0.0
  %1075 = vadd.xlane.f32.xlu0 %v1074
  %v1076 = vpop.xlane.xlu0 %1075
  %v1077 = vsel %vm375, %v1027, 0.0
  %1078 = vadd.xlane.f32.xlu0 %v1077
  %v1079 = vpop.xlane.xlu0 %1078
  %v1080 = vsel %vm375, %v1028, 0.0
  %1081 = vadd.xlane.f32.xlu0 %v1080
  %v1082 = vpop.xlane.xlu0 %1081
  %v1083 = vsel %vm375, %v1029, 0.0
  %1084 = vadd.xlane.f32.xlu0 %v1083
  %v1085 = vpop.xlane.xlu0 %1084
  %v1086 = vsel %vm375, %v1030, 0.0
  %1087 = vadd.xlane.f32.xlu0 %v1086
  %v1088 = vpop.xlane.xlu0 %1087
  %v1089 = vsel %vm375, %v1031, 0.0
  %1090 = vadd.xlane.f32.xlu0 %v1089
  %v1091 = vpop.xlane.xlu0 %1090
  %v1092 = vsel %vm375, %v1032, 0.0
  %1093 = vadd.xlane.f32.xlu0 %v1092
  %v1094 = vpop.xlane.xlu0 %1093
  %v1095 = vsel %vm375, %v1033, 0.0
  %1096 = vadd.xlane.f32.xlu0 %v1095
  %v1097 = vpop.xlane.xlu0 %1096
  %v1098 = vsel %vm375, %v1034, 0.0
  %1099 = vadd.xlane.f32.xlu0 %v1098
  %v1100 = vpop.xlane.xlu0 %1099
  %v1101 = vsel %vm375, %v1035, 0.0
  %1102 = vadd.xlane.f32.xlu0 %v1101
  %v1103 = vpop.xlane.xlu0 %1102
  %v1104 = vsel %vm375, %v1036, 0.0
  %1105 = vadd.xlane.f32.xlu0 %v1104
  %v1106 = vpop.xlane.xlu0 %1105
  %v1107 = vsel %vm375, %v1037, 0.0
  %1108 = vadd.xlane.f32.xlu0 %v1107
  %v1109 = vpop.xlane.xlu0 %1108
  %v1110 = vsel %vm375, %v1038, 0.0
  %1111 = vadd.xlane.f32.xlu0 %v1110
  %v1112 = vpop.xlane.xlu0 %1111
  %v1113 = vsel %vm375, %v1039, 0.0
  %1114 = vadd.xlane.f32.xlu0 %v1113
  %v1115 = vpop.xlane.xlu0 %1114
  %v1116 = vsel %vm375, %v1040, 0.0
  %1117 = vadd.xlane.f32.xlu0 %v1116
  %v1118 = vpop.xlane.xlu0 %1117
  %v1119 = vsel %vm375, %v1041, 0.0
  %1120 = vadd.xlane.f32.xlu0 %v1119
  %v1121 = vpop.xlane.xlu0 %1120
  %v1122 = vsel %vm375, %v1042, 0.0
  %1123 = vadd.xlane.f32.xlu0 %v1122
  %v1124 = vpop.xlane.xlu0 %1123
  %v1125 = vsel %vm375, %v1043, 0.0
  %1126 = vadd.xlane.f32.xlu0 %v1125
  %v1127 = vpop.xlane.xlu0 %1126
  %v1128 = vsel %vm375, %v1044, 0.0
  %1129 = vadd.xlane.f32.xlu0 %v1128
  %v1130 = vpop.xlane.xlu0 %1129
  %v1131 = vsel %vm375, %v1045, 0.0
  %1132 = vadd.xlane.f32.xlu0 %v1131
  %v1133 = vpop.xlane.xlu0 %1132
  %v1134 = vsel %vm375, %v1046, 0.0
  %1135 = vadd.xlane.f32.xlu0 %v1134
  %v1136 = vpop.xlane.xlu0 %1135
  %vm1137 = vcmp.gt.f32.partialorder %v533, 0.0
  %vm1138 = vcmp.gt.f32.partialorder %v538, 0.0
  %vm1139 = vcmp.gt.f32.partialorder %v543, 0.0
  %vm1140 = vcmp.gt.f32.partialorder %v548, 0.0
  %vm1141 = vcmp.gt.f32.partialorder %v553, 0.0
  %vm1142 = vcmp.gt.f32.partialorder %v558, 0.0
  %vm1143 = vcmp.gt.f32.partialorder %v563, 0.0
  %vm1144 = vcmp.gt.f32.partialorder %v568, 0.0
  %vm1145 = vcmp.gt.f32.partialorder %v573, 0.0
  %vm1146 = vcmp.gt.f32.partialorder %v578, 0.0
  %vm1147 = vcmp.gt.f32.partialorder %v583, 0.0
  %vm1148 = vcmp.gt.f32.partialorder %v588, 0.0
  %vm1149 = vcmp.gt.f32.partialorder %v593, 0.0
  %vm1150 = vcmp.gt.f32.partialorder %v598, 0.0
  %vm1151 = vcmp.gt.f32.partialorder %v603, 0.0
  %vm1152 = vcmp.gt.f32.partialorder %v608, 0.0
  %vm1153 = vcmp.gt.f32.partialorder %v613, 0.0
  %vm1154 = vcmp.gt.f32.partialorder %v618, 0.0
  %vm1155 = vcmp.gt.f32.partialorder %v623, 0.0
  %vm1156 = vcmp.gt.f32.partialorder %v628, 0.0
  %vm1157 = vcmp.gt.f32.partialorder %v633, 0.0
  %vm1158 = vcmp.gt.f32.partialorder %v638, 0.0
  %vm1159 = vcmp.gt.f32.partialorder %v643, 0.0
  %vm1160 = vcmp.gt.f32.partialorder %v648, 0.0
  %vm1161 = vcmp.gt.f32.partialorder %v653, 0.0
  %vm1162 = vcmp.gt.f32.partialorder %v658, 0.0
  %vm1163 = vcmp.gt.f32.partialorder %v663, 0.0
  %vm1164 = vcmp.gt.f32.partialorder %v668, 0.0
  %vm1165 = vcmp.gt.f32.partialorder %v673, 0.0
  %vm1166 = vcmp.gt.f32.partialorder %v678, 0.0
  %v1167 = vsel %vm1137, %v533, 1.0
  %v1168 = vsel %vm1138, %v538, 1.0
  %v1169 = vsel %vm1139, %v543, 1.0
  %v1170 = vsel %vm1140, %v548, 1.0
  %v1171 = vsel %vm1141, %v553, 1.0
  %v1172 = vsel %vm1142, %v558, 1.0
  %v1173 = vsel %vm1143, %v563, 1.0
  %v1174 = vsel %vm1144, %v568, 1.0
  %v1175 = vsel %vm1145, %v573, 1.0
  %v1176 = vsel %vm1146, %v578, 1.0
  %v1177 = vsel %vm1147, %v583, 1.0
  %v1178 = vsel %vm1148, %v588, 1.0
  %v1179 = vsel %vm1149, %v593, 1.0
  %v1180 = vsel %vm1150, %v598, 1.0
  %v1181 = vsel %vm1151, %v603, 1.0
  %v1182 = vsel %vm1152, %v608, 1.0
  %v1183 = vsel %vm1153, %v613, 1.0
  %v1184 = vsel %vm1154, %v618, 1.0
  %v1185 = vsel %vm1155, %v623, 1.0
  %v1186 = vsel %vm1156, %v628, 1.0
  %v1187 = vsel %vm1157, %v633, 1.0
  %v1188 = vsel %vm1158, %v638, 1.0
  %v1189 = vsel %vm1159, %v643, 1.0
  %v1190 = vsel %vm1160, %v648, 1.0
  %v1191 = vsel %vm1161, %v653, 1.0
  %v1192 = vsel %vm1162, %v658, 1.0
  %v1193 = vsel %vm1163, %v663, 1.0
  %v1194 = vsel %vm1164, %v668, 1.0
  %v1195 = vsel %vm1165, %v673, 1.0
  %v1196 = vsel %vm1166, %v678, 1.0
  %v1197 = vrsqrt.pop %v1167
  %v1198 = vrsqrt.pop %v1168
  %v1199 = vrsqrt.pop %v1169
  %v1200 = vrsqrt.pop %v1170
  %v1201 = vrsqrt.pop %v1171
  %v1202 = vrsqrt.pop %v1172
  %v1203 = vrsqrt.pop %v1173
  %v1204 = vrsqrt.pop %v1174
  %v1205 = vrsqrt.pop %v1175
  %v1206 = vrsqrt.pop %v1176
  %v1207 = vrsqrt.pop %v1177
  %v1208 = vrsqrt.pop %v1178
  %v1209 = vrsqrt.pop %v1179
  %v1210 = vrsqrt.pop %v1180
  %v1211 = vrsqrt.pop %v1181
  %v1212 = vrsqrt.pop %v1182
  %v1213 = vrsqrt.pop %v1183
  %v1214 = vrsqrt.pop %v1184
  %v1215 = vrsqrt.pop %v1185
  %v1216 = vrsqrt.pop %v1186
  %v1217 = vrsqrt.pop %v1187
  %v1218 = vrsqrt.pop %v1188
  %v1219 = vrsqrt.pop %v1189
  %v1220 = vrsqrt.pop %v1190
  %v1221 = vrsqrt.pop %v1191
  %v1222 = vrsqrt.pop %v1192
  %v1223 = vrsqrt.pop %v1193
  %v1224 = vrsqrt.pop %v1194
  %v1225 = vrsqrt.pop %v1195
  %v1226 = vrsqrt.pop %v1196
  %v1227 = vmul.f32 %v869, 2.0
  %v1228 = vmul.f32 %v874, 2.0
  %v1229 = vmul.f32 %v879, 2.0
  %v1230 = vmul.f32 %v884, 2.0
  %v1231 = vmul.f32 %v889, 2.0
  %v1232 = vmul.f32 %v894, 2.0
  %v1233 = vmul.f32 %v899, 2.0
  %v1234 = vmul.f32 %v904, 2.0
  %v1235 = vmul.f32 %v909, 2.0
  %v1236 = vmul.f32 %v914, 2.0
  %v1237 = vmul.f32 %v919, 2.0
  %v1238 = vmul.f32 %v924, 2.0
  %v1239 = vmul.f32 %v929, 2.0
  %v1240 = vmul.f32 %v934, 2.0
  %v1241 = vmul.f32 %v939, 2.0
  %v1242 = vmul.f32 %v944, 2.0
  %v1243 = vmul.f32 %v949, 2.0
  %v1244 = vmul.f32 %v954, 2.0
  %v1245 = vmul.f32 %v959, 2.0
  %v1246 = vmul.f32 %v964, 2.0
  %v1247 = vmul.f32 %v969, 2.0
  %v1248 = vmul.f32 %v974, 2.0
  %v1249 = vmul.f32 %v979, 2.0
  %v1250 = vmul.f32 %v984, 2.0
  %v1251 = vmul.f32 %v989, 2.0
  %v1252 = vmul.f32 %v994, 2.0
  %v1253 = vmul.f32 %v999, 2.0
  %v1254 = vmul.f32 %v1004, 2.0
  %v1255 = vmul.f32 %v1009, 2.0
  %v1256 = vmul.f32 %v1014, 2.0
  %v1257 = vmul.f32 %v1227, %v1197
  %v1258 = vmul.f32 %v1228, %v1198
  %v1259 = vmul.f32 %v1229, %v1199
  %v1260 = vmul.f32 %v1230, %v1200
  %v1261 = vmul.f32 %v1231, %v1201
  %v1262 = vmul.f32 %v1232, %v1202
  %v1263 = vmul.f32 %v1233, %v1203
  %v1264 = vmul.f32 %v1234, %v1204
  %v1265 = vmul.f32 %v1235, %v1205
  %v1266 = vmul.f32 %v1236, %v1206
  %v1267 = vmul.f32 %v1237, %v1207
  %v1268 = vmul.f32 %v1238, %v1208
  %v1269 = vmul.f32 %v1239, %v1209
  %v1270 = vmul.f32 %v1240, %v1210
  %v1271 = vmul.f32 %v1241, %v1211
  %v1272 = vmul.f32 %v1242, %v1212
  %v1273 = vmul.f32 %v1243, %v1213
  %v1274 = vmul.f32 %v1244, %v1214
  %v1275 = vmul.f32 %v1245, %v1215
  %v1276 = vmul.f32 %v1246, %v1216
  %v1277 = vmul.f32 %v1247, %v1217
  %v1278 = vmul.f32 %v1248, %v1218
  %v1279 = vmul.f32 %v1249, %v1219
  %v1280 = vmul.f32 %v1250, %v1220
  %v1281 = vmul.f32 %v1251, %v1221
  %v1282 = vmul.f32 %v1252, %v1222
  %v1283 = vmul.f32 %v1253, %v1223
  %v1284 = vmul.f32 %v1254, %v1224
  %v1285 = vmul.f32 %v1255, %v1225
  %v1286 = vmul.f32 %v1256, %v1226
  %v1287 = vsub.f32 1.0, %v1257
  %v1288 = vsub.f32 1.0, %v1258
  %v1289 = vsub.f32 1.0, %v1259
  %v1290 = vsub.f32 1.0, %v1260
  %v1291 = vsub.f32 1.0, %v1261
  %v1292 = vsub.f32 1.0, %v1262
  %v1293 = vsub.f32 1.0, %v1263
  %v1294 = vsub.f32 1.0, %v1264
  %v1295 = vsub.f32 1.0, %v1265
  %v1296 = vsub.f32 1.0, %v1266
  %v1297 = vsub.f32 1.0, %v1267
  %v1298 = vsub.f32 1.0, %v1268
  %v1299 = vsub.f32 1.0, %v1269
  %v1300 = vsub.f32 1.0, %v1270
  %v1301 = vsub.f32 1.0, %v1271
  %v1302 = vsub.f32 1.0, %v1272
  %v1303 = vsub.f32 1.0, %v1273
  %v1304 = vsub.f32 1.0, %v1274
  %v1305 = vsub.f32 1.0, %v1275
  %v1306 = vsub.f32 1.0, %v1276
  %v1307 = vsub.f32 1.0, %v1277
  %v1308 = vsub.f32 1.0, %v1278
  %v1309 = vsub.f32 1.0, %v1279
  %v1310 = vsub.f32 1.0, %v1280
  %v1311 = vsub.f32 1.0, %v1281
  %v1312 = vsub.f32 1.0, %v1282
  %v1313 = vsub.f32 1.0, %v1283
  %v1314 = vsub.f32 1.0, %v1284
  %v1315 = vsub.f32 1.0, %v1285
  %v1316 = vsub.f32 1.0, %v1286
  %v1317 = vsel %vm1137, %v1287, 0.0
  %v1318 = vsel %vm1138, %v1288, 0.0
  %v1319 = vsel %vm1139, %v1289, 0.0
  %v1320 = vsel %vm1140, %v1290, 0.0
  %v1321 = vsel %vm1141, %v1291, 0.0
  %v1322 = vsel %vm1142, %v1292, 0.0
  %v1323 = vsel %vm1143, %v1293, 0.0
  %v1324 = vsel %vm1144, %v1294, 0.0
  %v1325 = vsel %vm1145, %v1295, 0.0
  %v1326 = vsel %vm1146, %v1296, 0.0
  %v1327 = vsel %vm1147, %v1297, 0.0
  %v1328 = vsel %vm1148, %v1298, 0.0
  %v1329 = vsel %vm1149, %v1299, 0.0
  %v1330 = vsel %vm1150, %v1300, 0.0
  %v1331 = vsel %vm1151, %v1301, 0.0
  %v1332 = vsel %vm1152, %v1302, 0.0
  %v1333 = vsel %vm1153, %v1303, 0.0
  %v1334 = vsel %vm1154, %v1304, 0.0
  %v1335 = vsel %vm1155, %v1305, 0.0
  %v1336 = vsel %vm1156, %v1306, 0.0
  %v1337 = vsel %vm1157, %v1307, 0.0
  %v1338 = vsel %vm1158, %v1308, 0.0
  %v1339 = vsel %vm1159, %v1309, 0.0
  %v1340 = vsel %vm1160, %v1310, 0.0
  %v1341 = vsel %vm1161, %v1311, 0.0
  %v1342 = vsel %vm1162, %v1312, 0.0
  %v1343 = vsel %vm1163, %v1313, 0.0
  %v1344 = vsel %vm1164, %v1314, 0.0
  %v1345 = vsel %vm1165, %v1315, 0.0
  %v1346 = vsel %vm1166, %v1316, 0.0
  %v1347 = vadd.f32 %v1317, %v1049
  %v1348 = vadd.f32 %v1318, %v1052
  %v1349 = vadd.f32 %v1319, %v1055
  %v1350 = vadd.f32 %v1320, %v1058
  %v1351 = vadd.f32 %v1321, %v1061
  %v1352 = vadd.f32 %v1322, %v1064
  %v1353 = vadd.f32 %v1323, %v1067
  %v1354 = vadd.f32 %v1324, %v1070
  %v1355 = vadd.f32 %v1325, %v1073
  %v1356 = vadd.f32 %v1326, %v1076
  %v1357 = vadd.f32 %v1327, %v1079
  %v1358 = vadd.f32 %v1328, %v1082
  %v1359 = vadd.f32 %v1329, %v1085
  %v1360 = vadd.f32 %v1330, %v1088
  %v1361 = vadd.f32 %v1331, %v1091
  %v1362 = vadd.f32 %v1332, %v1094
  %v1363 = vadd.f32 %v1333, %v1097
  %v1364 = vadd.f32 %v1334, %v1100
  %v1365 = vadd.f32 %v1335, %v1103
  %v1366 = vadd.f32 %v1336, %v1106
  %v1367 = vadd.f32 %v1337, %v1109
  %v1368 = vadd.f32 %v1338, %v1112
  %v1369 = vadd.f32 %v1339, %v1115
  %v1370 = vadd.f32 %v1340, %v1118
  %v1371 = vadd.f32 %v1341, %v1121
  %v1372 = vadd.f32 %v1342, %v1124
  %v1373 = vadd.f32 %v1343, %v1127
  %v1374 = vadd.f32 %v1344, %v1130
  %v1375 = vadd.f32 %v1345, %v1133
  %v1376 = vadd.f32 %v1346, %v1136
  %v1377 = vmax.f32 %v1347, 0.0
  %v1378 = vmax.f32 %v1348, 0.0
  %v1379 = vmax.f32 %v1349, 0.0
  %v1380 = vmax.f32 %v1350, 0.0
  %v1381 = vmax.f32 %v1351, 0.0
  %v1382 = vmax.f32 %v1352, 0.0
  %v1383 = vmax.f32 %v1353, 0.0
  %v1384 = vmax.f32 %v1354, 0.0
  %v1385 = vmax.f32 %v1355, 0.0
  %v1386 = vmax.f32 %v1356, 0.0
  %v1387 = vmax.f32 %v1357, 0.0
  %v1388 = vmax.f32 %v1358, 0.0
  %v1389 = vmax.f32 %v1359, 0.0
  %v1390 = vmax.f32 %v1360, 0.0
  %v1391 = vmax.f32 %v1361, 0.0
  %v1392 = vmax.f32 %v1362, 0.0
  %v1393 = vmax.f32 %v1363, 0.0
  %v1394 = vmax.f32 %v1364, 0.0
  %v1395 = vmax.f32 %v1365, 0.0
  %v1396 = vmax.f32 %v1366, 0.0
  %v1397 = vmax.f32 %v1367, 0.0
  %v1398 = vmax.f32 %v1368, 0.0
  %v1399 = vmax.f32 %v1369, 0.0
  %v1400 = vmax.f32 %v1370, 0.0
  %v1401 = vmax.f32 %v1371, 0.0
  %v1402 = vmax.f32 %v1372, 0.0
  %v1403 = vmax.f32 %v1373, 0.0
  %v1404 = vmax.f32 %v1374, 0.0
  %v1405 = vmax.f32 %v1375, 0.0
  %v1406 = vmax.f32 %v1376, 0.0
  %v1407 = vrsqrt.pop %v1377
  %v1408 = vmul.f32 %v1377, %v1407
  %vm1409 = vcmp.eq.f32.partialorder %v1377, inf
  %v1410 = vsel %vm1409, %v1377, %v1408
  %vm1411 = vcmp.eq.f32.partialorder %v1377, 0.0
  %v1412 = vand.u32 %v1377, 2147483648
  %v1413 = vsel %vm1411, %v1412, %v1410
  %v1414 = vrsqrt.pop %v1378
  %v1415 = vmul.f32 %v1378, %v1414
  %vm1416 = vcmp.eq.f32.partialorder %v1378, inf
  %v1417 = vsel %vm1416, %v1378, %v1415
  %vm1418 = vcmp.eq.f32.partialorder %v1378, 0.0
  %v1419 = vand.u32 %v1378, 2147483648
  %v1420 = vsel %vm1418, %v1419, %v1417
  %v1421 = vrsqrt.pop %v1379
  %v1422 = vmul.f32 %v1379, %v1421
  %vm1423 = vcmp.eq.f32.partialorder %v1379, inf
  %v1424 = vsel %vm1423, %v1379, %v1422
  %vm1425 = vcmp.eq.f32.partialorder %v1379, 0.0
  %v1426 = vand.u32 %v1379, 2147483648
  %v1427 = vsel %vm1425, %v1426, %v1424
  %v1428 = vrsqrt.pop %v1380
  %v1429 = vmul.f32 %v1380, %v1428
  %vm1430 = vcmp.eq.f32.partialorder %v1380, inf
  %v1431 = vsel %vm1430, %v1380, %v1429
  %vm1432 = vcmp.eq.f32.partialorder %v1380, 0.0
  %v1433 = vand.u32 %v1380, 2147483648
  %v1434 = vsel %vm1432, %v1433, %v1431
  %v1435 = vrsqrt.pop %v1381
  %v1436 = vmul.f32 %v1381, %v1435
  %vm1437 = vcmp.eq.f32.partialorder %v1381, inf
  %v1438 = vsel %vm1437, %v1381, %v1436
  %vm1439 = vcmp.eq.f32.partialorder %v1381, 0.0
  %v1440 = vand.u32 %v1381, 2147483648
  %v1441 = vsel %vm1439, %v1440, %v1438
  %v1442 = vrsqrt.pop %v1382
  %v1443 = vmul.f32 %v1382, %v1442
  %vm1444 = vcmp.eq.f32.partialorder %v1382, inf
  %v1445 = vsel %vm1444, %v1382, %v1443
  %vm1446 = vcmp.eq.f32.partialorder %v1382, 0.0
  %v1447 = vand.u32 %v1382, 2147483648
  %v1448 = vsel %vm1446, %v1447, %v1445
  %v1449 = vrsqrt.pop %v1383
  %v1450 = vmul.f32 %v1383, %v1449
  %vm1451 = vcmp.eq.f32.partialorder %v1383, inf
  %v1452 = vsel %vm1451, %v1383, %v1450
  %vm1453 = vcmp.eq.f32.partialorder %v1383, 0.0
  %v1454 = vand.u32 %v1383, 2147483648
  %v1455 = vsel %vm1453, %v1454, %v1452
  %v1456 = vrsqrt.pop %v1384
  %v1457 = vmul.f32 %v1384, %v1456
  %vm1458 = vcmp.eq.f32.partialorder %v1384, inf
  %v1459 = vsel %vm1458, %v1384, %v1457
  %vm1460 = vcmp.eq.f32.partialorder %v1384, 0.0
  %v1461 = vand.u32 %v1384, 2147483648
  %v1462 = vsel %vm1460, %v1461, %v1459
  %v1463 = vrsqrt.pop %v1385
  %v1464 = vmul.f32 %v1385, %v1463
  %vm1465 = vcmp.eq.f32.partialorder %v1385, inf
  %v1466 = vsel %vm1465, %v1385, %v1464
  %vm1467 = vcmp.eq.f32.partialorder %v1385, 0.0
  %v1468 = vand.u32 %v1385, 2147483648
  %v1469 = vsel %vm1467, %v1468, %v1466
  %v1470 = vrsqrt.pop %v1386
  %v1471 = vmul.f32 %v1386, %v1470
  %vm1472 = vcmp.eq.f32.partialorder %v1386, inf
  %v1473 = vsel %vm1472, %v1386, %v1471
  %vm1474 = vcmp.eq.f32.partialorder %v1386, 0.0
  %v1475 = vand.u32 %v1386, 2147483648
  %v1476 = vsel %vm1474, %v1475, %v1473
  %v1477 = vrsqrt.pop %v1387
  %v1478 = vmul.f32 %v1387, %v1477
  %vm1479 = vcmp.eq.f32.partialorder %v1387, inf
  %v1480 = vsel %vm1479, %v1387, %v1478
  %vm1481 = vcmp.eq.f32.partialorder %v1387, 0.0
  %v1482 = vand.u32 %v1387, 2147483648
  %v1483 = vsel %vm1481, %v1482, %v1480
  %v1484 = vrsqrt.pop %v1388
  %v1485 = vmul.f32 %v1388, %v1484
  %vm1486 = vcmp.eq.f32.partialorder %v1388, inf
  %v1487 = vsel %vm1486, %v1388, %v1485
  %vm1488 = vcmp.eq.f32.partialorder %v1388, 0.0
  %v1489 = vand.u32 %v1388, 2147483648
  %v1490 = vsel %vm1488, %v1489, %v1487
  %v1491 = vrsqrt.pop %v1389
  %v1492 = vmul.f32 %v1389, %v1491
  %vm1493 = vcmp.eq.f32.partialorder %v1389, inf
  %v1494 = vsel %vm1493, %v1389, %v1492
  %vm1495 = vcmp.eq.f32.partialorder %v1389, 0.0
  %v1496 = vand.u32 %v1389, 2147483648
  %v1497 = vsel %vm1495, %v1496, %v1494
  %v1498 = vrsqrt.pop %v1390
  %v1499 = vmul.f32 %v1390, %v1498
  %vm1500 = vcmp.eq.f32.partialorder %v1390, inf
  %v1501 = vsel %vm1500, %v1390, %v1499
  %vm1502 = vcmp.eq.f32.partialorder %v1390, 0.0
  %v1503 = vand.u32 %v1390, 2147483648
  %v1504 = vsel %vm1502, %v1503, %v1501
  %v1505 = vrsqrt.pop %v1391
  %v1506 = vmul.f32 %v1391, %v1505
  %vm1507 = vcmp.eq.f32.partialorder %v1391, inf
  %v1508 = vsel %vm1507, %v1391, %v1506
  %vm1509 = vcmp.eq.f32.partialorder %v1391, 0.0
  %v1510 = vand.u32 %v1391, 2147483648
  %v1511 = vsel %vm1509, %v1510, %v1508
  %v1512 = vrsqrt.pop %v1392
  %v1513 = vmul.f32 %v1392, %v1512
  %vm1514 = vcmp.eq.f32.partialorder %v1392, inf
  %v1515 = vsel %vm1514, %v1392, %v1513
  %vm1516 = vcmp.eq.f32.partialorder %v1392, 0.0
  %v1517 = vand.u32 %v1392, 2147483648
  %v1518 = vsel %vm1516, %v1517, %v1515
  %v1519 = vrsqrt.pop %v1393
  %v1520 = vmul.f32 %v1393, %v1519
  %vm1521 = vcmp.eq.f32.partialorder %v1393, inf
  %v1522 = vsel %vm1521, %v1393, %v1520
  %vm1523 = vcmp.eq.f32.partialorder %v1393, 0.0
  %v1524 = vand.u32 %v1393, 2147483648
  %v1525 = vsel %vm1523, %v1524, %v1522
  %v1526 = vrsqrt.pop %v1394
  %v1527 = vmul.f32 %v1394, %v1526
  %vm1528 = vcmp.eq.f32.partialorder %v1394, inf
  %v1529 = vsel %vm1528, %v1394, %v1527
  %vm1530 = vcmp.eq.f32.partialorder %v1394, 0.0
  %v1531 = vand.u32 %v1394, 2147483648
  %v1532 = vsel %vm1530, %v1531, %v1529
  %v1533 = vrsqrt.pop %v1395
  %v1534 = vmul.f32 %v1395, %v1533
  %vm1535 = vcmp.eq.f32.partialorder %v1395, inf
  %v1536 = vsel %vm1535, %v1395, %v1534
  %vm1537 = vcmp.eq.f32.partialorder %v1395, 0.0
  %v1538 = vand.u32 %v1395, 2147483648
  %v1539 = vsel %vm1537, %v1538, %v1536
  %v1540 = vrsqrt.pop %v1396
  %v1541 = vmul.f32 %v1396, %v1540
  %vm1542 = vcmp.eq.f32.partialorder %v1396, inf
  %v1543 = vsel %vm1542, %v1396, %v1541
  %vm1544 = vcmp.eq.f32.partialorder %v1396, 0.0
  %v1545 = vand.u32 %v1396, 2147483648
  %v1546 = vsel %vm1544, %v1545, %v1543
  %v1547 = vrsqrt.pop %v1397
  %v1548 = vmul.f32 %v1397, %v1547
  %vm1549 = vcmp.eq.f32.partialorder %v1397, inf
  %v1550 = vsel %vm1549, %v1397, %v1548
  %vm1551 = vcmp.eq.f32.partialorder %v1397, 0.0
  %v1552 = vand.u32 %v1397, 2147483648
  %v1553 = vsel %vm1551, %v1552, %v1550
  %v1554 = vrsqrt.pop %v1398
  %v1555 = vmul.f32 %v1398, %v1554
  %vm1556 = vcmp.eq.f32.partialorder %v1398, inf
  %v1557 = vsel %vm1556, %v1398, %v1555
  %vm1558 = vcmp.eq.f32.partialorder %v1398, 0.0
  %v1559 = vand.u32 %v1398, 2147483648
  %v1560 = vsel %vm1558, %v1559, %v1557
  %v1561 = vrsqrt.pop %v1399
  %v1562 = vmul.f32 %v1399, %v1561
  %vm1563 = vcmp.eq.f32.partialorder %v1399, inf
  %v1564 = vsel %vm1563, %v1399, %v1562
  %vm1565 = vcmp.eq.f32.partialorder %v1399, 0.0
  %v1566 = vand.u32 %v1399, 2147483648
  %v1567 = vsel %vm1565, %v1566, %v1564
  %v1568 = vrsqrt.pop %v1400
  %v1569 = vmul.f32 %v1400, %v1568
  %vm1570 = vcmp.eq.f32.partialorder %v1400, inf
  %v1571 = vsel %vm1570, %v1400, %v1569
  %vm1572 = vcmp.eq.f32.partialorder %v1400, 0.0
  %v1573 = vand.u32 %v1400, 2147483648
  %v1574 = vsel %vm1572, %v1573, %v1571
  %v1575 = vrsqrt.pop %v1401
  %v1576 = vmul.f32 %v1401, %v1575
  %vm1577 = vcmp.eq.f32.partialorder %v1401, inf
  %v1578 = vsel %vm1577, %v1401, %v1576
  %vm1579 = vcmp.eq.f32.partialorder %v1401, 0.0
  %v1580 = vand.u32 %v1401, 2147483648
  %v1581 = vsel %vm1579, %v1580, %v1578
  %v1582 = vrsqrt.pop %v1402
  %v1583 = vmul.f32 %v1402, %v1582
  %vm1584 = vcmp.eq.f32.partialorder %v1402, inf
  %v1585 = vsel %vm1584, %v1402, %v1583
  %vm1586 = vcmp.eq.f32.partialorder %v1402, 0.0
  %v1587 = vand.u32 %v1402, 2147483648
  %v1588 = vsel %vm1586, %v1587, %v1585
  %v1589 = vrsqrt.pop %v1403
  %v1590 = vmul.f32 %v1403, %v1589
  %vm1591 = vcmp.eq.f32.partialorder %v1403, inf
  %v1592 = vsel %vm1591, %v1403, %v1590
  %vm1593 = vcmp.eq.f32.partialorder %v1403, 0.0
  %v1594 = vand.u32 %v1403, 2147483648
  %v1595 = vsel %vm1593, %v1594, %v1592
  %v1596 = vrsqrt.pop %v1404
  %v1597 = vmul.f32 %v1404, %v1596
  %vm1598 = vcmp.eq.f32.partialorder %v1404, inf
  %v1599 = vsel %vm1598, %v1404, %v1597
  %vm1600 = vcmp.eq.f32.partialorder %v1404, 0.0
  %v1601 = vand.u32 %v1404, 2147483648
  %v1602 = vsel %vm1600, %v1601, %v1599
  %v1603 = vrsqrt.pop %v1405
  %v1604 = vmul.f32 %v1405, %v1603
  %vm1605 = vcmp.eq.f32.partialorder %v1405, inf
  %v1606 = vsel %vm1605, %v1405, %v1604
  %vm1607 = vcmp.eq.f32.partialorder %v1405, 0.0
  %v1608 = vand.u32 %v1405, 2147483648
  %v1609 = vsel %vm1607, %v1608, %v1606
  %v1610 = vrsqrt.pop %v1406
  %v1611 = vmul.f32 %v1406, %v1610
  %vm1612 = vcmp.eq.f32.partialorder %v1406, inf
  %v1613 = vsel %vm1612, %v1406, %v1611
  %vm1614 = vcmp.eq.f32.partialorder %v1406, 0.0
  %v1615 = vand.u32 %v1406, 2147483648
  %v1616 = vsel %vm1614, %v1615, %v1613
  %v1617 = vld [vmem:[%s7] sm:$0x1]
  %v1618 = vld [vmem:[%s8] sm:$0x1]
  %v1619 = vld [vmem:[%s3] sm:$0xff]
  %v1620 = vld [vmem:[%s3 + $0x8] sm:$0xff]
  %v1621 = vld [vmem:[%s3 + $0x10] sm:$0xff]
  %v1622 = vld [vmem:[%s3 + $0x18] sm:$0xff]
  %v1623 = vld [vmem:[%s3 + $0x20] sm:$0xff]
  %v1624 = vld [vmem:[%s3 + $0x28] sm:$0xff]
  %v1625 = vld [vmem:[%s3 + $0x30] sm:$0xff]
  %v1626 = vld [vmem:[%s3 + $0x38] sm:$0xff]
  %v1627 = vld [vmem:[%s3 + $0x40] sm:$0xff]
  %v1628 = vld [vmem:[%s3 + $0x48] sm:$0xff]
  %v1629 = vld [vmem:[%s3 + $0x50] sm:$0xff]
  %v1630 = vld [vmem:[%s3 + $0x58] sm:$0xff]
  %v1631 = vld [vmem:[%s3 + $0x60] sm:$0xff]
  %v1632 = vld [vmem:[%s3 + $0x68] sm:$0xff]
  %v1633 = vld [vmem:[%s3 + $0x70] sm:$0xff]
  %v1634 = vld [vmem:[%s3 + $0x78] sm:$0xff]
  %v1635 = vld [vmem:[%s3 + $0x80] sm:$0xff]
  %v1636 = vld [vmem:[%s3 + $0x88] sm:$0xff]
  %v1637 = vld [vmem:[%s3 + $0x90] sm:$0xff]
  %v1638 = vld [vmem:[%s3 + $0x98] sm:$0xff]
  %v1639 = vld [vmem:[%s3 + $0xa0] sm:$0xff]
  %v1640 = vld [vmem:[%s3 + $0xa8] sm:$0xff]
  %v1641 = vld [vmem:[%s3 + $0xb0] sm:$0xff]
  %v1642 = vld [vmem:[%s3 + $0xb8] sm:$0xff]
  %v1643 = vld [vmem:[%s3 + $0xc0] sm:$0xff]
  %v1644 = vld [vmem:[%s3 + $0xc8] sm:$0xff]
  %v1645 = vld [vmem:[%s3 + $0xd0] sm:$0xff]
  %v1646 = vld [vmem:[%s3 + $0xd8] sm:$0xff]
  %v1647 = vld [vmem:[%s3 + $0xe0] sm:$0xff]
  %v1648 = vld [vmem:[%s3 + $0xe8] sm:$0xff]
  %v1650 = vlaneseq
  %v1651 = vshrl.u32 %v1650, 7
  %v1652 = vsub.s32 0, %v1651
  %v1653 = vrot.slane %v1617, %v1652
  %1656 = vset.pattern.permute.xlu0 0
  %1657 = vperm.xlu0 %1656, %v1619
  %v1658 = vpop.permute.xlu0 %1657
  %1661 = vset.pattern.permute.xlu0 0
  %1662 = vperm.xlu0 %1661, %v1620
  %v1663 = vpop.permute.xlu0 %1662
  %1666 = vset.pattern.permute.xlu0 0
  %1667 = vperm.xlu0 %1666, %v1621
  %v1668 = vpop.permute.xlu0 %1667
  %1671 = vset.pattern.permute.xlu0 0
  %1672 = vperm.xlu0 %1671, %v1622
  %v1673 = vpop.permute.xlu0 %1672
  %1676 = vset.pattern.permute.xlu0 0
  %1677 = vperm.xlu0 %1676, %v1623
  %v1678 = vpop.permute.xlu0 %1677
  %1681 = vset.pattern.permute.xlu0 0
  %1682 = vperm.xlu0 %1681, %v1624
  %v1683 = vpop.permute.xlu0 %1682
  %1686 = vset.pattern.permute.xlu0 0
  %1687 = vperm.xlu0 %1686, %v1625
  %v1688 = vpop.permute.xlu0 %1687
  %1691 = vset.pattern.permute.xlu0 0
  %1692 = vperm.xlu0 %1691, %v1626
  %v1693 = vpop.permute.xlu0 %1692
  %1696 = vset.pattern.permute.xlu0 0
  %1697 = vperm.xlu0 %1696, %v1627
  %v1698 = vpop.permute.xlu0 %1697
  %1701 = vset.pattern.permute.xlu0 0
  %1702 = vperm.xlu0 %1701, %v1628
  %v1703 = vpop.permute.xlu0 %1702
  %1706 = vset.pattern.permute.xlu0 0
  %1707 = vperm.xlu0 %1706, %v1629
  %v1708 = vpop.permute.xlu0 %1707
  %1711 = vset.pattern.permute.xlu0 0
  %1712 = vperm.xlu0 %1711, %v1630
  %v1713 = vpop.permute.xlu0 %1712
  %1716 = vset.pattern.permute.xlu0 0
  %1717 = vperm.xlu0 %1716, %v1631
  %v1718 = vpop.permute.xlu0 %1717
  %1721 = vset.pattern.permute.xlu0 0
  %1722 = vperm.xlu0 %1721, %v1632
  %v1723 = vpop.permute.xlu0 %1722
  %1726 = vset.pattern.permute.xlu0 0
  %1727 = vperm.xlu0 %1726, %v1633
  %v1728 = vpop.permute.xlu0 %1727
  %1731 = vset.pattern.permute.xlu0 0
  %1732 = vperm.xlu0 %1731, %v1634
  %v1733 = vpop.permute.xlu0 %1732
  %1736 = vset.pattern.permute.xlu0 0
  %1737 = vperm.xlu0 %1736, %v1635
  %v1738 = vpop.permute.xlu0 %1737
  %1741 = vset.pattern.permute.xlu0 0
  %1742 = vperm.xlu0 %1741, %v1636
  %v1743 = vpop.permute.xlu0 %1742
  %1746 = vset.pattern.permute.xlu0 0
  %1747 = vperm.xlu0 %1746, %v1637
  %v1748 = vpop.permute.xlu0 %1747
  %1751 = vset.pattern.permute.xlu0 0
  %1752 = vperm.xlu0 %1751, %v1638
  %v1753 = vpop.permute.xlu0 %1752
  %1756 = vset.pattern.permute.xlu0 0
  %1757 = vperm.xlu0 %1756, %v1639
  %v1758 = vpop.permute.xlu0 %1757
  %1761 = vset.pattern.permute.xlu0 0
  %1762 = vperm.xlu0 %1761, %v1640
  %v1763 = vpop.permute.xlu0 %1762
  %1766 = vset.pattern.permute.xlu0 0
  %1767 = vperm.xlu0 %1766, %v1641
  %v1768 = vpop.permute.xlu0 %1767
  %1771 = vset.pattern.permute.xlu0 0
  %1772 = vperm.xlu0 %1771, %v1642
  %v1773 = vpop.permute.xlu0 %1772
  %1776 = vset.pattern.permute.xlu0 0
  %1777 = vperm.xlu0 %1776, %v1643
  %v1778 = vpop.permute.xlu0 %1777
  %1781 = vset.pattern.permute.xlu0 0
  %1782 = vperm.xlu0 %1781, %v1644
  %v1783 = vpop.permute.xlu0 %1782
  %1786 = vset.pattern.permute.xlu0 0
  %1787 = vperm.xlu0 %1786, %v1645
  %v1788 = vpop.permute.xlu0 %1787
  %1791 = vset.pattern.permute.xlu0 0
  %1792 = vperm.xlu0 %1791, %v1646
  %v1793 = vpop.permute.xlu0 %1792
  %1796 = vset.pattern.permute.xlu0 0
  %1797 = vperm.xlu0 %1796, %v1647
  %v1798 = vpop.permute.xlu0 %1797
  %1801 = vset.pattern.permute.xlu0 0
  %1802 = vperm.xlu0 %1801, %v1648
  %v1803 = vpop.permute.xlu0 %1802
  %vm1805 = vcmp.eq.f32.partialorder %v1653, %v1658
  %vm1806 = vcmp.eq.f32.partialorder %v1653, %v1663
  %vm1807 = vcmp.eq.f32.partialorder %v1653, %v1668
  %vm1808 = vcmp.eq.f32.partialorder %v1653, %v1673
  %vm1809 = vcmp.eq.f32.partialorder %v1653, %v1678
  %vm1810 = vcmp.eq.f32.partialorder %v1653, %v1683
  %vm1811 = vcmp.eq.f32.partialorder %v1653, %v1688
  %vm1812 = vcmp.eq.f32.partialorder %v1653, %v1693
  %vm1813 = vcmp.eq.f32.partialorder %v1653, %v1698
  %vm1814 = vcmp.eq.f32.partialorder %v1653, %v1703
  %vm1815 = vcmp.eq.f32.partialorder %v1653, %v1708
  %vm1816 = vcmp.eq.f32.partialorder %v1653, %v1713
  %vm1817 = vcmp.eq.f32.partialorder %v1653, %v1718
  %vm1818 = vcmp.eq.f32.partialorder %v1653, %v1723
  %vm1819 = vcmp.eq.f32.partialorder %v1653, %v1728
  %vm1820 = vcmp.eq.f32.partialorder %v1653, %v1733
  %vm1821 = vcmp.eq.f32.partialorder %v1653, %v1738
  %vm1822 = vcmp.eq.f32.partialorder %v1653, %v1743
  %vm1823 = vcmp.eq.f32.partialorder %v1653, %v1748
  %vm1824 = vcmp.eq.f32.partialorder %v1653, %v1753
  %vm1825 = vcmp.eq.f32.partialorder %v1653, %v1758
  %vm1826 = vcmp.eq.f32.partialorder %v1653, %v1763
  %vm1827 = vcmp.eq.f32.partialorder %v1653, %v1768
  %vm1828 = vcmp.eq.f32.partialorder %v1653, %v1773
  %vm1829 = vcmp.eq.f32.partialorder %v1653, %v1778
  %vm1830 = vcmp.eq.f32.partialorder %v1653, %v1783
  %vm1831 = vcmp.eq.f32.partialorder %v1653, %v1788
  %vm1832 = vcmp.eq.f32.partialorder %v1653, %v1793
  %vm1833 = vcmp.eq.f32.partialorder %v1653, %v1798
  %vm1834 = vcmp.eq.f32.partialorder %v1653, %v1803
  %v1835 = vsel %vm1805, %v1413, 3e+38
  %v1836 = vsel %vm1806, %v1420, 3e+38
  %v1837 = vsel %vm1807, %v1427, 3e+38
  %v1838 = vsel %vm1808, %v1434, 3e+38
  %v1839 = vsel %vm1809, %v1441, 3e+38
  %v1840 = vsel %vm1810, %v1448, 3e+38
  %v1841 = vsel %vm1811, %v1455, 3e+38
  %v1842 = vsel %vm1812, %v1462, 3e+38
  %v1843 = vsel %vm1813, %v1469, 3e+38
  %v1844 = vsel %vm1814, %v1476, 3e+38
  %v1845 = vsel %vm1815, %v1483, 3e+38
  %v1846 = vsel %vm1816, %v1490, 3e+38
  %v1847 = vsel %vm1817, %v1497, 3e+38
  %v1848 = vsel %vm1818, %v1504, 3e+38
  %v1849 = vsel %vm1819, %v1511, 3e+38
  %v1850 = vsel %vm1820, %v1518, 3e+38
  %v1851 = vsel %vm1821, %v1525, 3e+38
  %v1852 = vsel %vm1822, %v1532, 3e+38
  %v1853 = vsel %vm1823, %v1539, 3e+38
  %v1854 = vsel %vm1824, %v1546, 3e+38
  %v1855 = vsel %vm1825, %v1553, 3e+38
  %v1856 = vsel %vm1826, %v1560, 3e+38
  %v1857 = vsel %vm1827, %v1567, 3e+38
  %v1858 = vsel %vm1828, %v1574, 3e+38
  %v1859 = vsel %vm1829, %v1581, 3e+38
  %v1860 = vsel %vm1830, %v1588, 3e+38
  %v1861 = vsel %vm1831, %v1595, 3e+38
  %v1862 = vsel %vm1832, %v1602, 3e+38
  %v1863 = vsel %vm1833, %v1609, 3e+38
  %v1864 = vsel %vm1834, %v1616, 3e+38
  %1865 = vmin.xlane.f32.xlu0 %v1835
  %v1866 = vpop.xlane.xlu0 %1865
  %1867 = vmin.xlane.f32.xlu0 %v1836
  %v1868 = vpop.xlane.xlu0 %1867
  %1869 = vmin.xlane.f32.xlu0 %v1837
  %v1870 = vpop.xlane.xlu0 %1869
  %1871 = vmin.xlane.f32.xlu0 %v1838
  %v1872 = vpop.xlane.xlu0 %1871
  %1873 = vmin.xlane.f32.xlu0 %v1839
  %v1874 = vpop.xlane.xlu0 %1873
  %1875 = vmin.xlane.f32.xlu0 %v1840
  %v1876 = vpop.xlane.xlu0 %1875
  %1877 = vmin.xlane.f32.xlu0 %v1841
  %v1878 = vpop.xlane.xlu0 %1877
  %1879 = vmin.xlane.f32.xlu0 %v1842
  %v1880 = vpop.xlane.xlu0 %1879
  %1881 = vmin.xlane.f32.xlu0 %v1843
  %v1882 = vpop.xlane.xlu0 %1881
  %1883 = vmin.xlane.f32.xlu0 %v1844
  %v1884 = vpop.xlane.xlu0 %1883
  %1885 = vmin.xlane.f32.xlu0 %v1845
  %v1886 = vpop.xlane.xlu0 %1885
  %1887 = vmin.xlane.f32.xlu0 %v1846
  %v1888 = vpop.xlane.xlu0 %1887
  %1889 = vmin.xlane.f32.xlu0 %v1847
  %v1890 = vpop.xlane.xlu0 %1889
  %1891 = vmin.xlane.f32.xlu0 %v1848
  %v1892 = vpop.xlane.xlu0 %1891
  %1893 = vmin.xlane.f32.xlu0 %v1849
  %v1894 = vpop.xlane.xlu0 %1893
  %1895 = vmin.xlane.f32.xlu0 %v1850
  %v1896 = vpop.xlane.xlu0 %1895
  %1897 = vmin.xlane.f32.xlu0 %v1851
  %v1898 = vpop.xlane.xlu0 %1897
  %1899 = vmin.xlane.f32.xlu0 %v1852
  %v1900 = vpop.xlane.xlu0 %1899
  %1901 = vmin.xlane.f32.xlu0 %v1853
  %v1902 = vpop.xlane.xlu0 %1901
  %1903 = vmin.xlane.f32.xlu0 %v1854
  %v1904 = vpop.xlane.xlu0 %1903
  %1905 = vmin.xlane.f32.xlu0 %v1855
  %v1906 = vpop.xlane.xlu0 %1905
  %1907 = vmin.xlane.f32.xlu0 %v1856
  %v1908 = vpop.xlane.xlu0 %1907
  %1909 = vmin.xlane.f32.xlu0 %v1857
  %v1910 = vpop.xlane.xlu0 %1909
  %1911 = vmin.xlane.f32.xlu0 %v1858
  %v1912 = vpop.xlane.xlu0 %1911
  %1913 = vmin.xlane.f32.xlu0 %v1859
  %v1914 = vpop.xlane.xlu0 %1913
  %1915 = vmin.xlane.f32.xlu0 %v1860
  %v1916 = vpop.xlane.xlu0 %1915
  %1917 = vmin.xlane.f32.xlu0 %v1861
  %v1918 = vpop.xlane.xlu0 %1917
  %1919 = vmin.xlane.f32.xlu0 %v1862
  %v1920 = vpop.xlane.xlu0 %1919
  %1921 = vmin.xlane.f32.xlu0 %v1863
  %v1922 = vpop.xlane.xlu0 %1921
  %1923 = vmin.xlane.f32.xlu0 %v1864
  %v1924 = vpop.xlane.xlu0 %1923
  %vm1925 = vcmp.eq.f32.partialorder %v1835, %v1866
  %vm1926 = vcmp.eq.f32.partialorder %v1836, %v1868
  %vm1927 = vcmp.eq.f32.partialorder %v1837, %v1870
  %vm1928 = vcmp.eq.f32.partialorder %v1838, %v1872
  %vm1929 = vcmp.eq.f32.partialorder %v1839, %v1874
  %vm1930 = vcmp.eq.f32.partialorder %v1840, %v1876
  %vm1931 = vcmp.eq.f32.partialorder %v1841, %v1878
  %vm1932 = vcmp.eq.f32.partialorder %v1842, %v1880
  %vm1933 = vcmp.eq.f32.partialorder %v1843, %v1882
  %vm1934 = vcmp.eq.f32.partialorder %v1844, %v1884
  %vm1935 = vcmp.eq.f32.partialorder %v1845, %v1886
  %vm1936 = vcmp.eq.f32.partialorder %v1846, %v1888
  %vm1937 = vcmp.eq.f32.partialorder %v1847, %v1890
  %vm1938 = vcmp.eq.f32.partialorder %v1848, %v1892
  %vm1939 = vcmp.eq.f32.partialorder %v1849, %v1894
  %vm1940 = vcmp.eq.f32.partialorder %v1850, %v1896
  %vm1941 = vcmp.eq.f32.partialorder %v1851, %v1898
  %vm1942 = vcmp.eq.f32.partialorder %v1852, %v1900
  %vm1943 = vcmp.eq.f32.partialorder %v1853, %v1902
  %vm1944 = vcmp.eq.f32.partialorder %v1854, %v1904
  %vm1945 = vcmp.eq.f32.partialorder %v1855, %v1906
  %vm1946 = vcmp.eq.f32.partialorder %v1856, %v1908
  %vm1947 = vcmp.eq.f32.partialorder %v1857, %v1910
  %vm1948 = vcmp.eq.f32.partialorder %v1858, %v1912
  %vm1949 = vcmp.eq.f32.partialorder %v1859, %v1914
  %vm1950 = vcmp.eq.f32.partialorder %v1860, %v1916
  %vm1951 = vcmp.eq.f32.partialorder %v1861, %v1918
  %vm1952 = vcmp.eq.f32.partialorder %v1862, %v1920
  %vm1953 = vcmp.eq.f32.partialorder %v1863, %v1922
  %vm1954 = vcmp.eq.f32.partialorder %v1864, %v1924
  %v1956 = vlaneseq
  %v1957 = vshrl.u32 %v1956, 7
  %v1958 = vsub.s32 0, %v1957
  %v1959 = vrot.slane %v1618, %v1958
  %v1961 = vsel %vm1925, %v1959, 3e+38
  %v1962 = vsel %vm1926, %v1959, 3e+38
  %v1963 = vsel %vm1927, %v1959, 3e+38
  %v1964 = vsel %vm1928, %v1959, 3e+38
  %v1965 = vsel %vm1929, %v1959, 3e+38
  %v1966 = vsel %vm1930, %v1959, 3e+38
  %v1967 = vsel %vm1931, %v1959, 3e+38
  %v1968 = vsel %vm1932, %v1959, 3e+38
  %v1969 = vsel %vm1933, %v1959, 3e+38
  %v1970 = vsel %vm1934, %v1959, 3e+38
  %v1971 = vsel %vm1935, %v1959, 3e+38
  %v1972 = vsel %vm1936, %v1959, 3e+38
  %v1973 = vsel %vm1937, %v1959, 3e+38
  %v1974 = vsel %vm1938, %v1959, 3e+38
  %v1975 = vsel %vm1939, %v1959, 3e+38
  %v1976 = vsel %vm1940, %v1959, 3e+38
  %v1977 = vsel %vm1941, %v1959, 3e+38
  %v1978 = vsel %vm1942, %v1959, 3e+38
  %v1979 = vsel %vm1943, %v1959, 3e+38
  %v1980 = vsel %vm1944, %v1959, 3e+38
  %v1981 = vsel %vm1945, %v1959, 3e+38
  %v1982 = vsel %vm1946, %v1959, 3e+38
  %v1983 = vsel %vm1947, %v1959, 3e+38
  %v1984 = vsel %vm1948, %v1959, 3e+38
  %v1985 = vsel %vm1949, %v1959, 3e+38
  %v1986 = vsel %vm1950, %v1959, 3e+38
  %v1987 = vsel %vm1951, %v1959, 3e+38
  %v1988 = vsel %vm1952, %v1959, 3e+38
  %v1989 = vsel %vm1953, %v1959, 3e+38
  %v1990 = vsel %vm1954, %v1959, 3e+38
  %1991 = vmin.xlane.f32.xlu0 %v1961
  %v1992 = vpop.xlane.xlu0 %1991
  %1993 = vmin.xlane.f32.xlu0 %v1962
  %v1994 = vpop.xlane.xlu0 %1993
  %1995 = vmin.xlane.f32.xlu0 %v1963
  %v1996 = vpop.xlane.xlu0 %1995
  %1997 = vmin.xlane.f32.xlu0 %v1964
  %v1998 = vpop.xlane.xlu0 %1997
  %1999 = vmin.xlane.f32.xlu0 %v1965
  %v2000 = vpop.xlane.xlu0 %1999
  %2001 = vmin.xlane.f32.xlu0 %v1966
  %v2002 = vpop.xlane.xlu0 %2001
  %2003 = vmin.xlane.f32.xlu0 %v1967
  %v2004 = vpop.xlane.xlu0 %2003
  %2005 = vmin.xlane.f32.xlu0 %v1968
  %v2006 = vpop.xlane.xlu0 %2005
  %2007 = vmin.xlane.f32.xlu0 %v1969
  %v2008 = vpop.xlane.xlu0 %2007
  %2009 = vmin.xlane.f32.xlu0 %v1970
  %v2010 = vpop.xlane.xlu0 %2009
  %2011 = vmin.xlane.f32.xlu0 %v1971
  %v2012 = vpop.xlane.xlu0 %2011
  %2013 = vmin.xlane.f32.xlu0 %v1972
  %v2014 = vpop.xlane.xlu0 %2013
  %2015 = vmin.xlane.f32.xlu0 %v1973
  %v2016 = vpop.xlane.xlu0 %2015
  %2017 = vmin.xlane.f32.xlu0 %v1974
  %v2018 = vpop.xlane.xlu0 %2017
  %2019 = vmin.xlane.f32.xlu0 %v1975
  %v2020 = vpop.xlane.xlu0 %2019
  %2021 = vmin.xlane.f32.xlu0 %v1976
  %v2022 = vpop.xlane.xlu0 %2021
  %2023 = vmin.xlane.f32.xlu0 %v1977
  %v2024 = vpop.xlane.xlu0 %2023
  %2025 = vmin.xlane.f32.xlu0 %v1978
  %v2026 = vpop.xlane.xlu0 %2025
  %2027 = vmin.xlane.f32.xlu0 %v1979
  %v2028 = vpop.xlane.xlu0 %2027
  %2029 = vmin.xlane.f32.xlu0 %v1980
  %v2030 = vpop.xlane.xlu0 %2029
  %2031 = vmin.xlane.f32.xlu0 %v1981
  %v2032 = vpop.xlane.xlu0 %2031
  %2033 = vmin.xlane.f32.xlu0 %v1982
  %v2034 = vpop.xlane.xlu0 %2033
  %2035 = vmin.xlane.f32.xlu0 %v1983
  %v2036 = vpop.xlane.xlu0 %2035
  %2037 = vmin.xlane.f32.xlu0 %v1984
  %v2038 = vpop.xlane.xlu0 %2037
  %2039 = vmin.xlane.f32.xlu0 %v1985
  %v2040 = vpop.xlane.xlu0 %2039
  %2041 = vmin.xlane.f32.xlu0 %v1986
  %v2042 = vpop.xlane.xlu0 %2041
  %2043 = vmin.xlane.f32.xlu0 %v1987
  %v2044 = vpop.xlane.xlu0 %2043
  %2045 = vmin.xlane.f32.xlu0 %v1988
  %v2046 = vpop.xlane.xlu0 %2045
  %2047 = vmin.xlane.f32.xlu0 %v1989
  %v2048 = vpop.xlane.xlu0 %2047
  %2049 = vmin.xlane.f32.xlu0 %v1990
  %v2050 = vpop.xlane.xlu0 %2049
  %vm2051 = vcmask 7168
  %2052 = vst.msk [vmem:[%s9] sm:$0xff] %vm2051, %v1992
  %2053 = vst.msk [vmem:[%s9 + $0x8] sm:$0xff] %vm2051, %v1994
  %2054 = vst.msk [vmem:[%s9 + $0x10] sm:$0xff] %vm2051, %v1996
  %2055 = vst.msk [vmem:[%s9 + $0x18] sm:$0xff] %vm2051, %v1998
  %2056 = vst.msk [vmem:[%s9 + $0x20] sm:$0xff] %vm2051, %v2000
  %2057 = vst.msk [vmem:[%s9 + $0x28] sm:$0xff] %vm2051, %v2002
  %2058 = vst.msk [vmem:[%s9 + $0x30] sm:$0xff] %vm2051, %v2004
  %2059 = vst.msk [vmem:[%s9 + $0x38] sm:$0xff] %vm2051, %v2006
  %2060 = vst.msk [vmem:[%s9 + $0x40] sm:$0xff] %vm2051, %v2008
  %2061 = vst.msk [vmem:[%s9 + $0x48] sm:$0xff] %vm2051, %v2010
  %2062 = vst.msk [vmem:[%s9 + $0x50] sm:$0xff] %vm2051, %v2012
  %2063 = vst.msk [vmem:[%s9 + $0x58] sm:$0xff] %vm2051, %v2014
  %2064 = vst.msk [vmem:[%s9 + $0x60] sm:$0xff] %vm2051, %v2016
  %2065 = vst.msk [vmem:[%s9 + $0x68] sm:$0xff] %vm2051, %v2018
  %2066 = vst.msk [vmem:[%s9 + $0x70] sm:$0xff] %vm2051, %v2020
  %2067 = vst.msk [vmem:[%s9 + $0x78] sm:$0xff] %vm2051, %v2022
  %2068 = vst.msk [vmem:[%s9 + $0x80] sm:$0xff] %vm2051, %v2024
  %2069 = vst.msk [vmem:[%s9 + $0x88] sm:$0xff] %vm2051, %v2026
  %2070 = vst.msk [vmem:[%s9 + $0x90] sm:$0xff] %vm2051, %v2028
  %2071 = vst.msk [vmem:[%s9 + $0x98] sm:$0xff] %vm2051, %v2030
  %2072 = vst.msk [vmem:[%s9 + $0xa0] sm:$0xff] %vm2051, %v2032
  %2073 = vst.msk [vmem:[%s9 + $0xa8] sm:$0xff] %vm2051, %v2034
  %2074 = vst.msk [vmem:[%s9 + $0xb0] sm:$0xff] %vm2051, %v2036
  %2075 = vst.msk [vmem:[%s9 + $0xb8] sm:$0xff] %vm2051, %v2038
  %2076 = vst.msk [vmem:[%s9 + $0xc0] sm:$0xff] %vm2051, %v2040
  %2077 = vst.msk [vmem:[%s9 + $0xc8] sm:$0xff] %vm2051, %v2042
  %2078 = vst.msk [vmem:[%s9 + $0xd0] sm:$0xff] %vm2051, %v2044
  %2079 = vst.msk [vmem:[%s9 + $0xd8] sm:$0xff] %vm2051, %v2046
  %2080 = vst.msk [vmem:[%s9 + $0xe0] sm:$0xff] %vm2051, %v2048
  %2081 = vst.msk [vmem:[%s9 + $0xe8] sm:$0xff] %vm2051, %v2050
  %v2082 = vsel %vm1805, %v1413, 0.0
  %v2083 = vsel %vm1806, %v1420, 0.0
  %v2084 = vsel %vm1807, %v1427, 0.0
  %v2085 = vsel %vm1808, %v1434, 0.0
  %v2086 = vsel %vm1809, %v1441, 0.0
  %v2087 = vsel %vm1810, %v1448, 0.0
  %v2088 = vsel %vm1811, %v1455, 0.0
  %v2089 = vsel %vm1812, %v1462, 0.0
  %v2090 = vsel %vm1813, %v1469, 0.0
  %v2091 = vsel %vm1814, %v1476, 0.0
  %v2092 = vsel %vm1815, %v1483, 0.0
  %v2093 = vsel %vm1816, %v1490, 0.0
  %v2094 = vsel %vm1817, %v1497, 0.0
  %v2095 = vsel %vm1818, %v1504, 0.0
  %v2096 = vsel %vm1819, %v1511, 0.0
  %v2097 = vsel %vm1820, %v1518, 0.0
  %v2098 = vsel %vm1821, %v1525, 0.0
  %v2099 = vsel %vm1822, %v1532, 0.0
  %v2100 = vsel %vm1823, %v1539, 0.0
  %v2101 = vsel %vm1824, %v1546, 0.0
  %v2102 = vsel %vm1825, %v1553, 0.0
  %v2103 = vsel %vm1826, %v1560, 0.0
  %v2104 = vsel %vm1827, %v1567, 0.0
  %v2105 = vsel %vm1828, %v1574, 0.0
  %v2106 = vsel %vm1829, %v1581, 0.0
  %v2107 = vsel %vm1830, %v1588, 0.0
  %v2108 = vsel %vm1831, %v1595, 0.0
  %v2109 = vsel %vm1832, %v1602, 0.0
  %v2110 = vsel %vm1833, %v1609, 0.0
  %v2111 = vsel %vm1834, %v1616, 0.0
  %v2112 = vadd.f32 %v2082, %v2083
  %v2113 = vadd.f32 %v2112, %v2084
  %v2114 = vadd.f32 %v2113, %v2085
  %v2115 = vadd.f32 %v2114, %v2086
  %v2116 = vadd.f32 %v2115, %v2087
  %v2117 = vadd.f32 %v2116, %v2088
  %v2118 = vadd.f32 %v2117, %v2089
  %v2119 = vadd.f32 %v2118, %v2090
  %v2120 = vadd.f32 %v2119, %v2091
  %v2121 = vadd.f32 %v2120, %v2092
  %v2122 = vadd.f32 %v2121, %v2093
  %v2123 = vadd.f32 %v2122, %v2094
  %v2124 = vadd.f32 %v2123, %v2095
  %v2125 = vadd.f32 %v2124, %v2096
  %v2126 = vadd.f32 %v2125, %v2097
  %v2127 = vadd.f32 %v2126, %v2098
  %v2128 = vadd.f32 %v2127, %v2099
  %v2129 = vadd.f32 %v2128, %v2100
  %v2130 = vadd.f32 %v2129, %v2101
  %v2131 = vadd.f32 %v2130, %v2102
  %v2132 = vadd.f32 %v2131, %v2103
  %v2133 = vadd.f32 %v2132, %v2104
  %v2134 = vadd.f32 %v2133, %v2105
  %v2135 = vadd.f32 %v2134, %v2106
  %v2136 = vadd.f32 %v2135, %v2107
  %v2137 = vadd.f32 %v2136, %v2108
  %v2138 = vadd.f32 %v2137, %v2109
  %v2139 = vadd.f32 %v2138, %v2110
  %v2140 = vadd.f32 %v2139, %v2111
  %v2141 = vrot.slane %v2140, 4
  %v2142 = vadd.f32 %v2140, %v2141
  %v2143 = vrot.slane %v2142, 2
  %v2144 = vadd.f32 %v2142, %v2143
  %v2145 = vrot.slane %v2144, 1
  %v2146 = vadd.f32 %v2144, %v2145
  %2147 = vst [vmem:[%s12] sm:$0xff] %v2146
  %v2148 = vld [vmem:[%s4] sm:$0xff]
  %v2149 = vld [vmem:[%s4 + $0x8] sm:$0xff]
  %v2150 = vld [vmem:[%s4 + $0x10] sm:$0xff]
  %v2151 = vld [vmem:[%s4 + $0x18] sm:$0xff]
  %v2152 = vld [vmem:[%s4 + $0x20] sm:$0xff]
  %v2153 = vld [vmem:[%s4 + $0x28] sm:$0xff]
  %v2154 = vld [vmem:[%s4 + $0x30] sm:$0xff]
  %v2155 = vld [vmem:[%s4 + $0x38] sm:$0xff]
  %v2156 = vld [vmem:[%s4 + $0x40] sm:$0xff]
  %v2157 = vld [vmem:[%s4 + $0x48] sm:$0xff]
  %v2158 = vld [vmem:[%s4 + $0x50] sm:$0xff]
  %v2159 = vld [vmem:[%s4 + $0x58] sm:$0xff]
  %v2160 = vld [vmem:[%s4 + $0x60] sm:$0xff]
  %v2161 = vld [vmem:[%s4 + $0x68] sm:$0xff]
  %v2162 = vld [vmem:[%s4 + $0x70] sm:$0xff]
  %v2163 = vld [vmem:[%s4 + $0x78] sm:$0xff]
  %v2164 = vld [vmem:[%s4 + $0x80] sm:$0xff]
  %v2165 = vld [vmem:[%s4 + $0x88] sm:$0xff]
  %v2166 = vld [vmem:[%s4 + $0x90] sm:$0xff]
  %v2167 = vld [vmem:[%s4 + $0x98] sm:$0xff]
  %v2168 = vld [vmem:[%s4 + $0xa0] sm:$0xff]
  %v2169 = vld [vmem:[%s4 + $0xa8] sm:$0xff]
  %v2170 = vld [vmem:[%s4 + $0xb0] sm:$0xff]
  %v2171 = vld [vmem:[%s4 + $0xb8] sm:$0xff]
  %v2172 = vld [vmem:[%s4 + $0xc0] sm:$0xff]
  %v2173 = vld [vmem:[%s4 + $0xc8] sm:$0xff]
  %v2174 = vld [vmem:[%s4 + $0xd0] sm:$0xff]
  %v2175 = vld [vmem:[%s4 + $0xd8] sm:$0xff]
  %v2176 = vld [vmem:[%s4 + $0xe0] sm:$0xff]
  %v2177 = vld [vmem:[%s4 + $0xe8] sm:$0xff]
  %2179 = vset.pattern.permute.xlu0 0
  %2180 = vperm.xlu0 %2179, %v2148
  %v2181 = vpop.permute.xlu0 %2180
  %2184 = vset.pattern.permute.xlu0 0
  %2185 = vperm.xlu0 %2184, %v2149
  %v2186 = vpop.permute.xlu0 %2185
  %2189 = vset.pattern.permute.xlu0 0
  %2190 = vperm.xlu0 %2189, %v2150
  %v2191 = vpop.permute.xlu0 %2190
  %2194 = vset.pattern.permute.xlu0 0
  %2195 = vperm.xlu0 %2194, %v2151
  %v2196 = vpop.permute.xlu0 %2195
  %2199 = vset.pattern.permute.xlu0 0
  %2200 = vperm.xlu0 %2199, %v2152
  %v2201 = vpop.permute.xlu0 %2200
  %2204 = vset.pattern.permute.xlu0 0
  %2205 = vperm.xlu0 %2204, %v2153
  %v2206 = vpop.permute.xlu0 %2205
  %2209 = vset.pattern.permute.xlu0 0
  %2210 = vperm.xlu0 %2209, %v2154
  %v2211 = vpop.permute.xlu0 %2210
  %2214 = vset.pattern.permute.xlu0 0
  %2215 = vperm.xlu0 %2214, %v2155
  %v2216 = vpop.permute.xlu0 %2215
  %2219 = vset.pattern.permute.xlu0 0
  %2220 = vperm.xlu0 %2219, %v2156
  %v2221 = vpop.permute.xlu0 %2220
  %2224 = vset.pattern.permute.xlu0 0
  %2225 = vperm.xlu0 %2224, %v2157
  %v2226 = vpop.permute.xlu0 %2225
  %2229 = vset.pattern.permute.xlu0 0
  %2230 = vperm.xlu0 %2229, %v2158
  %v2231 = vpop.permute.xlu0 %2230
  %2234 = vset.pattern.permute.xlu0 0
  %2235 = vperm.xlu0 %2234, %v2159
  %v2236 = vpop.permute.xlu0 %2235
  %2239 = vset.pattern.permute.xlu0 0
  %2240 = vperm.xlu0 %2239, %v2160
  %v2241 = vpop.permute.xlu0 %2240
  %2244 = vset.pattern.permute.xlu0 0
  %2245 = vperm.xlu0 %2244, %v2161
  %v2246 = vpop.permute.xlu0 %2245
  %2249 = vset.pattern.permute.xlu0 0
  %2250 = vperm.xlu0 %2249, %v2162
  %v2251 = vpop.permute.xlu0 %2250
  %2254 = vset.pattern.permute.xlu0 0
  %2255 = vperm.xlu0 %2254, %v2163
  %v2256 = vpop.permute.xlu0 %2255
  %2259 = vset.pattern.permute.xlu0 0
  %2260 = vperm.xlu0 %2259, %v2164
  %v2261 = vpop.permute.xlu0 %2260
  %2264 = vset.pattern.permute.xlu0 0
  %2265 = vperm.xlu0 %2264, %v2165
  %v2266 = vpop.permute.xlu0 %2265
  %2269 = vset.pattern.permute.xlu0 0
  %2270 = vperm.xlu0 %2269, %v2166
  %v2271 = vpop.permute.xlu0 %2270
  %2274 = vset.pattern.permute.xlu0 0
  %2275 = vperm.xlu0 %2274, %v2167
  %v2276 = vpop.permute.xlu0 %2275
  %2279 = vset.pattern.permute.xlu0 0
  %2280 = vperm.xlu0 %2279, %v2168
  %v2281 = vpop.permute.xlu0 %2280
  %2284 = vset.pattern.permute.xlu0 0
  %2285 = vperm.xlu0 %2284, %v2169
  %v2286 = vpop.permute.xlu0 %2285
  %2289 = vset.pattern.permute.xlu0 0
  %2290 = vperm.xlu0 %2289, %v2170
  %v2291 = vpop.permute.xlu0 %2290
  %2294 = vset.pattern.permute.xlu0 0
  %2295 = vperm.xlu0 %2294, %v2171
  %v2296 = vpop.permute.xlu0 %2295
  %2299 = vset.pattern.permute.xlu0 0
  %2300 = vperm.xlu0 %2299, %v2172
  %v2301 = vpop.permute.xlu0 %2300
  %2304 = vset.pattern.permute.xlu0 0
  %2305 = vperm.xlu0 %2304, %v2173
  %v2306 = vpop.permute.xlu0 %2305
  %2309 = vset.pattern.permute.xlu0 0
  %2310 = vperm.xlu0 %2309, %v2174
  %v2311 = vpop.permute.xlu0 %2310
  %2314 = vset.pattern.permute.xlu0 0
  %2315 = vperm.xlu0 %2314, %v2175
  %v2316 = vpop.permute.xlu0 %2315
  %2319 = vset.pattern.permute.xlu0 0
  %2320 = vperm.xlu0 %2319, %v2176
  %v2321 = vpop.permute.xlu0 %2320
  %2324 = vset.pattern.permute.xlu0 0
  %2325 = vperm.xlu0 %2324, %v2177
  %v2326 = vpop.permute.xlu0 %2325
  %vm2328 = vcmp.eq.f32.partialorder %v1959, %v2181
  %vm2329 = vcmp.eq.f32.partialorder %v1959, %v2186
  %vm2330 = vcmp.eq.f32.partialorder %v1959, %v2191
  %vm2331 = vcmp.eq.f32.partialorder %v1959, %v2196
  %vm2332 = vcmp.eq.f32.partialorder %v1959, %v2201
  %vm2333 = vcmp.eq.f32.partialorder %v1959, %v2206
  %vm2334 = vcmp.eq.f32.partialorder %v1959, %v2211
  %vm2335 = vcmp.eq.f32.partialorder %v1959, %v2216
  %vm2336 = vcmp.eq.f32.partialorder %v1959, %v2221
  %vm2337 = vcmp.eq.f32.partialorder %v1959, %v2226
  %vm2338 = vcmp.eq.f32.partialorder %v1959, %v2231
  %vm2339 = vcmp.eq.f32.partialorder %v1959, %v2236
  %vm2340 = vcmp.eq.f32.partialorder %v1959, %v2241
  %vm2341 = vcmp.eq.f32.partialorder %v1959, %v2246
  %vm2342 = vcmp.eq.f32.partialorder %v1959, %v2251
  %vm2343 = vcmp.eq.f32.partialorder %v1959, %v2256
  %vm2344 = vcmp.eq.f32.partialorder %v1959, %v2261
  %vm2345 = vcmp.eq.f32.partialorder %v1959, %v2266
  %vm2346 = vcmp.eq.f32.partialorder %v1959, %v2271
  %vm2347 = vcmp.eq.f32.partialorder %v1959, %v2276
  %vm2348 = vcmp.eq.f32.partialorder %v1959, %v2281
  %vm2349 = vcmp.eq.f32.partialorder %v1959, %v2286
  %vm2350 = vcmp.eq.f32.partialorder %v1959, %v2291
  %vm2351 = vcmp.eq.f32.partialorder %v1959, %v2296
  %vm2352 = vcmp.eq.f32.partialorder %v1959, %v2301
  %vm2353 = vcmp.eq.f32.partialorder %v1959, %v2306
  %vm2354 = vcmp.eq.f32.partialorder %v1959, %v2311
  %vm2355 = vcmp.eq.f32.partialorder %v1959, %v2316
  %vm2356 = vcmp.eq.f32.partialorder %v1959, %v2321
  %vm2357 = vcmp.eq.f32.partialorder %v1959, %v2326
  %v2358 = vsel %vm2328, %v1413, 3e+38
  %v2359 = vsel %vm2329, %v1420, 3e+38
  %v2360 = vsel %vm2330, %v1427, 3e+38
  %v2361 = vsel %vm2331, %v1434, 3e+38
  %v2362 = vsel %vm2332, %v1441, 3e+38
  %v2363 = vsel %vm2333, %v1448, 3e+38
  %v2364 = vsel %vm2334, %v1455, 3e+38
  %v2365 = vsel %vm2335, %v1462, 3e+38
  %v2366 = vsel %vm2336, %v1469, 3e+38
  %v2367 = vsel %vm2337, %v1476, 3e+38
  %v2368 = vsel %vm2338, %v1483, 3e+38
  %v2369 = vsel %vm2339, %v1490, 3e+38
  %v2370 = vsel %vm2340, %v1497, 3e+38
  %v2371 = vsel %vm2341, %v1504, 3e+38
  %v2372 = vsel %vm2342, %v1511, 3e+38
  %v2373 = vsel %vm2343, %v1518, 3e+38
  %v2374 = vsel %vm2344, %v1525, 3e+38
  %v2375 = vsel %vm2345, %v1532, 3e+38
  %v2376 = vsel %vm2346, %v1539, 3e+38
  %v2377 = vsel %vm2347, %v1546, 3e+38
  %v2378 = vsel %vm2348, %v1553, 3e+38
  %v2379 = vsel %vm2349, %v1560, 3e+38
  %v2380 = vsel %vm2350, %v1567, 3e+38
  %v2381 = vsel %vm2351, %v1574, 3e+38
  %v2382 = vsel %vm2352, %v1581, 3e+38
  %v2383 = vsel %vm2353, %v1588, 3e+38
  %v2384 = vsel %vm2354, %v1595, 3e+38
  %v2385 = vsel %vm2355, %v1602, 3e+38
  %v2386 = vsel %vm2356, %v1609, 3e+38
  %v2387 = vsel %vm2357, %v1616, 3e+38
  %2388 = vmin.xlane.f32.xlu0 %v2358
  %v2389 = vpop.xlane.xlu0 %2388
  %2390 = vmin.xlane.f32.xlu0 %v2359
  %v2391 = vpop.xlane.xlu0 %2390
  %2392 = vmin.xlane.f32.xlu0 %v2360
  %v2393 = vpop.xlane.xlu0 %2392
  %2394 = vmin.xlane.f32.xlu0 %v2361
  %v2395 = vpop.xlane.xlu0 %2394
  %2396 = vmin.xlane.f32.xlu0 %v2362
  %v2397 = vpop.xlane.xlu0 %2396
  %2398 = vmin.xlane.f32.xlu0 %v2363
  %v2399 = vpop.xlane.xlu0 %2398
  %2400 = vmin.xlane.f32.xlu0 %v2364
  %v2401 = vpop.xlane.xlu0 %2400
  %2402 = vmin.xlane.f32.xlu0 %v2365
  %v2403 = vpop.xlane.xlu0 %2402
  %2404 = vmin.xlane.f32.xlu0 %v2366
  %v2405 = vpop.xlane.xlu0 %2404
  %2406 = vmin.xlane.f32.xlu0 %v2367
  %v2407 = vpop.xlane.xlu0 %2406
  %2408 = vmin.xlane.f32.xlu0 %v2368
  %v2409 = vpop.xlane.xlu0 %2408
  %2410 = vmin.xlane.f32.xlu0 %v2369
  %v2411 = vpop.xlane.xlu0 %2410
  %2412 = vmin.xlane.f32.xlu0 %v2370
  %v2413 = vpop.xlane.xlu0 %2412
  %2414 = vmin.xlane.f32.xlu0 %v2371
  %v2415 = vpop.xlane.xlu0 %2414
  %2416 = vmin.xlane.f32.xlu0 %v2372
  %v2417 = vpop.xlane.xlu0 %2416
  %2418 = vmin.xlane.f32.xlu0 %v2373
  %v2419 = vpop.xlane.xlu0 %2418
  %2420 = vmin.xlane.f32.xlu0 %v2374
  %v2421 = vpop.xlane.xlu0 %2420
  %2422 = vmin.xlane.f32.xlu0 %v2375
  %v2423 = vpop.xlane.xlu0 %2422
  %2424 = vmin.xlane.f32.xlu0 %v2376
  %v2425 = vpop.xlane.xlu0 %2424
  %2426 = vmin.xlane.f32.xlu0 %v2377
  %v2427 = vpop.xlane.xlu0 %2426
  %2428 = vmin.xlane.f32.xlu0 %v2378
  %v2429 = vpop.xlane.xlu0 %2428
  %2430 = vmin.xlane.f32.xlu0 %v2379
  %v2431 = vpop.xlane.xlu0 %2430
  %2432 = vmin.xlane.f32.xlu0 %v2380
  %v2433 = vpop.xlane.xlu0 %2432
  %2434 = vmin.xlane.f32.xlu0 %v2381
  %v2435 = vpop.xlane.xlu0 %2434
  %2436 = vmin.xlane.f32.xlu0 %v2382
  %v2437 = vpop.xlane.xlu0 %2436
  %2438 = vmin.xlane.f32.xlu0 %v2383
  %v2439 = vpop.xlane.xlu0 %2438
  %2440 = vmin.xlane.f32.xlu0 %v2384
  %v2441 = vpop.xlane.xlu0 %2440
  %2442 = vmin.xlane.f32.xlu0 %v2385
  %v2443 = vpop.xlane.xlu0 %2442
  %2444 = vmin.xlane.f32.xlu0 %v2386
  %v2445 = vpop.xlane.xlu0 %2444
  %2446 = vmin.xlane.f32.xlu0 %v2387
  %v2447 = vpop.xlane.xlu0 %2446
  %vm2448 = vcmp.eq.f32.partialorder %v2358, %v2389
  %vm2449 = vcmp.eq.f32.partialorder %v2359, %v2391
  %vm2450 = vcmp.eq.f32.partialorder %v2360, %v2393
  %vm2451 = vcmp.eq.f32.partialorder %v2361, %v2395
  %vm2452 = vcmp.eq.f32.partialorder %v2362, %v2397
  %vm2453 = vcmp.eq.f32.partialorder %v2363, %v2399
  %vm2454 = vcmp.eq.f32.partialorder %v2364, %v2401
  %vm2455 = vcmp.eq.f32.partialorder %v2365, %v2403
  %vm2456 = vcmp.eq.f32.partialorder %v2366, %v2405
  %vm2457 = vcmp.eq.f32.partialorder %v2367, %v2407
  %vm2458 = vcmp.eq.f32.partialorder %v2368, %v2409
  %vm2459 = vcmp.eq.f32.partialorder %v2369, %v2411
  %vm2460 = vcmp.eq.f32.partialorder %v2370, %v2413
  %vm2461 = vcmp.eq.f32.partialorder %v2371, %v2415
  %vm2462 = vcmp.eq.f32.partialorder %v2372, %v2417
  %vm2463 = vcmp.eq.f32.partialorder %v2373, %v2419
  %vm2464 = vcmp.eq.f32.partialorder %v2374, %v2421
  %vm2465 = vcmp.eq.f32.partialorder %v2375, %v2423
  %vm2466 = vcmp.eq.f32.partialorder %v2376, %v2425
  %vm2467 = vcmp.eq.f32.partialorder %v2377, %v2427
  %vm2468 = vcmp.eq.f32.partialorder %v2378, %v2429
  %vm2469 = vcmp.eq.f32.partialorder %v2379, %v2431
  %vm2470 = vcmp.eq.f32.partialorder %v2380, %v2433
  %vm2471 = vcmp.eq.f32.partialorder %v2381, %v2435
  %vm2472 = vcmp.eq.f32.partialorder %v2382, %v2437
  %vm2473 = vcmp.eq.f32.partialorder %v2383, %v2439
  %vm2474 = vcmp.eq.f32.partialorder %v2384, %v2441
  %vm2475 = vcmp.eq.f32.partialorder %v2385, %v2443
  %vm2476 = vcmp.eq.f32.partialorder %v2386, %v2445
  %vm2477 = vcmp.eq.f32.partialorder %v2387, %v2447
  %v2478 = vsel %vm2448, %v1653, 3e+38
  %v2479 = vsel %vm2449, %v1653, 3e+38
  %v2480 = vsel %vm2450, %v1653, 3e+38
  %v2481 = vsel %vm2451, %v1653, 3e+38
  %v2482 = vsel %vm2452, %v1653, 3e+38
  %v2483 = vsel %vm2453, %v1653, 3e+38
  %v2484 = vsel %vm2454, %v1653, 3e+38
  %v2485 = vsel %vm2455, %v1653, 3e+38
  %v2486 = vsel %vm2456, %v1653, 3e+38
  %v2487 = vsel %vm2457, %v1653, 3e+38
  %v2488 = vsel %vm2458, %v1653, 3e+38
  %v2489 = vsel %vm2459, %v1653, 3e+38
  %v2490 = vsel %vm2460, %v1653, 3e+38
  %v2491 = vsel %vm2461, %v1653, 3e+38
  %v2492 = vsel %vm2462, %v1653, 3e+38
  %v2493 = vsel %vm2463, %v1653, 3e+38
  %v2494 = vsel %vm2464, %v1653, 3e+38
  %v2495 = vsel %vm2465, %v1653, 3e+38
  %v2496 = vsel %vm2466, %v1653, 3e+38
  %v2497 = vsel %vm2467, %v1653, 3e+38
  %v2498 = vsel %vm2468, %v1653, 3e+38
  %v2499 = vsel %vm2469, %v1653, 3e+38
  %v2500 = vsel %vm2470, %v1653, 3e+38
  %v2501 = vsel %vm2471, %v1653, 3e+38
  %v2502 = vsel %vm2472, %v1653, 3e+38
  %v2503 = vsel %vm2473, %v1653, 3e+38
  %v2504 = vsel %vm2474, %v1653, 3e+38
  %v2505 = vsel %vm2475, %v1653, 3e+38
  %v2506 = vsel %vm2476, %v1653, 3e+38
  %v2507 = vsel %vm2477, %v1653, 3e+38
  %2508 = vmin.xlane.f32.xlu0 %v2478
  %v2509 = vpop.xlane.xlu0 %2508
  %2510 = vmin.xlane.f32.xlu0 %v2479
  %v2511 = vpop.xlane.xlu0 %2510
  %2512 = vmin.xlane.f32.xlu0 %v2480
  %v2513 = vpop.xlane.xlu0 %2512
  %2514 = vmin.xlane.f32.xlu0 %v2481
  %v2515 = vpop.xlane.xlu0 %2514
  %2516 = vmin.xlane.f32.xlu0 %v2482
  %v2517 = vpop.xlane.xlu0 %2516
  %2518 = vmin.xlane.f32.xlu0 %v2483
  %v2519 = vpop.xlane.xlu0 %2518
  %2520 = vmin.xlane.f32.xlu0 %v2484
  %v2521 = vpop.xlane.xlu0 %2520
  %2522 = vmin.xlane.f32.xlu0 %v2485
  %v2523 = vpop.xlane.xlu0 %2522
  %2524 = vmin.xlane.f32.xlu0 %v2486
  %v2525 = vpop.xlane.xlu0 %2524
  %2526 = vmin.xlane.f32.xlu0 %v2487
  %v2527 = vpop.xlane.xlu0 %2526
  %2528 = vmin.xlane.f32.xlu0 %v2488
  %v2529 = vpop.xlane.xlu0 %2528
  %2530 = vmin.xlane.f32.xlu0 %v2489
  %v2531 = vpop.xlane.xlu0 %2530
  %2532 = vmin.xlane.f32.xlu0 %v2490
  %v2533 = vpop.xlane.xlu0 %2532
  %2534 = vmin.xlane.f32.xlu0 %v2491
  %v2535 = vpop.xlane.xlu0 %2534
  %2536 = vmin.xlane.f32.xlu0 %v2492
  %v2537 = vpop.xlane.xlu0 %2536
  %2538 = vmin.xlane.f32.xlu0 %v2493
  %v2539 = vpop.xlane.xlu0 %2538
  %2540 = vmin.xlane.f32.xlu0 %v2494
  %v2541 = vpop.xlane.xlu0 %2540
  %2542 = vmin.xlane.f32.xlu0 %v2495
  %v2543 = vpop.xlane.xlu0 %2542
  %2544 = vmin.xlane.f32.xlu0 %v2496
  %v2545 = vpop.xlane.xlu0 %2544
  %2546 = vmin.xlane.f32.xlu0 %v2497
  %v2547 = vpop.xlane.xlu0 %2546
  %2548 = vmin.xlane.f32.xlu0 %v2498
  %v2549 = vpop.xlane.xlu0 %2548
  %2550 = vmin.xlane.f32.xlu0 %v2499
  %v2551 = vpop.xlane.xlu0 %2550
  %2552 = vmin.xlane.f32.xlu0 %v2500
  %v2553 = vpop.xlane.xlu0 %2552
  %2554 = vmin.xlane.f32.xlu0 %v2501
  %v2555 = vpop.xlane.xlu0 %2554
  %2556 = vmin.xlane.f32.xlu0 %v2502
  %v2557 = vpop.xlane.xlu0 %2556
  %2558 = vmin.xlane.f32.xlu0 %v2503
  %v2559 = vpop.xlane.xlu0 %2558
  %2560 = vmin.xlane.f32.xlu0 %v2504
  %v2561 = vpop.xlane.xlu0 %2560
  %2562 = vmin.xlane.f32.xlu0 %v2505
  %v2563 = vpop.xlane.xlu0 %2562
  %2564 = vmin.xlane.f32.xlu0 %v2506
  %v2565 = vpop.xlane.xlu0 %2564
  %2566 = vmin.xlane.f32.xlu0 %v2507
  %v2567 = vpop.xlane.xlu0 %2566
  %2568 = vst.msk [vmem:[%s10] sm:$0xff] %vm2051, %v2509
  %2569 = vst.msk [vmem:[%s10 + $0x8] sm:$0xff] %vm2051, %v2511
  %2570 = vst.msk [vmem:[%s10 + $0x10] sm:$0xff] %vm2051, %v2513
  %2571 = vst.msk [vmem:[%s10 + $0x18] sm:$0xff] %vm2051, %v2515
  %2572 = vst.msk [vmem:[%s10 + $0x20] sm:$0xff] %vm2051, %v2517
  %2573 = vst.msk [vmem:[%s10 + $0x28] sm:$0xff] %vm2051, %v2519
  %2574 = vst.msk [vmem:[%s10 + $0x30] sm:$0xff] %vm2051, %v2521
  %2575 = vst.msk [vmem:[%s10 + $0x38] sm:$0xff] %vm2051, %v2523
  %2576 = vst.msk [vmem:[%s10 + $0x40] sm:$0xff] %vm2051, %v2525
  %2577 = vst.msk [vmem:[%s10 + $0x48] sm:$0xff] %vm2051, %v2527
  %2578 = vst.msk [vmem:[%s10 + $0x50] sm:$0xff] %vm2051, %v2529
  %2579 = vst.msk [vmem:[%s10 + $0x58] sm:$0xff] %vm2051, %v2531
  %2580 = vst.msk [vmem:[%s10 + $0x60] sm:$0xff] %vm2051, %v2533
  %2581 = vst.msk [vmem:[%s10 + $0x68] sm:$0xff] %vm2051, %v2535
  %2582 = vst.msk [vmem:[%s10 + $0x70] sm:$0xff] %vm2051, %v2537
  %2583 = vst.msk [vmem:[%s10 + $0x78] sm:$0xff] %vm2051, %v2539
  %2584 = vst.msk [vmem:[%s10 + $0x80] sm:$0xff] %vm2051, %v2541
  %2585 = vst.msk [vmem:[%s10 + $0x88] sm:$0xff] %vm2051, %v2543
  %2586 = vst.msk [vmem:[%s10 + $0x90] sm:$0xff] %vm2051, %v2545
  %2587 = vst.msk [vmem:[%s10 + $0x98] sm:$0xff] %vm2051, %v2547
  %2588 = vst.msk [vmem:[%s10 + $0xa0] sm:$0xff] %vm2051, %v2549
  %2589 = vst.msk [vmem:[%s10 + $0xa8] sm:$0xff] %vm2051, %v2551
  %2590 = vst.msk [vmem:[%s10 + $0xb0] sm:$0xff] %vm2051, %v2553
  %2591 = vst.msk [vmem:[%s10 + $0xb8] sm:$0xff] %vm2051, %v2555
  %2592 = vst.msk [vmem:[%s10 + $0xc0] sm:$0xff] %vm2051, %v2557
  %2593 = vst.msk [vmem:[%s10 + $0xc8] sm:$0xff] %vm2051, %v2559
  %2594 = vst.msk [vmem:[%s10 + $0xd0] sm:$0xff] %vm2051, %v2561
  %2595 = vst.msk [vmem:[%s10 + $0xd8] sm:$0xff] %vm2051, %v2563
  %2596 = vst.msk [vmem:[%s10 + $0xe0] sm:$0xff] %vm2051, %v2565
  %2597 = vst.msk [vmem:[%s10 + $0xe8] sm:$0xff] %vm2051, %v2567
  %v2598 = vsel %vm2328, %v1413, 0.0
  %v2599 = vsel %vm2329, %v1420, 0.0
  %v2600 = vsel %vm2330, %v1427, 0.0
  %v2601 = vsel %vm2331, %v1434, 0.0
  %v2602 = vsel %vm2332, %v1441, 0.0
  %v2603 = vsel %vm2333, %v1448, 0.0
  %v2604 = vsel %vm2334, %v1455, 0.0
  %v2605 = vsel %vm2335, %v1462, 0.0
  %v2606 = vsel %vm2336, %v1469, 0.0
  %v2607 = vsel %vm2337, %v1476, 0.0
  %v2608 = vsel %vm2338, %v1483, 0.0
  %v2609 = vsel %vm2339, %v1490, 0.0
  %v2610 = vsel %vm2340, %v1497, 0.0
  %v2611 = vsel %vm2341, %v1504, 0.0
  %v2612 = vsel %vm2342, %v1511, 0.0
  %v2613 = vsel %vm2343, %v1518, 0.0
  %v2614 = vsel %vm2344, %v1525, 0.0
  %v2615 = vsel %vm2345, %v1532, 0.0
  %v2616 = vsel %vm2346, %v1539, 0.0
  %v2617 = vsel %vm2347, %v1546, 0.0
  %v2618 = vsel %vm2348, %v1553, 0.0
  %v2619 = vsel %vm2349, %v1560, 0.0
  %v2620 = vsel %vm2350, %v1567, 0.0
  %v2621 = vsel %vm2351, %v1574, 0.0
  %v2622 = vsel %vm2352, %v1581, 0.0
  %v2623 = vsel %vm2353, %v1588, 0.0
  %v2624 = vsel %vm2354, %v1595, 0.0
  %v2625 = vsel %vm2355, %v1602, 0.0
  %v2626 = vsel %vm2356, %v1609, 0.0
  %v2627 = vsel %vm2357, %v1616, 0.0
  %2628 = vadd.xlane.f32.xlu0 %v2598
  %v2629 = vpop.xlane.xlu0 %2628
  %2630 = vadd.xlane.f32.xlu0 %v2599
  %v2631 = vpop.xlane.xlu0 %2630
  %2632 = vadd.xlane.f32.xlu0 %v2600
  %v2633 = vpop.xlane.xlu0 %2632
  %2634 = vadd.xlane.f32.xlu0 %v2601
  %v2635 = vpop.xlane.xlu0 %2634
  %2636 = vadd.xlane.f32.xlu0 %v2602
  %v2637 = vpop.xlane.xlu0 %2636
  %2638 = vadd.xlane.f32.xlu0 %v2603
  %v2639 = vpop.xlane.xlu0 %2638
  %2640 = vadd.xlane.f32.xlu0 %v2604
  %v2641 = vpop.xlane.xlu0 %2640
  %2642 = vadd.xlane.f32.xlu0 %v2605
  %v2643 = vpop.xlane.xlu0 %2642
  %2644 = vadd.xlane.f32.xlu0 %v2606
  %v2645 = vpop.xlane.xlu0 %2644
  %2646 = vadd.xlane.f32.xlu0 %v2607
  %v2647 = vpop.xlane.xlu0 %2646
  %2648 = vadd.xlane.f32.xlu0 %v2608
  %v2649 = vpop.xlane.xlu0 %2648
  %2650 = vadd.xlane.f32.xlu0 %v2609
  %v2651 = vpop.xlane.xlu0 %2650
  %2652 = vadd.xlane.f32.xlu0 %v2610
  %v2653 = vpop.xlane.xlu0 %2652
  %2654 = vadd.xlane.f32.xlu0 %v2611
  %v2655 = vpop.xlane.xlu0 %2654
  %2656 = vadd.xlane.f32.xlu0 %v2612
  %v2657 = vpop.xlane.xlu0 %2656
  %2658 = vadd.xlane.f32.xlu0 %v2613
  %v2659 = vpop.xlane.xlu0 %2658
  %2660 = vadd.xlane.f32.xlu0 %v2614
  %v2661 = vpop.xlane.xlu0 %2660
  %2662 = vadd.xlane.f32.xlu0 %v2615
  %v2663 = vpop.xlane.xlu0 %2662
  %2664 = vadd.xlane.f32.xlu0 %v2616
  %v2665 = vpop.xlane.xlu0 %2664
  %2666 = vadd.xlane.f32.xlu0 %v2617
  %v2667 = vpop.xlane.xlu0 %2666
  %2668 = vadd.xlane.f32.xlu0 %v2618
  %v2669 = vpop.xlane.xlu0 %2668
  %2670 = vadd.xlane.f32.xlu0 %v2619
  %v2671 = vpop.xlane.xlu0 %2670
  %2672 = vadd.xlane.f32.xlu0 %v2620
  %v2673 = vpop.xlane.xlu0 %2672
  %2674 = vadd.xlane.f32.xlu0 %v2621
  %v2675 = vpop.xlane.xlu0 %2674
  %2676 = vadd.xlane.f32.xlu0 %v2622
  %v2677 = vpop.xlane.xlu0 %2676
  %2678 = vadd.xlane.f32.xlu0 %v2623
  %v2679 = vpop.xlane.xlu0 %2678
  %2680 = vadd.xlane.f32.xlu0 %v2624
  %v2681 = vpop.xlane.xlu0 %2680
  %2682 = vadd.xlane.f32.xlu0 %v2625
  %v2683 = vpop.xlane.xlu0 %2682
  %2684 = vadd.xlane.f32.xlu0 %v2626
  %v2685 = vpop.xlane.xlu0 %2684
  %2686 = vadd.xlane.f32.xlu0 %v2627
  %v2687 = vpop.xlane.xlu0 %2686
  %v2688 = vmul.f32 %v2629, 0.25
  %v2689 = vmul.f32 %v2631, 0.25
  %v2690 = vmul.f32 %v2633, 0.25
  %v2691 = vmul.f32 %v2635, 0.25
  %v2692 = vmul.f32 %v2637, 0.25
  %v2693 = vmul.f32 %v2639, 0.25
  %v2694 = vmul.f32 %v2641, 0.25
  %v2695 = vmul.f32 %v2643, 0.25
  %v2696 = vmul.f32 %v2645, 0.25
  %v2697 = vmul.f32 %v2647, 0.25
  %v2698 = vmul.f32 %v2649, 0.25
  %v2699 = vmul.f32 %v2651, 0.25
  %v2700 = vmul.f32 %v2653, 0.25
  %v2701 = vmul.f32 %v2655, 0.25
  %v2702 = vmul.f32 %v2657, 0.25
  %v2703 = vmul.f32 %v2659, 0.25
  %v2704 = vmul.f32 %v2661, 0.25
  %v2705 = vmul.f32 %v2663, 0.25
  %v2706 = vmul.f32 %v2665, 0.25
  %v2707 = vmul.f32 %v2667, 0.25
  %v2708 = vmul.f32 %v2669, 0.25
  %v2709 = vmul.f32 %v2671, 0.25
  %v2710 = vmul.f32 %v2673, 0.25
  %v2711 = vmul.f32 %v2675, 0.25
  %v2712 = vmul.f32 %v2677, 0.25
  %v2713 = vmul.f32 %v2679, 0.25
  %v2714 = vmul.f32 %v2681, 0.25
  %v2715 = vmul.f32 %v2683, 0.25
  %v2716 = vmul.f32 %v2685, 0.25
  %v2717 = vmul.f32 %v2687, 0.25
  %2718 = vst.msk [vmem:[%s11] sm:$0xff] %vm2051, %v2688
  %2719 = vst.msk [vmem:[%s11 + $0x8] sm:$0xff] %vm2051, %v2689
  %2720 = vst.msk [vmem:[%s11 + $0x10] sm:$0xff] %vm2051, %v2690
  %2721 = vst.msk [vmem:[%s11 + $0x18] sm:$0xff] %vm2051, %v2691
  %2722 = vst.msk [vmem:[%s11 + $0x20] sm:$0xff] %vm2051, %v2692
  %2723 = vst.msk [vmem:[%s11 + $0x28] sm:$0xff] %vm2051, %v2693
  %2724 = vst.msk [vmem:[%s11 + $0x30] sm:$0xff] %vm2051, %v2694
  %2725 = vst.msk [vmem:[%s11 + $0x38] sm:$0xff] %vm2051, %v2695
  %2726 = vst.msk [vmem:[%s11 + $0x40] sm:$0xff] %vm2051, %v2696
  %2727 = vst.msk [vmem:[%s11 + $0x48] sm:$0xff] %vm2051, %v2697
  %2728 = vst.msk [vmem:[%s11 + $0x50] sm:$0xff] %vm2051, %v2698
  %2729 = vst.msk [vmem:[%s11 + $0x58] sm:$0xff] %vm2051, %v2699
  %2730 = vst.msk [vmem:[%s11 + $0x60] sm:$0xff] %vm2051, %v2700
  %2731 = vst.msk [vmem:[%s11 + $0x68] sm:$0xff] %vm2051, %v2701
  %2732 = vst.msk [vmem:[%s11 + $0x70] sm:$0xff] %vm2051, %v2702
  %2733 = vst.msk [vmem:[%s11 + $0x78] sm:$0xff] %vm2051, %v2703
  %2734 = vst.msk [vmem:[%s11 + $0x80] sm:$0xff] %vm2051, %v2704
  %2735 = vst.msk [vmem:[%s11 + $0x88] sm:$0xff] %vm2051, %v2705
  %2736 = vst.msk [vmem:[%s11 + $0x90] sm:$0xff] %vm2051, %v2706
  %2737 = vst.msk [vmem:[%s11 + $0x98] sm:$0xff] %vm2051, %v2707
  %2738 = vst.msk [vmem:[%s11 + $0xa0] sm:$0xff] %vm2051, %v2708
  %2739 = vst.msk [vmem:[%s11 + $0xa8] sm:$0xff] %vm2051, %v2709
  %2740 = vst.msk [vmem:[%s11 + $0xb0] sm:$0xff] %vm2051, %v2710
  %2741 = vst.msk [vmem:[%s11 + $0xb8] sm:$0xff] %vm2051, %v2711
  %2742 = vst.msk [vmem:[%s11 + $0xc0] sm:$0xff] %vm2051, %v2712
  %2743 = vst.msk [vmem:[%s11 + $0xc8] sm:$0xff] %vm2051, %v2713
  %2744 = vst.msk [vmem:[%s11 + $0xd0] sm:$0xff] %vm2051, %v2714
  %2745 = vst.msk [vmem:[%s11 + $0xd8] sm:$0xff] %vm2051, %v2715
  %2746 = vst.msk [vmem:[%s11 + $0xe0] sm:$0xff] %vm2051, %v2716
  %2747 = vst.msk [vmem:[%s11 + $0xe8] sm:$0xff] %vm2051, %v2717
  // Predicated region
  $region38: #{forward_loss.3} parent=0 // pred_check
    _
  $region39: #{forward_loss.3} parent=0 // pred_check_branch
    %2749 = sbr.rel (0) target = $region41
  $region40: #{forward_loss.3} parent=0 // pred_region
    _
  $region41: #{forward_loss.3} parent=0 // pred_fallthru
    _
  // Predicated region
  $region42: #{forward_loss.3} parent=0 // pred_check
    _
  $region43: #{forward_loss.3} parent=0 // pred_check_branch
    %2751 = sbr.rel (0) target = $region45
  $region44: #{forward_loss.3} parent=0 // pred_region
    _
  $region45: #{forward_loss.3} parent=0 // pred_fallthru
    _
  // Predicated region
  $region46: #{forward_loss.3} parent=0 // pred_check
    _
  $region47: #{forward_loss.3} parent=0 // pred_check_branch
    %2753 = sbr.rel (0) target = $region49
  $region48: #{forward_loss.3} parent=0 // pred_region
    _
  $region49: #{forward_loss.3} parent=0 // pred_fallthru
    _
  // Predicated region
  $region50: #{forward_loss.3} parent=0 // pred_check
    _
  $region51: #{forward_loss.3} parent=0 // pred_check_branch
    %2755 = sbr.rel (0) target = $region53
  $region52: #{forward_loss.3} parent=0 // pred_region
    _
  $region53: #{forward_loss.3} parent=0 // pred_fallthru
    _
  // Predicated region
  $region54: #{forward_loss.3} parent=0 // pred_check
    _
  $region55: #{forward_loss.3} parent=0 // pred_check_branch
    %2757 = sbr.rel (0) target = $region57
  $region56: #{forward_loss.3} parent=0 // pred_region
    _
  $region57: #{forward_loss.3} parent=0 // pred_fallthru
    _
  // Predicated region
  $region58: #{forward_loss.3} parent=0 // pred_check
    _
  $region59: #{forward_loss.3} parent=0 // pred_check_branch
    %2759 = sbr.rel (0) target = $region61
  $region60: #{forward_loss.3} parent=0 // pred_region
    _
  $region61: #{forward_loss.3} parent=0 // pred_fallthru
    _
  // Predicated region
  $region62: #{forward_loss.3} parent=0 // pred_check
    _
  $region63: #{forward_loss.3} parent=0 // pred_check_branch
    %2761 = sbr.rel (0) target = $region65
  $region64: #{forward_loss.3} parent=0 // pred_region
    _
  $region65: #{forward_loss.3} parent=0 // pred_fallthru
    _
  // Predicated region
  $region66: #{forward_loss.3} parent=0 // pred_check
    _
  $region67: #{forward_loss.3} parent=0 // pred_check_branch
    %2763 = sbr.rel (0) target = $region69
  $region68: #{forward_loss.3} parent=0 // pred_region
    _
  $region69: #{forward_loss.3} parent=0 // pred_fallthru
    _

</llo_original>
